<compile_context>
chip_gen: v5e
topology: v5e:2x2
jax: 0.10.0
libtpu: 0.0.40
codegen_flags: <defaults>
</compile_context>

<pallas_src>
import jax
import jax.numpy as jnp
from jax.experimental import pallas as pl
from jax.experimental.pallas import tpu as pltpu

# ---- small, self-consistent config (scaled-down from the module's defaults) ----
VOCAB    = 65          # vocab_size (char-level)
EMBED    = 64          # embed_size
BLOCK    = 16          # block_size (max sequence length)
N_HEAD   = 4           # n_head
N_LAYERS = 2           # n_layers
HEAD     = EMBED // N_HEAD
EPS      = 1e-5        # nn.LayerNorm default eps
VPAD     = 128         # lane-padded vocab width for dense output stores
NEG_INF  = -1e30       # finite mask value (diag never masked -> same softmax)


def _layernorm(x, g, b):
    mu = jnp.mean(x, axis=-1, keepdims=True)
    var = jnp.mean((x - mu) ** 2, axis=-1, keepdims=True)
    return (x - mu) * jax.lax.rsqrt(var + EPS) * g + b


# --------------------------- fused Pallas kernel ---------------------------

def gpt_kernel(x_ref,
               ln1w_ref, ln1b_ref, wkqv_ref, projw_ref, projb_ref,
               ln2w_ref, ln2b_ref, fc1w_ref, fc1b_ref, fc2w_ref, fc2b_ref,
               lnw_ref, lnb_ref, lmw_ref, lmb_ref,
               o_ref):
    """Full NanoGPT forward for one batch block (all layers + final LN + lm_head)."""
    Bb, T, E = x_ref.shape
    H, D = N_HEAD, HEAD
    G = Bb * H                       # attention batch = batch * heads
    N = Bb * T                       # row count for all dense matmuls

    # Residual stream stays f32; matmul operands are cast to bf16 (MXU-native),
    # accumulation in f32 via preferred_element_type.
    x = x_ref[...].reshape(N, E)

    # causal mask — built once, shared by all layers/heads
    row = jax.lax.broadcasted_iota(jnp.int32, (T, T), 0)
    col = jax.lax.broadcasted_iota(jnp.int32, (T, T), 1)
    causal = (col <= row)[None]                      # (1, T, T)

    scale = E ** -0.5    # reference quirk: scaled by embed_size**-0.5, not head_size

    def softmax_last(a):
        a = a - jnp.max(a, axis=-1, keepdims=True)
        p = jnp.exp(a)
        return p * pl.reciprocal(jnp.sum(p, axis=-1, keepdims=True), approx=True)

    def split_heads(kqv3, base):
        # (Bb, T, 3E) -> (Bb*H, T, D): static lane slices + stack (no rank-4 transpose)
        parts = [kqv3[:, :, base + h * D: base + (h + 1) * D] for h in range(H)]
        return jnp.stack(parts, axis=1).reshape(G, T, D)

    def merge_heads(sa_h):
        # (Bb*H, T, D) -> (Bb*T, H*D) == torch.cat over heads on the last dim
        sa4 = sa_h.reshape(Bb, H, T, D)
        return jnp.concatenate([sa4[:, h] for h in range(H)], axis=-1).reshape(N, E)

    for l in range(N_LAYERS):        # static unroll; activations stay in VMEM/vregs
        # --- LayerNorm 1 + multi-head self-attention ---
        h = _layernorm(x, ln1w_ref[l], ln1b_ref[l])                    # (N, E) f32
        # fused Q/K/V: one lane-dense (N, E) @ (E, 3E) bf16 matmul
        kqv = jnp.dot(h.astype(jnp.bfloat16), wkqv_ref[l],
                      preferred_element_type=jnp.float32)              # (N, 3E)
        kqv3 = kqv.astype(jnp.bfloat16).reshape(Bb, T, 3 * E)
        k = split_heads(kqv3, 0)                                       # (G, T, D)
        q = split_heads(kqv3, E)
        v = split_heads(kqv3, 2 * E)
        # reference quirk: scores = k @ q^T (NOT q @ k^T) — do not "fix"
        att = jnp.einsum('gtd,gsd->gts', k, q,
                         preferred_element_type=jnp.float32) * scale   # (G, T, T)
        att = jnp.where(causal, att, NEG_INF)
        att = softmax_last(att)
        sa_h = jnp.einsum('gts,gsd->gtd', att.astype(jnp.bfloat16), v,
                          preferred_element_type=jnp.float32)          # (G, T, D)
        sa_cat = merge_heads(sa_h)                                     # (N, E) f32
        sa = jnp.dot(sa_cat.astype(jnp.bfloat16), projw_ref[l],
                     preferred_element_type=jnp.float32) + projb_ref[l]
        x = x + sa

        # --- LayerNorm 2 + feed-forward ---
        h2 = _layernorm(x, ln2w_ref[l], ln2b_ref[l])
        f = jnp.dot(h2.astype(jnp.bfloat16), fc1w_ref[l],
                    preferred_element_type=jnp.float32) + fc1b_ref[l]
        f = jnp.maximum(f, 0.0)
        x = x + jnp.dot(f.astype(jnp.bfloat16), fc2w_ref[l],
                        preferred_element_type=jnp.float32) + fc2b_ref[l]

    # --- final LayerNorm + lm_head (lane-padded to VPAD=128 for dense vst) ---
    hf = _layernorm(x, lnw_ref[...], lnb_ref[...])
    logits = jnp.dot(hf.astype(jnp.bfloat16), lmw_ref[...],
                     preferred_element_type=jnp.float32) + lmb_ref[...]
    o_ref[...] = logits.reshape(Bb, T, VPAD)


# ------------------------- pallas_call wrapper -------------------------

def _w_spec(shape):
    nd = len(shape)
    return pl.BlockSpec(shape, lambda i, _nd=nd: (0,) * _nd)


def nanogpt_pallas(x, kp, *, batch_blocks=1):
    """batch_blocks=1 folds the whole batch into one grid step (best on single-TC
    v5e/v6e and at tiny shapes); set batch_blocks=2 on v7x so each TensorCore
    gets half the batch (dimension_semantics='parallel')."""
    B, T, E = x.shape
    assert B % batch_blocks == 0
    bb = B // batch_blocks
    ins = (x, kp['ln1w'], kp['ln1b'], kp['wkqv'], kp['projw'], kp['projb'],
           kp['ln2w'], kp['ln2b'], kp['fc1w'], kp['fc1b'], kp['fc2w'], kp['fc2b'],
           kp['ln_w'], kp['ln_b'], kp['lm_w_pad'], kp['lm_b_pad'])
    in_specs = ([pl.BlockSpec((bb, T, E), lambda i: (i, 0, 0))] +
                [_w_spec(a.shape) for a in ins[1:]])
    # TODO(synk): before scaling EMBED/BLOCK/N_LAYERS up, add a layer grid axis so
    # only one layer's weights are resident/double-buffered at a time and set
    # vmem_limit_bytes explicitly (v7x has 64 MiB VMEM vs 128 MiB on v5e/v6e).
    out = pl.pallas_call(
        gpt_kernel,
        out_shape=jax.ShapeDtypeStruct((B, T, VPAD), jnp.float32),
        grid=(batch_blocks,),
        in_specs=in_specs,
        out_specs=pl.BlockSpec((bb, T, VPAD), lambda i: (i, 0, 0)),
        compiler_params=pltpu.CompilerParams(
            dimension_semantics=("parallel",)),       # v7x: shard batch over 2 TCs
    )(*ins)
    return out[:, :, :VOCAB]                          # drop lane padding


# ---------------------------- parameters ----------------------------

def init_params(key):
    def dense(k, shape):
        return 0.02 * jax.random.normal(k, shape, jnp.float32)

    L, E = N_LAYERS, EMBED
    key, k_tok, k_pos, k_lm, k1, k2, k3, k4, k5, k6 = jax.random.split(key, 10)
    return {
        'tok_emb': dense(k_tok, (VOCAB, E)),
        'pos_emb': dense(k_pos, (BLOCK, E)),
        'ln1w': jnp.ones((L, 1, E), jnp.float32),  'ln1b': jnp.zeros((L, 1, E), jnp.float32),
        'wk': dense(k1, (L, E, E)), 'wq': dense(k2, (L, E, E)), 'wv': dense(k3, (L, E, E)),
        'projw': dense(k4, (L, E, E)), 'projb': jnp.zeros((L, 1, E), jnp.float32),
        'ln2w': jnp.ones((L, 1, E), jnp.float32),  'ln2b': jnp.zeros((L, 1, E), jnp.float32),
        'fc1w': dense(k5, (L, E, 4 * E)), 'fc1b': jnp.zeros((L, 1, 4 * E), jnp.float32),
        'fc2w': dense(k6, (L, 4 * E, E)), 'fc2b': jnp.zeros((L, 1, E), jnp.float32),
        'ln_w': jnp.ones((1, E), jnp.float32), 'ln_b': jnp.zeros((1, E), jnp.float32),
        'lm_w': dense(k_lm, (E, VOCAB)), 'lm_b': jnp.zeros((1, VOCAB), jnp.float32),
    }


def pack_for_kernel(p):
    """One-time weight repack — call OUTSIDE the jitted forward:
       * Q/K/V fused into a single (L, E, 3E) bf16 matrix, column blocks [K|Q|V]
       * matmul weights cast to bf16 (MXU-native); LN params & biases stay f32
       * lm_head lane-padded to VPAD=128 for dense output stores."""
    E = EMBED
    wkqv = jnp.concatenate([p['wk'], p['wq'], p['wv']], axis=-1).astype(jnp.bfloat16)
    lm_w_pad = (jnp.zeros((E, VPAD), jnp.float32).at[:, :VOCAB].set(p['lm_w'])
                .astype(jnp.bfloat16))
    lm_b_pad = jnp.zeros((1, VPAD), jnp.float32).at[:, :VOCAB].set(p['lm_b'])
    return dict(
        tok_emb=p['tok_emb'], pos_emb=p['pos_emb'],
        ln1w=p['ln1w'], ln1b=p['ln1b'],
        wkqv=wkqv,
        projw=p['projw'].astype(jnp.bfloat16), projb=p['projb'],
        ln2w=p['ln2w'], ln2b=p['ln2b'],
        fc1w=p['fc1w'].astype(jnp.bfloat16), fc1b=p['fc1b'],
        fc2w=p['fc2w'].astype(jnp.bfloat16), fc2b=p['fc2b'],
        ln_w=p['ln_w'], ln_b=p['ln_b'],
        lm_w_pad=lm_w_pad, lm_b_pad=lm_b_pad)


# ---------------------------- forward pass ----------------------------

@jax.jit
def nanogpt_forward(idx, packed):
    # TODO(synk): cross-entropy loss path (targets != None) not implemented; logits only.
    _, T = idx.shape
    x = packed['tok_emb'][idx] + packed['pos_emb'][:T]    # embedding gather (JAX glue)
    return nanogpt_pallas(x, packed)                      # single fused Pallas call


# Pure-JAX f32 reference of the same math (numerical sanity check).
def nanogpt_reference(idx, params):
    _, T = idx.shape
    x = params['tok_emb'][idx] + params['pos_emb'][:T]
    causal = jnp.arange(T)[None, :] <= jnp.arange(T)[:, None]
    for l in range(N_LAYERS):
        h = _layernorm(x, params['ln1w'][l], params['ln1b'][l])
        k = h @ params['wk'][l]; q = h @ params['wq'][l]; v = h @ params['wv'][l]
        outs = []
        for hd in range(N_HEAD):
            sl = slice(hd * HEAD, (hd + 1) * HEAD)
            att = jnp.einsum('btd,bsd->bts', k[:, :, sl], q[:, :, sl]) * (EMBED ** -0.5)
            att = jnp.where(causal[None], att, -jnp.inf)
            att = jax.nn.softmax(att, axis=-1)
            outs.append(jnp.einsum('bts,bsd->btd', att, v[:, :, sl]))
        sa = jnp.concatenate(outs, axis=-1) @ params['projw'][l] + params['projb'][l]
        x = x + sa
        h2 = _layernorm(x, params['ln2w'][l], params['ln2b'][l])
        f = jnp.maximum(h2 @ params['fc1w'][l] + params['fc1b'][l], 0.0)
        x = x + f @ params['fc2w'][l] + params['fc2b'][l]
    h = _layernorm(x, params['ln_w'], params['ln_b'])
    return h @ params['lm_w'] + params['lm_b']


if __name__ == "__main__":
    key = jax.random.PRNGKey(0)
    key, k_idx, k_par = jax.random.split(key, 3)

    B, T = 2, BLOCK
    idx = jax.random.randint(k_idx, (B, T), 0, VOCAB, dtype=jnp.int32)
    params = init_params(k_par)
    packed = pack_for_kernel(params)          # one-time weight packing (outside jit)

    logits = nanogpt_forward(idx, packed)
    jax.block_until_ready(logits)

    assert logits.shape == (B, T, VOCAB), logits.shape
    ref = nanogpt_reference(idx, params)
    # Tolerance loosened slightly vs. a pure-f32 kernel: matmul operands are bf16
    # (f32 accumulation) and the softmax denominator uses the approx reciprocal.
    err = float(jnp.max(jnp.abs(logits - ref)))
    assert jnp.allclose(logits, ref, atol=2e-2, rtol=2e-2), err

    print("KERNEL_OK")
</pallas_src>

<mosaic_0001>
module attributes {stable_mosaic.version = 11 : i64} {
  func.func @gpt_kernel(%arg0: i32, %arg1: memref<2x16x64xf32, #tpu.memory_space<vmem>>, %arg2: memref<2x1x64xf32, #tpu.memory_space<vmem>>, %arg3: memref<2x1x64xf32, #tpu.memory_space<vmem>>, %arg4: memref<2x64x192xbf16, #tpu.memory_space<vmem>>, %arg5: memref<2x64x64xbf16, #tpu.memory_space<vmem>>, %arg6: memref<2x1x64xf32, #tpu.memory_space<vmem>>, %arg7: memref<2x1x64xf32, #tpu.memory_space<vmem>>, %arg8: memref<2x1x64xf32, #tpu.memory_space<vmem>>, %arg9: memref<2x64x256xbf16, #tpu.memory_space<vmem>>, %arg10: memref<2x1x256xf32, #tpu.memory_space<vmem>>, %arg11: memref<2x256x64xbf16, #tpu.memory_space<vmem>>, %arg12: memref<2x1x64xf32, #tpu.memory_space<vmem>>, %arg13: memref<1x64xf32, #tpu.memory_space<vmem>>, %arg14: memref<1x64xf32, #tpu.memory_space<vmem>>, %arg15: memref<64x128xbf16, #tpu.memory_space<vmem>>, %arg16: memref<1x128xf32, #tpu.memory_space<vmem>>, %arg17: memref<2x16x128xf32, #tpu.memory_space<vmem>>) attributes {dimension_semantics = [#tpu.dimension_semantics<parallel>], iteration_bounds = array<i64: 1>, scalar_prefetch = 0 : i64, scratch_operands = 0 : i64, tpu.core_type = #tpu.core_type<tc>, window_params = [{transform_indices = @transform_0, window_bounds = array<i64: 2, 16, 64>}, {pipeline_mode = #tpu.pipeline_mode<synchronous>, transform_indices = @transform_1, window_bounds = array<i64: 2, 1, 64>}, {pipeline_mode = #tpu.pipeline_mode<synchronous>, transform_indices = @transform_2, window_bounds = array<i64: 2, 1, 64>}, {pipeline_mode = #tpu.pipeline_mode<synchronous>, transform_indices = @transform_3, window_bounds = array<i64: 2, 64, 192>}, {pipeline_mode = #tpu.pipeline_mode<synchronous>, transform_indices = @transform_4, window_bounds = array<i64: 2, 64, 64>}, {pipeline_mode = #tpu.pipeline_mode<synchronous>, transform_indices = @transform_5, window_bounds = array<i64: 2, 1, 64>}, {pipeline_mode = #tpu.pipeline_mode<synchronous>, transform_indices = @transform_6, window_bounds = array<i64: 2, 1, 64>}, {pipeline_mode = #tpu.pipeline_mode<synchronous>, transform_indices = @transform_7, window_bounds = array<i64: 2, 1, 64>}, {pipeline_mode = #tpu.pipeline_mode<synchronous>, transform_indices = @transform_8, window_bounds = array<i64: 2, 64, 256>}, {pipeline_mode = #tpu.pipeline_mode<synchronous>, transform_indices = @transform_9, window_bounds = array<i64: 2, 1, 256>}, {pipeline_mode = #tpu.pipeline_mode<synchronous>, transform_indices = @transform_10, window_bounds = array<i64: 2, 256, 64>}, {pipeline_mode = #tpu.pipeline_mode<synchronous>, transform_indices = @transform_11, window_bounds = array<i64: 2, 1, 64>}, {pipeline_mode = #tpu.pipeline_mode<synchronous>, transform_indices = @transform_12, window_bounds = array<i64: 1, 64>}, {pipeline_mode = #tpu.pipeline_mode<synchronous>, transform_indices = @transform_13, window_bounds = array<i64: 1, 64>}, {pipeline_mode = #tpu.pipeline_mode<synchronous>, transform_indices = @transform_14, window_bounds = array<i64: 64, 128>}, {pipeline_mode = #tpu.pipeline_mode<synchronous>, transform_indices = @transform_15, window_bounds = array<i64: 1, 128>}, {transform_indices = @transform_16, window_bounds = array<i64: 2, 16, 128>}]} {
    %c0 = arith.constant 0 : index
    %c0_0 = arith.constant 0 : index
    %c0_1 = arith.constant 0 : index
    %0 = vector.load %arg1[%c0, %c0_0, %c0_1] : memref<2x16x64xf32, #tpu.memory_space<vmem>>, vector<2x16x64xf32>
    %1 = vector.shape_cast %0 : vector<2x16x64xf32> to vector<32x64xf32>
    %2 = tpu.iota {dimensions = array<i32: 0>} : vector<16x16xi32>
    %3 = tpu.iota {dimensions = array<i32: 1>} : vector<16x16xi32>
    %4 = arith.cmpi sle, %3, %2 : vector<16x16xi32>
    %5 = vector.shape_cast %4 : vector<16x16xi1> to vector<1x16x16xi1>
    %c0_2 = arith.constant 0 : index
    %c0_3 = arith.constant 0 : index
    %c0_4 = arith.constant 0 : index
    %6 = vector.load %arg2[%c0_2, %c0_3, %c0_4] : memref<2x1x64xf32, #tpu.memory_space<vmem>>, vector<1x1x64xf32>
    %7 = vector.shape_cast %6 : vector<1x1x64xf32> to vector<1x64xf32>
    %c0_5 = arith.constant 0 : index
    %c0_6 = arith.constant 0 : index
    %c0_7 = arith.constant 0 : index
    %8 = vector.load %arg3[%c0_5, %c0_6, %c0_7] : memref<2x1x64xf32, #tpu.memory_space<vmem>>, vector<1x1x64xf32>
    %9 = vector.shape_cast %8 : vector<1x1x64xf32> to vector<1x64xf32>
    %cst = arith.constant dense<0.000000e+00> : vector<32xf32>
    %10 = vector.multi_reduction <add>, %1, %cst [1] : vector<32x64xf32> to vector<32xf32>
    %11 = vector.shape_cast %10 : vector<32xf32> to vector<32x1xf32>
    %cst_8 = arith.constant 6.400000e+01 : f32
    %12 = vector.broadcast %cst_8 : f32 to vector<32x1xf32>
    %13 = arith.divf %11, %12 : vector<32x1xf32>
    %14 = vector.broadcast %13 : vector<32x1xf32> to vector<32x64xf32>
    %15 = arith.subf %1, %14 : vector<32x64xf32>
    %16 = arith.mulf %15, %15 : vector<32x64xf32>
    %cst_9 = arith.constant dense<0.000000e+00> : vector<32xf32>
    %17 = vector.multi_reduction <add>, %16, %cst_9 [1] : vector<32x64xf32> to vector<32xf32>
    %18 = vector.shape_cast %17 : vector<32xf32> to vector<32x1xf32>
    %cst_10 = arith.constant 6.400000e+01 : f32
    %19 = vector.broadcast %cst_10 : f32 to vector<32x1xf32>
    %20 = arith.divf %18, %19 : vector<32x1xf32>
    %21 = vector.broadcast %13 : vector<32x1xf32> to vector<32x64xf32>
    %22 = arith.subf %1, %21 : vector<32x64xf32>
    %cst_11 = arith.constant 9.99999974E-6 : f32
    %23 = vector.broadcast %cst_11 : f32 to vector<32x1xf32>
    %24 = arith.addf %20, %23 : vector<32x1xf32>
    %25 = math.rsqrt %24 : vector<32x1xf32>
    %26 = vector.broadcast %25 : vector<32x1xf32> to vector<32x64xf32>
    %27 = arith.mulf %22, %26 : vector<32x64xf32>
    %28 = vector.broadcast %7 : vector<1x64xf32> to vector<32x64xf32>
    %29 = arith.mulf %27, %28 : vector<32x64xf32>
    %30 = vector.broadcast %9 : vector<1x64xf32> to vector<32x64xf32>
    %31 = arith.addf %29, %30 : vector<32x64xf32>
    %32 = arith.truncf %31 : vector<32x64xf32> to vector<32x64xbf16>
    %c0_12 = arith.constant 0 : index
    %c0_13 = arith.constant 0 : index
    %c0_14 = arith.constant 0 : index
    %33 = vector.load %arg4[%c0_12, %c0_13, %c0_14] : memref<2x64x192xbf16, #tpu.memory_space<vmem>>, vector<1x64x192xbf16>
    %34 = vector.shape_cast %33 : vector<1x64x192xbf16> to vector<64x192xbf16>
    %cst_15 = arith.constant dense<0.000000e+00> : vector<32x192xf32>
    %35 = tpu.matmul %32, %34, %cst_15 {dimension_numbers = #tpu.dot_dimension_numbers<[1], [0], [0], [1], [0, 0, 1, 1], [], []>} : vector<32x64xbf16>, vector<64x192xbf16>, vector<32x192xf32> -> vector<32x192xf32>
    %36 = arith.truncf %35 : vector<32x192xf32> to vector<32x192xbf16>
    %37 = vector.shape_cast %36 : vector<32x192xbf16> to vector<2x16x192xbf16>
    %38 = vector.extract_strided_slice %37 {offsets = [0, 0, 0], sizes = [2, 16, 16], strides = [1, 1, 1]} : vector<2x16x192xbf16> to vector<2x16x16xbf16>
    %39 = vector.extract_strided_slice %37 {offsets = [0, 0, 16], sizes = [2, 16, 16], strides = [1, 1, 1]} : vector<2x16x192xbf16> to vector<2x16x16xbf16>
    %40 = vector.extract_strided_slice %37 {offsets = [0, 0, 32], sizes = [2, 16, 16], strides = [1, 1, 1]} : vector<2x16x192xbf16> to vector<2x16x16xbf16>
    %41 = vector.extract_strided_slice %37 {offsets = [0, 0, 48], sizes = [2, 16, 16], strides = [1, 1, 1]} : vector<2x16x192xbf16> to vector<2x16x16xbf16>
    %42 = vector.shape_cast %38 : vector<2x16x16xbf16> to vector<2x1x16x16xbf16>
    %43 = vector.shape_cast %39 : vector<2x16x16xbf16> to vector<2x1x16x16xbf16>
    %44 = vector.shape_cast %40 : vector<2x16x16xbf16> to vector<2x1x16x16xbf16>
    %45 = vector.shape_cast %41 : vector<2x16x16xbf16> to vector<2x1x16x16xbf16>
    %46 = tpu.concatenate %42, %43, %44, %45 in 1 : vector<2x1x16x16xbf16>, vector<2x1x16x16xbf16>, vector<2x1x16x16xbf16>, vector<2x1x16x16xbf16> -> vector<2x4x16x16xbf16>
    %47 = vector.shape_cast %46 : vector<2x4x16x16xbf16> to vector<8x16x16xbf16>
    %48 = vector.extract_strided_slice %37 {offsets = [0, 0, 64], sizes = [2, 16, 16], strides = [1, 1, 1]} : vector<2x16x192xbf16> to vector<2x16x16xbf16>
    %49 = vector.extract_strided_slice %37 {offsets = [0, 0, 80], sizes = [2, 16, 16], strides = [1, 1, 1]} : vector<2x16x192xbf16> to vector<2x16x16xbf16>
    %50 = vector.extract_strided_slice %37 {offsets = [0, 0, 96], sizes = [2, 16, 16], strides = [1, 1, 1]} : vector<2x16x192xbf16> to vector<2x16x16xbf16>
    %51 = vector.extract_strided_slice %37 {offsets = [0, 0, 112], sizes = [2, 16, 16], strides = [1, 1, 1]} : vector<2x16x192xbf16> to vector<2x16x16xbf16>
    %52 = vector.shape_cast %48 : vector<2x16x16xbf16> to vector<2x1x16x16xbf16>
    %53 = vector.shape_cast %49 : vector<2x16x16xbf16> to vector<2x1x16x16xbf16>
    %54 = vector.shape_cast %50 : vector<2x16x16xbf16> to vector<2x1x16x16xbf16>
    %55 = vector.shape_cast %51 : vector<2x16x16xbf16> to vector<2x1x16x16xbf16>
    %56 = tpu.concatenate %52, %53, %54, %55 in 1 : vector<2x1x16x16xbf16>, vector<2x1x16x16xbf16>, vector<2x1x16x16xbf16>, vector<2x1x16x16xbf16> -> vector<2x4x16x16xbf16>
    %57 = vector.shape_cast %56 : vector<2x4x16x16xbf16> to vector<8x16x16xbf16>
    %58 = vector.extract_strided_slice %37 {offsets = [0, 0, 128], sizes = [2, 16, 16], strides = [1, 1, 1]} : vector<2x16x192xbf16> to vector<2x16x16xbf16>
    %59 = vector.extract_strided_slice %37 {offsets = [0, 0, 144], sizes = [2, 16, 16], strides = [1, 1, 1]} : vector<2x16x192xbf16> to vector<2x16x16xbf16>
    %60 = vector.extract_strided_slice %37 {offsets = [0, 0, 160], sizes = [2, 16, 16], strides = [1, 1, 1]} : vector<2x16x192xbf16> to vector<2x16x16xbf16>
    %61 = vector.extract_strided_slice %37 {offsets = [0, 0, 176], sizes = [2, 16, 16], strides = [1, 1, 1]} : vector<2x16x192xbf16> to vector<2x16x16xbf16>
    %62 = vector.shape_cast %58 : vector<2x16x16xbf16> to vector<2x1x16x16xbf16>
    %63 = vector.shape_cast %59 : vector<2x16x16xbf16> to vector<2x1x16x16xbf16>
    %64 = vector.shape_cast %60 : vector<2x16x16xbf16> to vector<2x1x16x16xbf16>
    %65 = vector.shape_cast %61 : vector<2x16x16xbf16> to vector<2x1x16x16xbf16>
    %66 = tpu.concatenate %62, %63, %64, %65 in 1 : vector<2x1x16x16xbf16>, vector<2x1x16x16xbf16>, vector<2x1x16x16xbf16>, vector<2x1x16x16xbf16> -> vector<2x4x16x16xbf16>
    %67 = vector.shape_cast %66 : vector<2x4x16x16xbf16> to vector<8x16x16xbf16>
    "tpu.trace_start"() <{level = 10 : i32, message = "gtd,gsd->gts"}> : () -> ()
    %cst_16 = arith.constant dense<0.000000e+00> : vector<8x16x16xf32>
    %68 = tpu.matmul %47, %57, %cst_16 {dimension_numbers = #tpu.dot_dimension_numbers<[2], [2], [1], [1], [0, 0, 0, 1, 1, 1], [0], [0]>} : vector<8x16x16xbf16>, vector<8x16x16xbf16>, vector<8x16x16xf32> -> vector<8x16x16xf32>
    "tpu.trace_stop"() : () -> ()
    %cst_17 = arith.constant 1.250000e-01 : f32
    %69 = vector.broadcast %cst_17 : f32 to vector<8x16x16xf32>
    %70 = arith.mulf %68, %69 : vector<8x16x16xf32>
    %cst_18 = arith.constant -1.000000e+30 : f32
    %71 = vector.shape_cast %5 : vector<1x16x16xi1> to vector<1x16x16xi1>
    %72 = vector.broadcast %71 : vector<1x16x16xi1> to vector<8x16x16xi1>
    %73 = vector.broadcast %cst_18 : f32 to vector<8x16x16xf32>
    %74 = arith.select %72, %70, %73 : vector<8x16x16xi1>, vector<8x16x16xf32>
    %cst_19 = arith.constant dense<0xFF800000> : vector<8x16xf32>
    %75 = vector.multi_reduction <maximumf>, %74, %cst_19 [2] : vector<8x16x16xf32> to vector<8x16xf32>
    %76 = vector.shape_cast %75 : vector<8x16xf32> to vector<8x16x1xf32>
    %77 = vector.broadcast %76 : vector<8x16x1xf32> to vector<8x16x16xf32>
    %78 = arith.subf %74, %77 : vector<8x16x16xf32>
    %79 = math.exp %78 : vector<8x16x16xf32>
    %cst_20 = arith.constant dense<0.000000e+00> : vector<8x16xf32>
    %80 = vector.multi_reduction <add>, %79, %cst_20 [2] : vector<8x16x16xf32> to vector<8x16xf32>
    %81 = vector.shape_cast %80 : vector<8x16xf32> to vector<8x16x1xf32>
    %82 = tpu.reciprocal %81 {approx = true} : vector<8x16x1xf32> -> vector<8x16x1xf32>
    %83 = vector.broadcast %82 : vector<8x16x1xf32> to vector<8x16x16xf32>
    %84 = arith.mulf %79, %83 : vector<8x16x16xf32>
    %85 = arith.truncf %84 : vector<8x16x16xf32> to vector<8x16x16xbf16>
    "tpu.trace_start"() <{level = 10 : i32, message = "gts,gsd->gtd"}> : () -> ()
    %cst_21 = arith.constant dense<0.000000e+00> : vector<8x16x16xf32>
    %86 = tpu.matmul %85, %67, %cst_21 {dimension_numbers = #tpu.dot_dimension_numbers<[2], [1], [1], [2], [0, 0, 0, 1, 1, 2], [0], [0]>} : vector<8x16x16xbf16>, vector<8x16x16xbf16>, vector<8x16x16xf32> -> vector<8x16x16xf32>
    "tpu.trace_stop"() : () -> ()
    %87 = vector.shape_cast %86 : vector<8x16x16xf32> to vector<2x4x16x16xf32>
    %88 = vector.extract_strided_slice %87 {offsets = [0, 0, 0, 0], sizes = [2, 1, 16, 16], strides = [1, 1, 1, 1]} : vector<2x4x16x16xf32> to vector<2x1x16x16xf32>
    %89 = vector.shape_cast %88 : vector<2x1x16x16xf32> to vector<2x16x16xf32>
    %90 = vector.extract_strided_slice %87 {offsets = [0, 1, 0, 0], sizes = [2, 1, 16, 16], strides = [1, 1, 1, 1]} : vector<2x4x16x16xf32> to vector<2x1x16x16xf32>
    %91 = vector.shape_cast %90 : vector<2x1x16x16xf32> to vector<2x16x16xf32>
    %92 = vector.extract_strided_slice %87 {offsets = [0, 2, 0, 0], sizes = [2, 1, 16, 16], strides = [1, 1, 1, 1]} : vector<2x4x16x16xf32> to vector<2x1x16x16xf32>
    %93 = vector.shape_cast %92 : vector<2x1x16x16xf32> to vector<2x16x16xf32>
    %94 = vector.extract_strided_slice %87 {offsets = [0, 3, 0, 0], sizes = [2, 1, 16, 16], strides = [1, 1, 1, 1]} : vector<2x4x16x16xf32> to vector<2x1x16x16xf32>
    %95 = vector.shape_cast %94 : vector<2x1x16x16xf32> to vector<2x16x16xf32>
    %96 = tpu.concatenate %89, %91, %93, %95 in 2 : vector<2x16x16xf32>, vector<2x16x16xf32>, vector<2x16x16xf32>, vector<2x16x16xf32> -> vector<2x16x64xf32>
    %97 = vector.shape_cast %96 : vector<2x16x64xf32> to vector<32x64xf32>
    %98 = arith.truncf %97 : vector<32x64xf32> to vector<32x64xbf16>
    %c0_22 = arith.constant 0 : index
    %c0_23 = arith.constant 0 : index
    %c0_24 = arith.constant 0 : index
    %99 = vector.load %arg5[%c0_22, %c0_23, %c0_24] : memref<2x64x64xbf16, #tpu.memory_space<vmem>>, vector<1x64x64xbf16>
    %100 = vector.shape_cast %99 : vector<1x64x64xbf16> to vector<64x64xbf16>
    %cst_25 = arith.constant dense<0.000000e+00> : vector<32x64xf32>
    %101 = tpu.matmul %98, %100, %cst_25 {dimension_numbers = #tpu.dot_dimension_numbers<[1], [0], [0], [1], [0, 0, 1, 1], [], []>} : vector<32x64xbf16>, vector<64x64xbf16>, vector<32x64xf32> -> vector<32x64xf32>
    %c0_26 = arith.constant 0 : index
    %c0_27 = arith.constant 0 : index
    %c0_28 = arith.constant 0 : index
    %102 = vector.load %arg6[%c0_26, %c0_27, %c0_28] : memref<2x1x64xf32, #tpu.memory_space<vmem>>, vector<1x1x64xf32>
    %103 = vector.shape_cast %102 : vector<1x1x64xf32> to vector<1x64xf32>
    %104 = vector.broadcast %103 : vector<1x64xf32> to vector<32x64xf32>
    %105 = arith.addf %101, %104 : vector<32x64xf32>
    %106 = arith.addf %1, %105 : vector<32x64xf32>
    %c0_29 = arith.constant 0 : index
    %c0_30 = arith.constant 0 : index
    %c0_31 = arith.constant 0 : index
    %107 = vector.load %arg7[%c0_29, %c0_30, %c0_31] : memref<2x1x64xf32, #tpu.memory_space<vmem>>, vector<1x1x64xf32>
    %108 = vector.shape_cast %107 : vector<1x1x64xf32> to vector<1x64xf32>
    %c0_32 = arith.constant 0 : index
    %c0_33 = arith.constant 0 : index
    %c0_34 = arith.constant 0 : index
    %109 = vector.load %arg8[%c0_32, %c0_33, %c0_34] : memref<2x1x64xf32, #tpu.memory_space<vmem>>, vector<1x1x64xf32>
    %110 = vector.shape_cast %109 : vector<1x1x64xf32> to vector<1x64xf32>
    %cst_35 = arith.constant dense<0.000000e+00> : vector<32xf32>
    %111 = vector.multi_reduction <add>, %106, %cst_35 [1] : vector<32x64xf32> to vector<32xf32>
    %112 = vector.shape_cast %111 : vector<32xf32> to vector<32x1xf32>
    %cst_36 = arith.constant 6.400000e+01 : f32
    %113 = vector.broadcast %cst_36 : f32 to vector<32x1xf32>
    %114 = arith.divf %112, %113 : vector<32x1xf32>
    %115 = vector.broadcast %114 : vector<32x1xf32> to vector<32x64xf32>
    %116 = arith.subf %106, %115 : vector<32x64xf32>
    %117 = arith.mulf %116, %116 : vector<32x64xf32>
    %cst_37 = arith.constant dense<0.000000e+00> : vector<32xf32>
    %118 = vector.multi_reduction <add>, %117, %cst_37 [1] : vector<32x64xf32> to vector<32xf32>
    %119 = vector.shape_cast %118 : vector<32xf32> to vector<32x1xf32>
    %cst_38 = arith.constant 6.400000e+01 : f32
    %120 = vector.broadcast %cst_38 : f32 to vector<32x1xf32>
    %121 = arith.divf %119, %120 : vector<32x1xf32>
    %122 = vector.broadcast %114 : vector<32x1xf32> to vector<32x64xf32>
    %123 = arith.subf %106, %122 : vector<32x64xf32>
    %cst_39 = arith.constant 9.99999974E-6 : f32
    %124 = vector.broadcast %cst_39 : f32 to vector<32x1xf32>
    %125 = arith.addf %121, %124 : vector<32x1xf32>
    %126 = math.rsqrt %125 : vector<32x1xf32>
    %127 = vector.broadcast %126 : vector<32x1xf32> to vector<32x64xf32>
    %128 = arith.mulf %123, %127 : vector<32x64xf32>
    %129 = vector.broadcast %108 : vector<1x64xf32> to vector<32x64xf32>
    %130 = arith.mulf %128, %129 : vector<32x64xf32>
    %131 = vector.broadcast %110 : vector<1x64xf32> to vector<32x64xf32>
    %132 = arith.addf %130, %131 : vector<32x64xf32>
    %133 = arith.truncf %132 : vector<32x64xf32> to vector<32x64xbf16>
    %c0_40 = arith.constant 0 : index
    %c0_41 = arith.constant 0 : index
    %c0_42 = arith.constant 0 : index
    %134 = vector.load %arg9[%c0_40, %c0_41, %c0_42] : memref<2x64x256xbf16, #tpu.memory_space<vmem>>, vector<1x64x256xbf16>
    %135 = vector.shape_cast %134 : vector<1x64x256xbf16> to vector<64x256xbf16>
    %cst_43 = arith.constant dense<0.000000e+00> : vector<32x256xf32>
    %136 = tpu.matmul %133, %135, %cst_43 {dimension_numbers = #tpu.dot_dimension_numbers<[1], [0], [0], [1], [0, 0, 1, 1], [], []>} : vector<32x64xbf16>, vector<64x256xbf16>, vector<32x256xf32> -> vector<32x256xf32>
    %c0_44 = arith.constant 0 : index
    %c0_45 = arith.constant 0 : index
    %c0_46 = arith.constant 0 : index
    %137 = vector.load %arg10[%c0_44, %c0_45, %c0_46] : memref<2x1x256xf32, #tpu.memory_space<vmem>>, vector<1x1x256xf32>
    %138 = vector.shape_cast %137 : vector<1x1x256xf32> to vector<1x256xf32>
    %139 = vector.broadcast %138 : vector<1x256xf32> to vector<32x256xf32>
    %140 = arith.addf %136, %139 : vector<32x256xf32>
    %cst_47 = arith.constant 0.000000e+00 : f32
    %141 = vector.broadcast %cst_47 : f32 to vector<32x256xf32>
    %142 = arith.maximumf %140, %141 : vector<32x256xf32>
    %143 = arith.truncf %142 : vector<32x256xf32> to vector<32x256xbf16>
    %c0_48 = arith.constant 0 : index
    %c0_49 = arith.constant 0 : index
    %c0_50 = arith.constant 0 : index
    %144 = vector.load %arg11[%c0_48, %c0_49, %c0_50] : memref<2x256x64xbf16, #tpu.memory_space<vmem>>, vector<1x256x64xbf16>
    %145 = vector.shape_cast %144 : vector<1x256x64xbf16> to vector<256x64xbf16>
    %cst_51 = arith.constant dense<0.000000e+00> : vector<32x64xf32>
    %146 = tpu.matmul %143, %145, %cst_51 {dimension_numbers = #tpu.dot_dimension_numbers<[1], [0], [0], [1], [0, 0, 1, 1], [], []>} : vector<32x256xbf16>, vector<256x64xbf16>, vector<32x64xf32> -> vector<32x64xf32>
    %147 = arith.addf %106, %146 : vector<32x64xf32>
    %c0_52 = arith.constant 0 : index
    %c0_53 = arith.constant 0 : index
    %c0_54 = arith.constant 0 : index
    %148 = vector.load %arg12[%c0_52, %c0_53, %c0_54] : memref<2x1x64xf32, #tpu.memory_space<vmem>>, vector<1x1x64xf32>
    %149 = vector.shape_cast %148 : vector<1x1x64xf32> to vector<1x64xf32>
    %150 = vector.broadcast %149 : vector<1x64xf32> to vector<32x64xf32>
    %151 = arith.addf %147, %150 : vector<32x64xf32>
    %c1 = arith.constant 1 : index
    %c0_55 = arith.constant 0 : index
    %c0_56 = arith.constant 0 : index
    %152 = vector.load %arg2[%c1, %c0_55, %c0_56] : memref<2x1x64xf32, #tpu.memory_space<vmem>>, vector<1x1x64xf32>
    %153 = vector.shape_cast %152 : vector<1x1x64xf32> to vector<1x64xf32>
    %c1_57 = arith.constant 1 : index
    %c0_58 = arith.constant 0 : index
    %c0_59 = arith.constant 0 : index
    %154 = vector.load %arg3[%c1_57, %c0_58, %c0_59] : memref<2x1x64xf32, #tpu.memory_space<vmem>>, vector<1x1x64xf32>
    %155 = vector.shape_cast %154 : vector<1x1x64xf32> to vector<1x64xf32>
    %cst_60 = arith.constant dense<0.000000e+00> : vector<32xf32>
    %156 = vector.multi_reduction <add>, %151, %cst_60 [1] : vector<32x64xf32> to vector<32xf32>
    %157 = vector.shape_cast %156 : vector<32xf32> to vector<32x1xf32>
    %cst_61 = arith.constant 6.400000e+01 : f32
    %158 = vector.broadcast %cst_61 : f32 to vector<32x1xf32>
    %159 = arith.divf %157, %158 : vector<32x1xf32>
    %160 = vector.broadcast %159 : vector<32x1xf32> to vector<32x64xf32>
    %161 = arith.subf %151, %160 : vector<32x64xf32>
    %162 = arith.mulf %161, %161 : vector<32x64xf32>
    %cst_62 = arith.constant dense<0.000000e+00> : vector<32xf32>
    %163 = vector.multi_reduction <add>, %162, %cst_62 [1] : vector<32x64xf32> to vector<32xf32>
    %164 = vector.shape_cast %163 : vector<32xf32> to vector<32x1xf32>
    %cst_63 = arith.constant 6.400000e+01 : f32
    %165 = vector.broadcast %cst_63 : f32 to vector<32x1xf32>
    %166 = arith.divf %164, %165 : vector<32x1xf32>
    %167 = vector.broadcast %159 : vector<32x1xf32> to vector<32x64xf32>
    %168 = arith.subf %151, %167 : vector<32x64xf32>
    %cst_64 = arith.constant 9.99999974E-6 : f32
    %169 = vector.broadcast %cst_64 : f32 to vector<32x1xf32>
    %170 = arith.addf %166, %169 : vector<32x1xf32>
    %171 = math.rsqrt %170 : vector<32x1xf32>
    %172 = vector.broadcast %171 : vector<32x1xf32> to vector<32x64xf32>
    %173 = arith.mulf %168, %172 : vector<32x64xf32>
    %174 = vector.broadcast %153 : vector<1x64xf32> to vector<32x64xf32>
    %175 = arith.mulf %173, %174 : vector<32x64xf32>
    %176 = vector.broadcast %155 : vector<1x64xf32> to vector<32x64xf32>
    %177 = arith.addf %175, %176 : vector<32x64xf32>
    %178 = arith.truncf %177 : vector<32x64xf32> to vector<32x64xbf16>
    %c1_65 = arith.constant 1 : index
    %c0_66 = arith.constant 0 : index
    %c0_67 = arith.constant 0 : index
    %179 = vector.load %arg4[%c1_65, %c0_66, %c0_67] : memref<2x64x192xbf16, #tpu.memory_space<vmem>>, vector<1x64x192xbf16>
    %180 = vector.shape_cast %179 : vector<1x64x192xbf16> to vector<64x192xbf16>
    %cst_68 = arith.constant dense<0.000000e+00> : vector<32x192xf32>
    %181 = tpu.matmul %178, %180, %cst_68 {dimension_numbers = #tpu.dot_dimension_numbers<[1], [0], [0], [1], [0, 0, 1, 1], [], []>} : vector<32x64xbf16>, vector<64x192xbf16>, vector<32x192xf32> -> vector<32x192xf32>
    %182 = arith.truncf %181 : vector<32x192xf32> to vector<32x192xbf16>
    %183 = vector.shape_cast %182 : vector<32x192xbf16> to vector<2x16x192xbf16>
    %184 = vector.extract_strided_slice %183 {offsets = [0, 0, 0], sizes = [2, 16, 16], strides = [1, 1, 1]} : vector<2x16x192xbf16> to vector<2x16x16xbf16>
    %185 = vector.extract_strided_slice %183 {offsets = [0, 0, 16], sizes = [2, 16, 16], strides = [1, 1, 1]} : vector<2x16x192xbf16> to vector<2x16x16xbf16>
    %186 = vector.extract_strided_slice %183 {offsets = [0, 0, 32], sizes = [2, 16, 16], strides = [1, 1, 1]} : vector<2x16x192xbf16> to vector<2x16x16xbf16>
    %187 = vector.extract_strided_slice %183 {offsets = [0, 0, 48], sizes = [2, 16, 16], strides = [1, 1, 1]} : vector<2x16x192xbf16> to vector<2x16x16xbf16>
    %188 = vector.shape_cast %184 : vector<2x16x16xbf16> to vector<2x1x16x16xbf16>
    %189 = vector.shape_cast %185 : vector<2x16x16xbf16> to vector<2x1x16x16xbf16>
    %190 = vector.shape_cast %186 : vector<2x16x16xbf16> to vector<2x1x16x16xbf16>
    %191 = vector.shape_cast %187 : vector<2x16x16xbf16> to vector<2x1x16x16xbf16>
    %192 = tpu.concatenate %188, %189, %190, %191 in 1 : vector<2x1x16x16xbf16>, vector<2x1x16x16xbf16>, vector<2x1x16x16xbf16>, vector<2x1x16x16xbf16> -> vector<2x4x16x16xbf16>
    %193 = vector.shape_cast %192 : vector<2x4x16x16xbf16> to vector<8x16x16xbf16>
    %194 = vector.extract_strided_slice %183 {offsets = [0, 0, 64], sizes = [2, 16, 16], strides = [1, 1, 1]} : vector<2x16x192xbf16> to vector<2x16x16xbf16>
    %195 = vector.extract_strided_slice %183 {offsets = [0, 0, 80], sizes = [2, 16, 16], strides = [1, 1, 1]} : vector<2x16x192xbf16> to vector<2x16x16xbf16>
    %196 = vector.extract_strided_slice %183 {offsets = [0, 0, 96], sizes = [2, 16, 16], strides = [1, 1, 1]} : vector<2x16x192xbf16> to vector<2x16x16xbf16>
    %197 = vector.extract_strided_slice %183 {offsets = [0, 0, 112], sizes = [2, 16, 16], strides = [1, 1, 1]} : vector<2x16x192xbf16> to vector<2x16x16xbf16>
    %198 = vector.shape_cast %194 : vector<2x16x16xbf16> to vector<2x1x16x16xbf16>
    %199 = vector.shape_cast %195 : vector<2x16x16xbf16> to vector<2x1x16x16xbf16>
    %200 = vector.shape_cast %196 : vector<2x16x16xbf16> to vector<2x1x16x16xbf16>
    %201 = vector.shape_cast %197 : vector<2x16x16xbf16> to vector<2x1x16x16xbf16>
    %202 = tpu.concatenate %198, %199, %200, %201 in 1 : vector<2x1x16x16xbf16>, vector<2x1x16x16xbf16>, vector<2x1x16x16xbf16>, vector<2x1x16x16xbf16> -> vector<2x4x16x16xbf16>
    %203 = vector.shape_cast %202 : vector<2x4x16x16xbf16> to vector<8x16x16xbf16>
    %204 = vector.extract_strided_slice %183 {offsets = [0, 0, 128], sizes = [2, 16, 16], strides = [1, 1, 1]} : vector<2x16x192xbf16> to vector<2x16x16xbf16>
    %205 = vector.extract_strided_slice %183 {offsets = [0, 0, 144], sizes = [2, 16, 16], strides = [1, 1, 1]} : vector<2x16x192xbf16> to vector<2x16x16xbf16>
    %206 = vector.extract_strided_slice %183 {offsets = [0, 0, 160], sizes = [2, 16, 16], strides = [1, 1, 1]} : vector<2x16x192xbf16> to vector<2x16x16xbf16>
    %207 = vector.extract_strided_slice %183 {offsets = [0, 0, 176], sizes = [2, 16, 16], strides = [1, 1, 1]} : vector<2x16x192xbf16> to vector<2x16x16xbf16>
    %208 = vector.shape_cast %204 : vector<2x16x16xbf16> to vector<2x1x16x16xbf16>
    %209 = vector.shape_cast %205 : vector<2x16x16xbf16> to vector<2x1x16x16xbf16>
    %210 = vector.shape_cast %206 : vector<2x16x16xbf16> to vector<2x1x16x16xbf16>
    %211 = vector.shape_cast %207 : vector<2x16x16xbf16> to vector<2x1x16x16xbf16>
    %212 = tpu.concatenate %208, %209, %210, %211 in 1 : vector<2x1x16x16xbf16>, vector<2x1x16x16xbf16>, vector<2x1x16x16xbf16>, vector<2x1x16x16xbf16> -> vector<2x4x16x16xbf16>
    %213 = vector.shape_cast %212 : vector<2x4x16x16xbf16> to vector<8x16x16xbf16>
    "tpu.trace_start"() <{level = 10 : i32, message = "gtd,gsd->gts"}> : () -> ()
    %cst_69 = arith.constant dense<0.000000e+00> : vector<8x16x16xf32>
    %214 = tpu.matmul %193, %203, %cst_69 {dimension_numbers = #tpu.dot_dimension_numbers<[2], [2], [1], [1], [0, 0, 0, 1, 1, 1], [0], [0]>} : vector<8x16x16xbf16>, vector<8x16x16xbf16>, vector<8x16x16xf32> -> vector<8x16x16xf32>
    "tpu.trace_stop"() : () -> ()
    %cst_70 = arith.constant 1.250000e-01 : f32
    %215 = vector.broadcast %cst_70 : f32 to vector<8x16x16xf32>
    %216 = arith.mulf %214, %215 : vector<8x16x16xf32>
    %cst_71 = arith.constant -1.000000e+30 : f32
    %217 = vector.shape_cast %5 : vector<1x16x16xi1> to vector<1x16x16xi1>
    %218 = vector.broadcast %217 : vector<1x16x16xi1> to vector<8x16x16xi1>
    %219 = vector.broadcast %cst_71 : f32 to vector<8x16x16xf32>
    %220 = arith.select %218, %216, %219 : vector<8x16x16xi1>, vector<8x16x16xf32>
    %cst_72 = arith.constant dense<0xFF800000> : vector<8x16xf32>
    %221 = vector.multi_reduction <maximumf>, %220, %cst_72 [2] : vector<8x16x16xf32> to vector<8x16xf32>
    %222 = vector.shape_cast %221 : vector<8x16xf32> to vector<8x16x1xf32>
    %223 = vector.broadcast %222 : vector<8x16x1xf32> to vector<8x16x16xf32>
    %224 = arith.subf %220, %223 : vector<8x16x16xf32>
    %225 = math.exp %224 : vector<8x16x16xf32>
    %cst_73 = arith.constant dense<0.000000e+00> : vector<8x16xf32>
    %226 = vector.multi_reduction <add>, %225, %cst_73 [2] : vector<8x16x16xf32> to vector<8x16xf32>
    %227 = vector.shape_cast %226 : vector<8x16xf32> to vector<8x16x1xf32>
    %228 = tpu.reciprocal %227 {approx = true} : vector<8x16x1xf32> -> vector<8x16x1xf32>
    %229 = vector.broadcast %228 : vector<8x16x1xf32> to vector<8x16x16xf32>
    %230 = arith.mulf %225, %229 : vector<8x16x16xf32>
    %231 = arith.truncf %230 : vector<8x16x16xf32> to vector<8x16x16xbf16>
    "tpu.trace_start"() <{level = 10 : i32, message = "gts,gsd->gtd"}> : () -> ()
    %cst_74 = arith.constant dense<0.000000e+00> : vector<8x16x16xf32>
    %232 = tpu.matmul %231, %213, %cst_74 {dimension_numbers = #tpu.dot_dimension_numbers<[2], [1], [1], [2], [0, 0, 0, 1, 1, 2], [0], [0]>} : vector<8x16x16xbf16>, vector<8x16x16xbf16>, vector<8x16x16xf32> -> vector<8x16x16xf32>
    "tpu.trace_stop"() : () -> ()
    %233 = vector.shape_cast %232 : vector<8x16x16xf32> to vector<2x4x16x16xf32>
    %234 = vector.extract_strided_slice %233 {offsets = [0, 0, 0, 0], sizes = [2, 1, 16, 16], strides = [1, 1, 1, 1]} : vector<2x4x16x16xf32> to vector<2x1x16x16xf32>
    %235 = vector.shape_cast %234 : vector<2x1x16x16xf32> to vector<2x16x16xf32>
    %236 = vector.extract_strided_slice %233 {offsets = [0, 1, 0, 0], sizes = [2, 1, 16, 16], strides = [1, 1, 1, 1]} : vector<2x4x16x16xf32> to vector<2x1x16x16xf32>
    %237 = vector.shape_cast %236 : vector<2x1x16x16xf32> to vector<2x16x16xf32>
    %238 = vector.extract_strided_slice %233 {offsets = [0, 2, 0, 0], sizes = [2, 1, 16, 16], strides = [1, 1, 1, 1]} : vector<2x4x16x16xf32> to vector<2x1x16x16xf32>
    %239 = vector.shape_cast %238 : vector<2x1x16x16xf32> to vector<2x16x16xf32>
    %240 = vector.extract_strided_slice %233 {offsets = [0, 3, 0, 0], sizes = [2, 1, 16, 16], strides = [1, 1, 1, 1]} : vector<2x4x16x16xf32> to vector<2x1x16x16xf32>
    %241 = vector.shape_cast %240 : vector<2x1x16x16xf32> to vector<2x16x16xf32>
    %242 = tpu.concatenate %235, %237, %239, %241 in 2 : vector<2x16x16xf32>, vector<2x16x16xf32>, vector<2x16x16xf32>, vector<2x16x16xf32> -> vector<2x16x64xf32>
    %243 = vector.shape_cast %242 : vector<2x16x64xf32> to vector<32x64xf32>
    %244 = arith.truncf %243 : vector<32x64xf32> to vector<32x64xbf16>
    %c1_75 = arith.constant 1 : index
    %c0_76 = arith.constant 0 : index
    %c0_77 = arith.constant 0 : index
    %245 = vector.load %arg5[%c1_75, %c0_76, %c0_77] : memref<2x64x64xbf16, #tpu.memory_space<vmem>>, vector<1x64x64xbf16>
    %246 = vector.shape_cast %245 : vector<1x64x64xbf16> to vector<64x64xbf16>
    %cst_78 = arith.constant dense<0.000000e+00> : vector<32x64xf32>
    %247 = tpu.matmul %244, %246, %cst_78 {dimension_numbers = #tpu.dot_dimension_numbers<[1], [0], [0], [1], [0, 0, 1, 1], [], []>} : vector<32x64xbf16>, vector<64x64xbf16>, vector<32x64xf32> -> vector<32x64xf32>
    %c1_79 = arith.constant 1 : index
    %c0_80 = arith.constant 0 : index
    %c0_81 = arith.constant 0 : index
    %248 = vector.load %arg6[%c1_79, %c0_80, %c0_81] : memref<2x1x64xf32, #tpu.memory_space<vmem>>, vector<1x1x64xf32>
    %249 = vector.shape_cast %248 : vector<1x1x64xf32> to vector<1x64xf32>
    %250 = vector.broadcast %249 : vector<1x64xf32> to vector<32x64xf32>
    %251 = arith.addf %247, %250 : vector<32x64xf32>
    %252 = arith.addf %151, %251 : vector<32x64xf32>
    %c1_82 = arith.constant 1 : index
    %c0_83 = arith.constant 0 : index
    %c0_84 = arith.constant 0 : index
    %253 = vector.load %arg7[%c1_82, %c0_83, %c0_84] : memref<2x1x64xf32, #tpu.memory_space<vmem>>, vector<1x1x64xf32>
    %254 = vector.shape_cast %253 : vector<1x1x64xf32> to vector<1x64xf32>
    %c1_85 = arith.constant 1 : index
    %c0_86 = arith.constant 0 : index
    %c0_87 = arith.constant 0 : index
    %255 = vector.load %arg8[%c1_85, %c0_86, %c0_87] : memref<2x1x64xf32, #tpu.memory_space<vmem>>, vector<1x1x64xf32>
    %256 = vector.shape_cast %255 : vector<1x1x64xf32> to vector<1x64xf32>
    %cst_88 = arith.constant dense<0.000000e+00> : vector<32xf32>
    %257 = vector.multi_reduction <add>, %252, %cst_88 [1] : vector<32x64xf32> to vector<32xf32>
    %258 = vector.shape_cast %257 : vector<32xf32> to vector<32x1xf32>
    %cst_89 = arith.constant 6.400000e+01 : f32
    %259 = vector.broadcast %cst_89 : f32 to vector<32x1xf32>
    %260 = arith.divf %258, %259 : vector<32x1xf32>
    %261 = vector.broadcast %260 : vector<32x1xf32> to vector<32x64xf32>
    %262 = arith.subf %252, %261 : vector<32x64xf32>
    %263 = arith.mulf %262, %262 : vector<32x64xf32>
    %cst_90 = arith.constant dense<0.000000e+00> : vector<32xf32>
    %264 = vector.multi_reduction <add>, %263, %cst_90 [1] : vector<32x64xf32> to vector<32xf32>
    %265 = vector.shape_cast %264 : vector<32xf32> to vector<32x1xf32>
    %cst_91 = arith.constant 6.400000e+01 : f32
    %266 = vector.broadcast %cst_91 : f32 to vector<32x1xf32>
    %267 = arith.divf %265, %266 : vector<32x1xf32>
    %268 = vector.broadcast %260 : vector<32x1xf32> to vector<32x64xf32>
    %269 = arith.subf %252, %268 : vector<32x64xf32>
    %cst_92 = arith.constant 9.99999974E-6 : f32
    %270 = vector.broadcast %cst_92 : f32 to vector<32x1xf32>
    %271 = arith.addf %267, %270 : vector<32x1xf32>
    %272 = math.rsqrt %271 : vector<32x1xf32>
    %273 = vector.broadcast %272 : vector<32x1xf32> to vector<32x64xf32>
    %274 = arith.mulf %269, %273 : vector<32x64xf32>
    %275 = vector.broadcast %254 : vector<1x64xf32> to vector<32x64xf32>
    %276 = arith.mulf %274, %275 : vector<32x64xf32>
    %277 = vector.broadcast %256 : vector<1x64xf32> to vector<32x64xf32>
    %278 = arith.addf %276, %277 : vector<32x64xf32>
    %279 = arith.truncf %278 : vector<32x64xf32> to vector<32x64xbf16>
    %c1_93 = arith.constant 1 : index
    %c0_94 = arith.constant 0 : index
    %c0_95 = arith.constant 0 : index
    %280 = vector.load %arg9[%c1_93, %c0_94, %c0_95] : memref<2x64x256xbf16, #tpu.memory_space<vmem>>, vector<1x64x256xbf16>
    %281 = vector.shape_cast %280 : vector<1x64x256xbf16> to vector<64x256xbf16>
    %cst_96 = arith.constant dense<0.000000e+00> : vector<32x256xf32>
    %282 = tpu.matmul %279, %281, %cst_96 {dimension_numbers = #tpu.dot_dimension_numbers<[1], [0], [0], [1], [0, 0, 1, 1], [], []>} : vector<32x64xbf16>, vector<64x256xbf16>, vector<32x256xf32> -> vector<32x256xf32>
    %c1_97 = arith.constant 1 : index
    %c0_98 = arith.constant 0 : index
    %c0_99 = arith.constant 0 : index
    %283 = vector.load %arg10[%c1_97, %c0_98, %c0_99] : memref<2x1x256xf32, #tpu.memory_space<vmem>>, vector<1x1x256xf32>
    %284 = vector.shape_cast %283 : vector<1x1x256xf32> to vector<1x256xf32>
    %285 = vector.broadcast %284 : vector<1x256xf32> to vector<32x256xf32>
    %286 = arith.addf %282, %285 : vector<32x256xf32>
    %cst_100 = arith.constant 0.000000e+00 : f32
    %287 = vector.broadcast %cst_100 : f32 to vector<32x256xf32>
    %288 = arith.maximumf %286, %287 : vector<32x256xf32>
    %289 = arith.truncf %288 : vector<32x256xf32> to vector<32x256xbf16>
    %c1_101 = arith.constant 1 : index
    %c0_102 = arith.constant 0 : index
    %c0_103 = arith.constant 0 : index
    %290 = vector.load %arg11[%c1_101, %c0_102, %c0_103] : memref<2x256x64xbf16, #tpu.memory_space<vmem>>, vector<1x256x64xbf16>
    %291 = vector.shape_cast %290 : vector<1x256x64xbf16> to vector<256x64xbf16>
    %cst_104 = arith.constant dense<0.000000e+00> : vector<32x64xf32>
    %292 = tpu.matmul %289, %291, %cst_104 {dimension_numbers = #tpu.dot_dimension_numbers<[1], [0], [0], [1], [0, 0, 1, 1], [], []>} : vector<32x256xbf16>, vector<256x64xbf16>, vector<32x64xf32> -> vector<32x64xf32>
    %293 = arith.addf %252, %292 : vector<32x64xf32>
    %c1_105 = arith.constant 1 : index
    %c0_106 = arith.constant 0 : index
    %c0_107 = arith.constant 0 : index
    %294 = vector.load %arg12[%c1_105, %c0_106, %c0_107] : memref<2x1x64xf32, #tpu.memory_space<vmem>>, vector<1x1x64xf32>
    %295 = vector.shape_cast %294 : vector<1x1x64xf32> to vector<1x64xf32>
    %296 = vector.broadcast %295 : vector<1x64xf32> to vector<32x64xf32>
    %297 = arith.addf %293, %296 : vector<32x64xf32>
    %c0_108 = arith.constant 0 : index
    %c0_109 = arith.constant 0 : index
    %298 = vector.load %arg13[%c0_108, %c0_109] : memref<1x64xf32, #tpu.memory_space<vmem>>, vector<1x64xf32>
    %c0_110 = arith.constant 0 : index
    %c0_111 = arith.constant 0 : index
    %299 = vector.load %arg14[%c0_110, %c0_111] : memref<1x64xf32, #tpu.memory_space<vmem>>, vector<1x64xf32>
    %cst_112 = arith.constant dense<0.000000e+00> : vector<32xf32>
    %300 = vector.multi_reduction <add>, %297, %cst_112 [1] : vector<32x64xf32> to vector<32xf32>
    %301 = vector.shape_cast %300 : vector<32xf32> to vector<32x1xf32>
    %cst_113 = arith.constant 6.400000e+01 : f32
    %302 = vector.broadcast %cst_113 : f32 to vector<32x1xf32>
    %303 = arith.divf %301, %302 : vector<32x1xf32>
    %304 = vector.broadcast %303 : vector<32x1xf32> to vector<32x64xf32>
    %305 = arith.subf %297, %304 : vector<32x64xf32>
    %306 = arith.mulf %305, %305 : vector<32x64xf32>
    %cst_114 = arith.constant dense<0.000000e+00> : vector<32xf32>
    %307 = vector.multi_reduction <add>, %306, %cst_114 [1] : vector<32x64xf32> to vector<32xf32>
    %308 = vector.shape_cast %307 : vector<32xf32> to vector<32x1xf32>
    %cst_115 = arith.constant 6.400000e+01 : f32
    %309 = vector.broadcast %cst_115 : f32 to vector<32x1xf32>
    %310 = arith.divf %308, %309 : vector<32x1xf32>
    %311 = vector.broadcast %303 : vector<32x1xf32> to vector<32x64xf32>
    %312 = arith.subf %297, %311 : vector<32x64xf32>
    %cst_116 = arith.constant 9.99999974E-6 : f32
    %313 = vector.broadcast %cst_116 : f32 to vector<32x1xf32>
    %314 = arith.addf %310, %313 : vector<32x1xf32>
    %315 = math.rsqrt %314 : vector<32x1xf32>
    %316 = vector.broadcast %315 : vector<32x1xf32> to vector<32x64xf32>
    %317 = arith.mulf %312, %316 : vector<32x64xf32>
    %318 = vector.broadcast %298 : vector<1x64xf32> to vector<32x64xf32>
    %319 = arith.mulf %317, %318 : vector<32x64xf32>
    %320 = vector.broadcast %299 : vector<1x64xf32> to vector<32x64xf32>
    %321 = arith.addf %319, %320 : vector<32x64xf32>
    %322 = arith.truncf %321 : vector<32x64xf32> to vector<32x64xbf16>
    %c0_117 = arith.constant 0 : index
    %c0_118 = arith.constant 0 : index
    %323 = vector.load %arg15[%c0_117, %c0_118] : memref<64x128xbf16, #tpu.memory_space<vmem>>, vector<64x128xbf16>
    %cst_119 = arith.constant dense<0.000000e+00> : vector<32x128xf32>
    %324 = tpu.matmul %322, %323, %cst_119 {dimension_numbers = #tpu.dot_dimension_numbers<[1], [0], [0], [1], [0, 0, 1, 1], [], []>} : vector<32x64xbf16>, vector<64x128xbf16>, vector<32x128xf32> -> vector<32x128xf32>
    %c0_120 = arith.constant 0 : index
    %c0_121 = arith.constant 0 : index
    %325 = vector.load %arg16[%c0_120, %c0_121] : memref<1x128xf32, #tpu.memory_space<vmem>>, vector<1x128xf32>
    %326 = vector.broadcast %325 : vector<1x128xf32> to vector<32x128xf32>
    %327 = arith.addf %324, %326 : vector<32x128xf32>
    %328 = vector.shape_cast %327 : vector<32x128xf32> to vector<2x16x128xf32>
    %c0_122 = arith.constant 0 : index
    %c0_123 = arith.constant 0 : index
    %c0_124 = arith.constant 0 : index
    %329 = vector.load %arg17[%c0_122, %c0_123, %c0_124] : memref<2x16x128xf32, #tpu.memory_space<vmem>>, vector<2x16x128xf32>
    tpu.vector_store %arg17[%c0_122, %c0_123, %c0_124], %328 {strides = array<i32>} : memref<2x16x128xf32, #tpu.memory_space<vmem>>, vector<2x16x128xf32>,
    return
  }
  func.func @transform_0(%arg0: i32) -> (i32, i32, i32) {
    %c0_i32 = arith.constant 0 : i32
    %c0_i32_0 = arith.constant 0 : i32
    %c0_i32_1 = arith.constant 0 : i32
    return %arg0, %c0_i32, %c0_i32_0 : i32, i32, i32
  }
  func.func @transform_1(%arg0: i32) -> (i32, i32, i32) {
    %c0_i32 = arith.constant 0 : i32
    %c0_i32_0 = arith.constant 0 : i32
    %c0_i32_1 = arith.constant 0 : i32
    %c0_i32_2 = arith.constant 0 : i32
    return %c0_i32, %c0_i32_0, %c0_i32_1 : i32, i32, i32
  }
  func.func @transform_2(%arg0: i32) -> (i32, i32, i32) {
    %c0_i32 = arith.constant 0 : i32
    %c0_i32_0 = arith.constant 0 : i32
    %c0_i32_1 = arith.constant 0 : i32
    %c0_i32_2 = arith.constant 0 : i32
    return %c0_i32, %c0_i32_0, %c0_i32_1 : i32, i32, i32
  }
  func.func @transform_3(%arg0: i32) -> (i32, i32, i32) {
    %c0_i32 = arith.constant 0 : i32
    %c0_i32_0 = arith.constant 0 : i32
    %c0_i32_1 = arith.constant 0 : i32
    %c0_i32_2 = arith.constant 0 : i32
    return %c0_i32, %c0_i32_0, %c0_i32_1 : i32, i32, i32
  }
  func.func @transform_4(%arg0: i32) -> (i32, i32, i32) {
    %c0_i32 = arith.constant 0 : i32
    %c0_i32_0 = arith.constant 0 : i32
    %c0_i32_1 = arith.constant 0 : i32
    %c0_i32_2 = arith.constant 0 : i32
    return %c0_i32, %c0_i32_0, %c0_i32_1 : i32, i32, i32
  }
  func.func @transform_5(%arg0: i32) -> (i32, i32, i32) {
    %c0_i32 = arith.constant 0 : i32
    %c0_i32_0 = arith.constant 0 : i32
    %c0_i32_1 = arith.constant 0 : i32
    %c0_i32_2 = arith.constant 0 : i32
    return %c0_i32, %c0_i32_0, %c0_i32_1 : i32, i32, i32
  }
  func.func @transform_6(%arg0: i32) -> (i32, i32, i32) {
    %c0_i32 = arith.constant 0 : i32
    %c0_i32_0 = arith.constant 0 : i32
    %c0_i32_1 = arith.constant 0 : i32
    %c0_i32_2 = arith.constant 0 : i32
    return %c0_i32, %c0_i32_0, %c0_i32_1 : i32, i32, i32
  }
  func.func @transform_7(%arg0: i32) -> (i32, i32, i32) {
    %c0_i32 = arith.constant 0 : i32
    %c0_i32_0 = arith.constant 0 : i32
    %c0_i32_1 = arith.constant 0 : i32
    %c0_i32_2 = arith.constant 0 : i32
    return %c0_i32, %c0_i32_0, %c0_i32_1 : i32, i32, i32
  }
  func.func @transform_8(%arg0: i32) -> (i32, i32, i32) {
    %c0_i32 = arith.constant 0 : i32
    %c0_i32_0 = arith.constant 0 : i32
    %c0_i32_1 = arith.constant 0 : i32
    %c0_i32_2 = arith.constant 0 : i32
    return %c0_i32, %c0_i32_0, %c0_i32_1 : i32, i32, i32
  }
  func.func @transform_9(%arg0: i32) -> (i32, i32, i32) {
    %c0_i32 = arith.constant 0 : i32
    %c0_i32_0 = arith.constant 0 : i32
    %c0_i32_1 = arith.constant 0 : i32
    %c0_i32_2 = arith.constant 0 : i32
    return %c0_i32, %c0_i32_0, %c0_i32_1 : i32, i32, i32
  }
  func.func @transform_10(%arg0: i32) -> (i32, i32, i32) {
    %c0_i32 = arith.constant 0 : i32
    %c0_i32_0 = arith.constant 0 : i32
    %c0_i32_1 = arith.constant 0 : i32
    %c0_i32_2 = arith.constant 0 : i32
    return %c0_i32, %c0_i32_0, %c0_i32_1 : i32, i32, i32
  }
  func.func @transform_11(%arg0: i32) -> (i32, i32, i32) {
    %c0_i32 = arith.constant 0 : i32
    %c0_i32_0 = arith.constant 0 : i32
    %c0_i32_1 = arith.constant 0 : i32
    %c0_i32_2 = arith.constant 0 : i32
    return %c0_i32, %c0_i32_0, %c0_i32_1 : i32, i32, i32
  }
  func.func @transform_12(%arg0: i32) -> (i32, i32) {
    %c0_i32 = arith.constant 0 : i32
    %c0_i32_0 = arith.constant 0 : i32
    %c0_i32_1 = arith.constant 0 : i32
    return %c0_i32, %c0_i32_0 : i32, i32
  }
  func.func @transform_13(%arg0: i32) -> (i32, i32) {
    %c0_i32 = arith.constant 0 : i32
    %c0_i32_0 = arith.constant 0 : i32
    %c0_i32_1 = arith.constant 0 : i32
    return %c0_i32, %c0_i32_0 : i32, i32
  }
  func.func @transform_14(%arg0: i32) -> (i32, i32) {
    %c0_i32 = arith.constant 0 : i32
    %c0_i32_0 = arith.constant 0 : i32
    %c0_i32_1 = arith.constant 0 : i32
    return %c0_i32, %c0_i32_0 : i32, i32
  }
  func.func @transform_15(%arg0: i32) -> (i32, i32) {
    %c0_i32 = arith.constant 0 : i32
    %c0_i32_0 = arith.constant 0 : i32
    %c0_i32_1 = arith.constant 0 : i32
    return %c0_i32, %c0_i32_0 : i32, i32
  }
  func.func @transform_16(%arg0: i32) -> (i32, i32, i32) {
    %c0_i32 = arith.constant 0 : i32
    %c0_i32_0 = arith.constant 0 : i32
    %c0_i32_1 = arith.constant 0 : i32
    return %arg0, %c0_i32, %c0_i32_0 : i32, i32, i32
  }
}

</mosaic_0001>

<llo_original>
// kernel: nanogpt_forward.1
$region0: #{nanogpt_forward.1}
  #allocation0 [shape = 'u32[]', space=smem, size = 0x4, offset = 0x4, fixed_abs, tag = 'smem constant byte address 0x4 - core index']
  #allocation1 [shape = 'u32[72,128]{1,0:T(1,128)}', space=vmem, size = 0x9000, scoped, tag = 'internal scratch']
  %s0 = inlined_call_operand.vmem [shape: f32[2,16,64], index: 0, kind: input, shape index: {}]
  %s1 = inlined_call_operand.vmem [shape: f32[2,1,64], index: 1, kind: input, shape index: {}]
  %s2 = inlined_call_operand.vmem [shape: f32[2,1,64], index: 2, kind: input, shape index: {}]
  %s3 = inlined_call_operand.vmem [shape: bf16[2,64,192], index: 3, kind: input, shape index: {}]
  %s4 = inlined_call_operand.vmem [shape: bf16[2,64,64], index: 4, kind: input, shape index: {}]
  %s5 = inlined_call_operand.vmem [shape: f32[2,1,64], index: 5, kind: input, shape index: {}]
  %s6 = inlined_call_operand.vmem [shape: f32[2,1,64], index: 6, kind: input, shape index: {}]
  %s7 = inlined_call_operand.vmem [shape: f32[2,1,64], index: 7, kind: input, shape index: {}]
  %s8 = inlined_call_operand.vmem [shape: bf16[2,64,256], index: 8, kind: input, shape index: {}]
  %s9 = inlined_call_operand.vmem [shape: f32[2,1,256], index: 9, kind: input, shape index: {}]
  %s10 = inlined_call_operand.vmem [shape: bf16[2,256,64], index: 10, kind: input, shape index: {}]
  %s11 = inlined_call_operand.vmem [shape: f32[2,1,64], index: 11, kind: input, shape index: {}]
  %s12 = inlined_call_operand.vmem [shape: f32[1,64], index: 12, kind: input, shape index: {}]
  %s13 = inlined_call_operand.vmem [shape: f32[1,64], index: 13, kind: input, shape index: {}]
  %s14 = inlined_call_operand.vmem [shape: bf16[64,128], index: 14, kind: input, shape index: {}]
  %s15 = inlined_call_operand.vmem [shape: f32[1,128], index: 15, kind: input, shape index: {}]
  %s16 = inlined_call_operand.hbm [shape: f32[2,16,128], index: 16, kind: output, shape index: {}]
  %s17 = sld [smem:[#allocation0]]
  $region74: #{nanogpt_forward.1} parent=0
    _
  %s19 = ssub.s32 1, %s17
  %s20 = scalar_select 0, %s19, %s17
  $region1: #{nanogpt_forward.1} parent=0
    #allocation2 [shape = 'u8[16384]{0}', space=vmem, size = 0x4000, scoped, tag = 'output window, operand 0, single buffered']
    #allocation3 [shape = 's32[1]{0}', space=sflag, size = 0x4, scoped, tag = 'scoped memory for nanogpt_forward.1']
    %21 = vsyncpa [#allocation3], 0
    // Predicated region
    $region2: #{nanogpt_forward.1} parent=1 // pred_check
      _
    $region3: #{nanogpt_forward.1} parent=1 // pred_check_branch
      %23 = sbr.rel (0) target = $region5
    $region4: #{nanogpt_forward.1} parent=1 // pred_region
      _
    $region5: #{nanogpt_forward.1} parent=1 // pred_fallthru
      _
    // Predicated region
    $region6: #{nanogpt_forward.1} parent=1 // pred_check
      _
    $region7: #{nanogpt_forward.1} parent=1 // pred_check_branch
      %25 = sbr.rel (0) target = $region9
    $region8: #{nanogpt_forward.1} parent=1 // pred_region
      _
    $region9: #{nanogpt_forward.1} parent=1 // pred_fallthru
      _
    // Predicated region
    $region10: #{nanogpt_forward.1} parent=1 // pred_check
      _
    $region11: #{nanogpt_forward.1} parent=1 // pred_check_branch
      %27 = sbr.rel (0) target = $region13
    $region12: #{nanogpt_forward.1} parent=1 // pred_region
      _
    $region13: #{nanogpt_forward.1} parent=1 // pred_fallthru
      _
    // Predicated region
    $region14: #{nanogpt_forward.1} parent=1 // pred_check
      _
    $region15: #{nanogpt_forward.1} parent=1 // pred_check_branch
      %29 = sbr.rel (0) target = $region17
    $region16: #{nanogpt_forward.1} parent=1 // pred_region
      _
    $region17: #{nanogpt_forward.1} parent=1 // pred_fallthru
      _
    // Predicated region
    $region18: #{nanogpt_forward.1} parent=1 // pred_check
      _
    $region19: #{nanogpt_forward.1} parent=1 // pred_check_branch
      %31 = sbr.rel (0) target = $region21
    $region20: #{nanogpt_forward.1} parent=1 // pred_region
      _
    $region21: #{nanogpt_forward.1} parent=1 // pred_fallthru
      _
    // Predicated region
    $region22: #{nanogpt_forward.1} parent=1 // pred_check
      _
    $region23: #{nanogpt_forward.1} parent=1 // pred_check_branch
      %33 = sbr.rel (0) target = $region25
    $region24: #{nanogpt_forward.1} parent=1 // pred_region
      _
    $region25: #{nanogpt_forward.1} parent=1 // pred_fallthru
      _
    // Predicated region
    $region26: #{nanogpt_forward.1} parent=1 // pred_check
      _
    $region27: #{nanogpt_forward.1} parent=1 // pred_check_branch
      %35 = sbr.rel (0) target = $region29
    $region28: #{nanogpt_forward.1} parent=1 // pred_region
      _
    $region29: #{nanogpt_forward.1} parent=1 // pred_fallthru
      _
    // Predicated region
    $region30: #{nanogpt_forward.1} parent=1 // pred_check
      _
    $region31: #{nanogpt_forward.1} parent=1 // pred_check_branch
      %37 = sbr.rel (0) target = $region33
    $region32: #{nanogpt_forward.1} parent=1 // pred_region
      _
    $region33: #{nanogpt_forward.1} parent=1 // pred_fallthru
      _
    // Predicated region
    $region34: #{nanogpt_forward.1} parent=1 // pred_check
      _
    $region35: #{nanogpt_forward.1} parent=1 // pred_check_branch
      %39 = sbr.rel (0) target = $region37
    $region36: #{nanogpt_forward.1} parent=1 // pred_region
      _
    $region37: #{nanogpt_forward.1} parent=1 // pred_fallthru
      _
    // Predicated region
    $region38: #{nanogpt_forward.1} parent=1 // pred_check
      _
    $region39: #{nanogpt_forward.1} parent=1 // pred_check_branch
      %41 = sbr.rel (0) target = $region41
    $region40: #{nanogpt_forward.1} parent=1 // pred_region
      _
    $region41: #{nanogpt_forward.1} parent=1 // pred_fallthru
      _
    // Predicated region
    $region42: #{nanogpt_forward.1} parent=1 // pred_check
      _
    $region43: #{nanogpt_forward.1} parent=1 // pred_check_branch
      %43 = sbr.rel (0) target = $region45
    $region44: #{nanogpt_forward.1} parent=1 // pred_region
      _
    $region45: #{nanogpt_forward.1} parent=1 // pred_fallthru
      _
    // Predicated region
    $region46: #{nanogpt_forward.1} parent=1 // pred_check
      _
    $region47: #{nanogpt_forward.1} parent=1 // pred_check_branch
      %45 = sbr.rel (0) target = $region49
    $region48: #{nanogpt_forward.1} parent=1 // pred_region
      _
    $region49: #{nanogpt_forward.1} parent=1 // pred_fallthru
      _
    // Predicated region
    $region50: #{nanogpt_forward.1} parent=1 // pred_check
      _
    $region51: #{nanogpt_forward.1} parent=1 // pred_check_branch
      %47 = sbr.rel (0) target = $region53
    $region52: #{nanogpt_forward.1} parent=1 // pred_region
      _
    $region53: #{nanogpt_forward.1} parent=1 // pred_fallthru
      _
    // Predicated region
    $region54: #{nanogpt_forward.1} parent=1 // pred_check
      _
    $region55: #{nanogpt_forward.1} parent=1 // pred_check_branch
      %49 = sbr.rel (0) target = $region57
    $region56: #{nanogpt_forward.1} parent=1 // pred_region
      _
    $region57: #{nanogpt_forward.1} parent=1 // pred_fallthru
      _
    // Predicated region
    $region58: #{nanogpt_forward.1} parent=1 // pred_check
      _
    $region59: #{nanogpt_forward.1} parent=1 // pred_check_branch
      %51 = sbr.rel (0) target = $region61
    $region60: #{nanogpt_forward.1} parent=1 // pred_region
      _
    $region61: #{nanogpt_forward.1} parent=1 // pred_fallthru
      _
    // Predicated region
    $region62: #{nanogpt_forward.1} parent=1 // pred_check
      _
    $region63: #{nanogpt_forward.1} parent=1 // pred_check_branch
      %53 = sbr.rel (0) target = $region65
    $region64: #{nanogpt_forward.1} parent=1 // pred_region
      _
    $region65: #{nanogpt_forward.1} parent=1 // pred_fallthru
      _
    %v55 = vld [vmem:[%s0] sm:$0xff]
    %v56 = vld [vmem:[%s0 + $0x8] sm:$0xff]
    %v57 = vld [vmem:[%s0 + $0x10] sm:$0xff]
    %v58 = vld [vmem:[%s0 + $0x18] sm:$0xff]
    %v59 = vlaneseq
    %v60 = vshrl.u32 %v59, 7
    %v61 = vadd.s32 %v60, 8
    %v62 = vlaneseq
    %v63 = vand.u32 %v62, 127
    %vm64 = vcmp.le.s32.totalorder %v63, %v60
    %vm65 = vcmp.le.s32.totalorder %v63, %v61
    %v66 = vld [vmem:[%s1] sm:$0x1]
    %v67 = vld [vmem:[%s2] sm:$0x1]
    %vm68 = vcmask 523264
    %v69 = vsel %vm68, %v55, 0.0
    %70 = vadd.xlane.f32.xlu0 %v69
    %v71 = vpop.xlane.xlu0 %70
    %v72 = vsel %vm68, %v56, 0.0
    %73 = vadd.xlane.f32.xlu0 %v72
    %v74 = vpop.xlane.xlu0 %73
    %v75 = vsel %vm68, %v57, 0.0
    %76 = vadd.xlane.f32.xlu0 %v75
    %v77 = vpop.xlane.xlu0 %76
    %v78 = vsel %vm68, %v58, 0.0
    %79 = vadd.xlane.f32.xlu0 %v78
    %v80 = vpop.xlane.xlu0 %79
    %v81 = vrcp.pop 64.0
    %v82 = vmul.f32 64.0, %v81
    %v83 = vsub.f32 1.0, %v82
    %v84 = vmul.f32 %v81, %v83
    %v85 = vadd.f32 %v81, %v84
    %vm86 = vweird.f32 %v81
    %v87 = vsel %vm86, %v81, %v85
    %v88 = vmul.f32 %v71, %v87
    %v89 = vmul.f32 %v74, %v87
    %v90 = vmul.f32 %v77, %v87
    %v91 = vmul.f32 %v80, %v87
    %v92 = vsub.f32 %v55, %v88
    %v93 = vsub.f32 %v56, %v89
    %v94 = vsub.f32 %v57, %v90
    %v95 = vsub.f32 %v58, %v91
    %v96 = vmul.f32 %v92, %v92
    %v97 = vmul.f32 %v93, %v93
    %v98 = vmul.f32 %v94, %v94
    %v99 = vmul.f32 %v95, %v95
    %v100 = vsel %vm68, %v96, 0.0
    %101 = vadd.xlane.f32.xlu0 %v100
    %v102 = vpop.xlane.xlu0 %101
    %v103 = vsel %vm68, %v97, 0.0
    %104 = vadd.xlane.f32.xlu0 %v103
    %v105 = vpop.xlane.xlu0 %104
    %v106 = vsel %vm68, %v98, 0.0
    %107 = vadd.xlane.f32.xlu0 %v106
    %v108 = vpop.xlane.xlu0 %107
    %v109 = vsel %vm68, %v99, 0.0
    %110 = vadd.xlane.f32.xlu0 %v109
    %v111 = vpop.xlane.xlu0 %110
    %v112 = vmul.f32 %v102, %v87
    %v113 = vmul.f32 %v105, %v87
    %v114 = vmul.f32 %v108, %v87
    %v115 = vmul.f32 %v111, %v87
    %v116 = vadd.f32 %v112, 1e-05
    %v117 = vadd.f32 %v113, 1e-05
    %v118 = vadd.f32 %v114, 1e-05
    %v119 = vadd.f32 %v115, 1e-05
    %v120 = vrsqrt.pop %v116
    %v121 = vmul.f32 %v120, %v116
    %v122 = vmul.f32 %v121, %v120
    %v123 = vmul.f32 0.5, %v122
    %v124 = vsub.f32 1.5, %v123
    %v125 = vmul.f32 %v120, %v124
    %vm126 = vweird.f32 %v116
    %vm127 = vweird.f32 %v120
    %vm128 = vmor %vm126, %vm127
    %v129 = vsel %vm128, %v120, %v125
    %v130 = vrsqrt.pop %v117
    %v131 = vmul.f32 %v130, %v117
    %v132 = vmul.f32 %v131, %v130
    %v133 = vmul.f32 0.5, %v132
    %v134 = vsub.f32 1.5, %v133
    %v135 = vmul.f32 %v130, %v134
    %vm136 = vweird.f32 %v117
    %vm137 = vweird.f32 %v130
    %vm138 = vmor %vm136, %vm137
    %v139 = vsel %vm138, %v130, %v135
    %v140 = vrsqrt.pop %v118
    %v141 = vmul.f32 %v140, %v118
    %v142 = vmul.f32 %v141, %v140
    %v143 = vmul.f32 0.5, %v142
    %v144 = vsub.f32 1.5, %v143
    %v145 = vmul.f32 %v140, %v144
    %vm146 = vweird.f32 %v118
    %vm147 = vweird.f32 %v140
    %vm148 = vmor %vm146, %vm147
    %v149 = vsel %vm148, %v140, %v145
    %v150 = vrsqrt.pop %v119
    %v151 = vmul.f32 %v150, %v119
    %v152 = vmul.f32 %v151, %v150
    %v153 = vmul.f32 0.5, %v152
    %v154 = vsub.f32 1.5, %v153
    %v155 = vmul.f32 %v150, %v154
    %vm156 = vweird.f32 %v119
    %vm157 = vweird.f32 %v150
    %vm158 = vmor %vm156, %vm157
    %v159 = vsel %vm158, %v150, %v155
    %v160 = vmul.f32 %v92, %v129
    %v161 = vmul.f32 %v93, %v139
    %v162 = vmul.f32 %v94, %v149
    %v163 = vmul.f32 %v95, %v159
    %v165 = vperm.slane %v66, 0
    %v167 = vmul.f32 %v160, %v165
    %v168 = vmul.f32 %v161, %v165
    %v169 = vmul.f32 %v162, %v165
    %v170 = vmul.f32 %v163, %v165
    %v172 = vperm.slane %v67, 0
    %v174 = vadd.f32 %v167, %v172
    %v175 = vadd.f32 %v168, %v172
    %v176 = vadd.f32 %v169, %v172
    %v177 = vadd.f32 %v170, %v172
    %v178 = vpack.c.bf16 %v175, %v174
    %v179 = vpack.c.bf16 %v177, %v176
    %v180 = vld [vmem:[%s3] sm:$0xff]
    %v181 = vld [vmem:[%s3 + $0x8] sm:$0xff]
    %v182 = vld [vmem:[%s3 + $0x10] sm:$0xff]
    %v183 = vld [vmem:[%s3 + $0x18] sm:$0xff]
    %v184 = vld [vmem:[%s3 + $0x20] sm:$0xff]
    %v185 = vld [vmem:[%s3 + $0x28] sm:$0xff]
    %v186 = vld [vmem:[%s3 + $0x30] sm:$0xff]
    %v187 = vld [vmem:[%s3 + $0x38] sm:$0xff]
    %v196 = vunpack.c.l.b16 %v180
    %v197 = vunpack.c.h.b16 %v180
    %v198 = vunpack.c.l.b16 %v181
    %v199 = vunpack.c.h.b16 %v181
    %v200 = vunpack.c.l.b16 %v182
    %v201 = vunpack.c.h.b16 %v182
    %v202 = vunpack.c.l.b16 %v183
    %v203 = vunpack.c.h.b16 %v183
    %v204 = vunpack.c.l.b16 %v184
    %v205 = vunpack.c.h.b16 %v184
    %v206 = vunpack.c.l.b16 %v185
    %v207 = vunpack.c.h.b16 %v185
    %v208 = vunpack.c.l.b16 %v186
    %v209 = vunpack.c.h.b16 %v186
    %v210 = vunpack.c.l.b16 %v187
    %v211 = vunpack.c.h.b16 %v187
    %v212 = vpack.c.b16 %v198, %v196
    %v213 = vpack.c.b16 %v199, %v197
    %v214 = vpack.c.b16 %v202, %v200
    %v215 = vpack.c.b16 %v203, %v201
    %v216 = vpack.c.b16 %v206, %v204
    %v217 = vpack.c.b16 %v207, %v205
    %v218 = vpack.c.b16 %v210, %v208
    %v219 = vpack.c.b16 %v211, %v209
    %v229 = vsel %vm68, %v178, 0
    %v232 = vsel %vm68, %v179, 0
    %234 = vmatpush.bf16.msra.mxu0 0
    %235 = vmatpush.bf16.msra.mxu0 0
    %236 = vmatpush.bf16.msra.mxu0 0
    %237 = vmatpush.bf16.msra.mxu0 0
    %238 = vmatpush.bf16.msra.mxu0 %v218
    %239 = vmatpush.bf16.msra.mxu0 %v216
    %240 = vmatpush.bf16.msra.mxu0 %v214
    %241 = vmatpush.bf16.msra.mxu0 %v212
    %242 = vmatmul.bf16.gmra.mxu0 %v229
    %v243 = vpop.f32.mrf.mxu0
    %v244 = vadd.f32 0.0, %v243
    %v245 = vpop.f32.mrf.mxu0
    %v246 = vadd.f32 0.0, %v245
    %247 = vmatmul.bf16.gmra.mxu0 %v232
    %v248 = vpop.f32.mrf.mxu0
    %v249 = vadd.f32 0.0, %v248
    %v250 = vpop.f32.mrf.mxu0
    %v251 = vadd.f32 0.0, %v250
    %252 = vdwg.mxu0
    %253 = vmatpush.bf16.msra.mxu0 0
    %254 = vmatpush.bf16.msra.mxu0 0
    %255 = vmatpush.bf16.msra.mxu0 0
    %256 = vmatpush.bf16.msra.mxu0 0
    %257 = vmatpush.bf16.msra.mxu0 %v219
    %258 = vmatpush.bf16.msra.mxu0 %v217
    %259 = vmatpush.bf16.msra.mxu0 %v215
    %260 = vmatpush.bf16.msra.mxu0 %v213
    %261 = vmatmul.bf16.gmra.mxu0 %v229
    %v262 = vpop.f32.mrf.mxu0
    %v263 = vadd.f32 0.0, %v262
    %v264 = vpop.f32.mrf.mxu0
    %v265 = vadd.f32 0.0, %v264
    %266 = vmatmul.bf16.gmra.mxu0 %v232
    %v267 = vpop.f32.mrf.mxu0
    %v268 = vadd.f32 0.0, %v267
    %v269 = vpop.f32.mrf.mxu0
    %v270 = vadd.f32 0.0, %v269
    %271 = vdwg.mxu0
    %v272 = vpack.c.bf16 %v263, %v244
    %v273 = vpack.c.bf16 %v265, %v246
    %v274 = vpack.c.bf16 %v268, %v249
    %v275 = vpack.c.bf16 %v270, %v251
    %280 = vrot.lane.b32.xlu0 %v272, 112
    %v281 = vpop.permute.xlu0 %280
    %282 = vrot.lane.b32.xlu0 %v273, 112
    %v283 = vpop.permute.xlu0 %282
    %284 = vrot.lane.b32.xlu0 %v274, 112
    %v285 = vpop.permute.xlu0 %284
    %286 = vrot.lane.b32.xlu0 %v275, 112
    %v287 = vpop.permute.xlu0 %286
    %288 = vrot.lane.b32.xlu0 %v272, 96
    %v289 = vpop.permute.xlu0 %288
    %290 = vrot.lane.b32.xlu0 %v273, 96
    %v291 = vpop.permute.xlu0 %290
    %292 = vrot.lane.b32.xlu0 %v274, 96
    %v293 = vpop.permute.xlu0 %292
    %294 = vrot.lane.b32.xlu0 %v275, 96
    %v295 = vpop.permute.xlu0 %294
    %296 = vrot.lane.b32.xlu0 %v272, 80
    %v297 = vpop.permute.xlu0 %296
    %298 = vrot.lane.b32.xlu0 %v273, 80
    %v299 = vpop.permute.xlu0 %298
    %300 = vrot.lane.b32.xlu0 %v274, 80
    %v301 = vpop.permute.xlu0 %300
    %302 = vrot.lane.b32.xlu0 %v275, 80
    %v303 = vpop.permute.xlu0 %302
    %v304 = vrot.slane %v272, 4
    %v305 = vrot.slane %v273, 4
    %v306 = vrot.slane %v274, 4
    %v307 = vrot.slane %v275, 4
    %v308 = vrot.slane %v281, 4
    %v309 = vrot.slane %v283, 4
    %v310 = vrot.slane %v285, 4
    %v311 = vrot.slane %v287, 4
    %v312 = vrot.slane %v289, 4
    %v313 = vrot.slane %v291, 4
    %v314 = vrot.slane %v293, 4
    %v315 = vrot.slane %v295, 4
    %v316 = vrot.slane %v297, 4
    %v317 = vrot.slane %v299, 4
    %v318 = vrot.slane %v301, 4
    %v319 = vrot.slane %v303, 4
    %v320 = vunpack.c.l.b16 %v272
    %v321 = vunpack.c.l.b16 %v273
    %v322 = vpack.c.b16 %v321, %v320
    %323 = vrot.lane.b32.xlu0 %v322, 64
    %v324 = vpop.permute.xlu0 %323
    %vm325 = vcmask 130048
    %v327 = vsel %vm325, %v322, 0
    %v330 = vsel %vm325, %v324, 0
    %332 = vmatpush.bf16.xpose.msra.mxu0 0
    %333 = vmatpush.bf16.xpose.msra.mxu0 0
    %334 = vmatpush.bf16.xpose.msra.mxu0 0
    %335 = vmatpush.bf16.xpose.msra.mxu0 0
    %336 = vmatpush.bf16.xpose.msra.mxu0 0
    %337 = vmatpush.bf16.xpose.msra.mxu0 0
    %338 = vmatpush.bf16.xpose.msra.mxu0 0
    %339 = vmatpush.bf16.xpose.msra.mxu0 %v330
    %340 = vmatmul.bf16.gmra.mxu0 %v327
    %v341 = vpop.f32.mrf.mxu0
    %v342 = vadd.f32 0.0, %v341
    %v343 = vpop.f32.mrf.mxu0
    %v344 = vadd.f32 0.0, %v343
    %345 = vdwg.mxu0
    %v346 = vunpack.c.l.b16 %v281
    %v347 = vunpack.c.l.b16 %v283
    %v348 = vpack.c.b16 %v347, %v346
    %349 = vrot.lane.b32.xlu0 %v348, 64
    %v350 = vpop.permute.xlu0 %349
    %v352 = vsel %vm325, %v348, 0
    %v355 = vsel %vm325, %v350, 0
    %357 = vmatpush.bf16.xpose.msra.mxu0 0
    %358 = vmatpush.bf16.xpose.msra.mxu0 0
    %359 = vmatpush.bf16.xpose.msra.mxu0 0
    %360 = vmatpush.bf16.xpose.msra.mxu0 0
    %361 = vmatpush.bf16.xpose.msra.mxu0 0
    %362 = vmatpush.bf16.xpose.msra.mxu0 0
    %363 = vmatpush.bf16.xpose.msra.mxu0 0
    %364 = vmatpush.bf16.xpose.msra.mxu0 %v355
    %365 = vmatmul.bf16.gmra.mxu0 %v352
    %v366 = vpop.f32.mrf.mxu0
    %v367 = vadd.f32 0.0, %v366
    %v368 = vpop.f32.mrf.mxu0
    %v369 = vadd.f32 0.0, %v368
    %370 = vdwg.mxu0
    %v371 = vunpack.c.l.b16 %v289
    %v372 = vunpack.c.l.b16 %v291
    %v373 = vpack.c.b16 %v372, %v371
    %374 = vrot.lane.b32.xlu0 %v373, 64
    %v375 = vpop.permute.xlu0 %374
    %v377 = vsel %vm325, %v373, 0
    %v380 = vsel %vm325, %v375, 0
    %382 = vmatpush.bf16.xpose.msra.mxu0 0
    %383 = vmatpush.bf16.xpose.msra.mxu0 0
    %384 = vmatpush.bf16.xpose.msra.mxu0 0
    %385 = vmatpush.bf16.xpose.msra.mxu0 0
    %386 = vmatpush.bf16.xpose.msra.mxu0 0
    %387 = vmatpush.bf16.xpose.msra.mxu0 0
    %388 = vmatpush.bf16.xpose.msra.mxu0 0
    %389 = vmatpush.bf16.xpose.msra.mxu0 %v380
    %390 = vmatmul.bf16.gmra.mxu0 %v377
    %v391 = vpop.f32.mrf.mxu0
    %v392 = vadd.f32 0.0, %v391
    %v393 = vpop.f32.mrf.mxu0
    %v394 = vadd.f32 0.0, %v393
    %395 = vdwg.mxu0
    %v396 = vunpack.c.l.b16 %v297
    %v397 = vunpack.c.l.b16 %v299
    %v398 = vpack.c.b16 %v397, %v396
    %399 = vrot.lane.b32.xlu0 %v398, 64
    %v400 = vpop.permute.xlu0 %399
    %v402 = vsel %vm325, %v398, 0
    %v405 = vsel %vm325, %v400, 0
    %407 = vmatpush.bf16.xpose.msra.mxu0 0
    %408 = vmatpush.bf16.xpose.msra.mxu0 0
    %409 = vmatpush.bf16.xpose.msra.mxu0 0
    %410 = vmatpush.bf16.xpose.msra.mxu0 0
    %411 = vmatpush.bf16.xpose.msra.mxu0 0
    %412 = vmatpush.bf16.xpose.msra.mxu0 0
    %413 = vmatpush.bf16.xpose.msra.mxu0 0
    %414 = vmatpush.bf16.xpose.msra.mxu0 %v405
    %415 = vmatmul.bf16.gmra.mxu0 %v402
    %v416 = vpop.f32.mrf.mxu0
    %v417 = vadd.f32 0.0, %v416
    %v418 = vpop.f32.mrf.mxu0
    %v419 = vadd.f32 0.0, %v418
    %420 = vdwg.mxu0
    %v421 = vunpack.c.l.b16 %v274
    %v422 = vunpack.c.l.b16 %v275
    %v423 = vpack.c.b16 %v422, %v421
    %424 = vrot.lane.b32.xlu0 %v423, 64
    %v425 = vpop.permute.xlu0 %424
    %v427 = vsel %vm325, %v423, 0
    %v430 = vsel %vm325, %v425, 0
    %432 = vmatpush.bf16.xpose.msra.mxu0 0
    %433 = vmatpush.bf16.xpose.msra.mxu0 0
    %434 = vmatpush.bf16.xpose.msra.mxu0 0
    %435 = vmatpush.bf16.xpose.msra.mxu0 0
    %436 = vmatpush.bf16.xpose.msra.mxu0 0
    %437 = vmatpush.bf16.xpose.msra.mxu0 0
    %438 = vmatpush.bf16.xpose.msra.mxu0 0
    %439 = vmatpush.bf16.xpose.msra.mxu0 %v430
    %440 = vmatmul.bf16.gmra.mxu0 %v427
    %v441 = vpop.f32.mrf.mxu0
    %v442 = vadd.f32 0.0, %v441
    %v443 = vpop.f32.mrf.mxu0
    %v444 = vadd.f32 0.0, %v443
    %445 = vdwg.mxu0
    %v446 = vunpack.c.l.b16 %v285
    %v447 = vunpack.c.l.b16 %v287
    %v448 = vpack.c.b16 %v447, %v446
    %449 = vrot.lane.b32.xlu0 %v448, 64
    %v450 = vpop.permute.xlu0 %449
    %v452 = vsel %vm325, %v448, 0
    %v455 = vsel %vm325, %v450, 0
    %457 = vmatpush.bf16.xpose.msra.mxu0 0
    %458 = vmatpush.bf16.xpose.msra.mxu0 0
    %459 = vmatpush.bf16.xpose.msra.mxu0 0
    %460 = vmatpush.bf16.xpose.msra.mxu0 0
    %461 = vmatpush.bf16.xpose.msra.mxu0 0
    %462 = vmatpush.bf16.xpose.msra.mxu0 0
    %463 = vmatpush.bf16.xpose.msra.mxu0 0
    %464 = vmatpush.bf16.xpose.msra.mxu0 %v455
    %465 = vmatmul.bf16.gmra.mxu0 %v452
    %v466 = vpop.f32.mrf.mxu0
    %v467 = vadd.f32 0.0, %v466
    %v468 = vpop.f32.mrf.mxu0
    %v469 = vadd.f32 0.0, %v468
    %470 = vdwg.mxu0
    %v471 = vunpack.c.l.b16 %v293
    %v472 = vunpack.c.l.b16 %v295
    %v473 = vpack.c.b16 %v472, %v471
    %474 = vrot.lane.b32.xlu0 %v473, 64
    %v475 = vpop.permute.xlu0 %474
    %v477 = vsel %vm325, %v473, 0
    %v480 = vsel %vm325, %v475, 0
    %482 = vmatpush.bf16.xpose.msra.mxu0 0
    %483 = vmatpush.bf16.xpose.msra.mxu0 0
    %484 = vmatpush.bf16.xpose.msra.mxu0 0
    %485 = vmatpush.bf16.xpose.msra.mxu0 0
    %486 = vmatpush.bf16.xpose.msra.mxu0 0
    %487 = vmatpush.bf16.xpose.msra.mxu0 0
    %488 = vmatpush.bf16.xpose.msra.mxu0 0
    %489 = vmatpush.bf16.xpose.msra.mxu0 %v480
    %490 = vmatmul.bf16.gmra.mxu0 %v477
    %v491 = vpop.f32.mrf.mxu0
    %v492 = vadd.f32 0.0, %v491
    %v493 = vpop.f32.mrf.mxu0
    %v494 = vadd.f32 0.0, %v493
    %495 = vdwg.mxu0
    %v496 = vunpack.c.l.b16 %v301
    %v497 = vunpack.c.l.b16 %v303
    %v498 = vpack.c.b16 %v497, %v496
    %499 = vrot.lane.b32.xlu0 %v498, 64
    %v500 = vpop.permute.xlu0 %499
    %v502 = vsel %vm325, %v498, 0
    %v505 = vsel %vm325, %v500, 0
    %507 = vmatpush.bf16.xpose.msra.mxu0 0
    %508 = vmatpush.bf16.xpose.msra.mxu0 0
    %509 = vmatpush.bf16.xpose.msra.mxu0 0
    %510 = vmatpush.bf16.xpose.msra.mxu0 0
    %511 = vmatpush.bf16.xpose.msra.mxu0 0
    %512 = vmatpush.bf16.xpose.msra.mxu0 0
    %513 = vmatpush.bf16.xpose.msra.mxu0 0
    %514 = vmatpush.bf16.xpose.msra.mxu0 %v505
    %515 = vmatmul.bf16.gmra.mxu0 %v502
    %v516 = vpop.f32.mrf.mxu0
    %v517 = vadd.f32 0.0, %v516
    %v518 = vpop.f32.mrf.mxu0
    %v519 = vadd.f32 0.0, %v518
    %520 = vdwg.mxu0
    %v521 = vmul.f32 %v342, 0.125
    %v522 = vmul.f32 %v344, 0.125
    %v523 = vmul.f32 %v367, 0.125
    %v524 = vmul.f32 %v369, 0.125
    %v525 = vmul.f32 %v392, 0.125
    %v526 = vmul.f32 %v394, 0.125
    %v527 = vmul.f32 %v417, 0.125
    %v528 = vmul.f32 %v419, 0.125
    %v529 = vmul.f32 %v442, 0.125
    %v530 = vmul.f32 %v444, 0.125
    %v531 = vmul.f32 %v467, 0.125
    %v532 = vmul.f32 %v469, 0.125
    %v533 = vmul.f32 %v492, 0.125
    %v534 = vmul.f32 %v494, 0.125
    %v535 = vmul.f32 %v517, 0.125
    %v536 = vmul.f32 %v519, 0.125
    %v537 = vsel %vm64, 1, 0
    %v538 = vsel %vm65, 1, 0
    %vm539 = vcmp.eq.s32.totalorder %v537, 1
    %vm540 = vcmp.eq.s32.totalorder %v538, 1
    %v541 = vsel %vm539, %v521, -1e+30
    %v542 = vsel %vm540, %v522, -1e+30
    %v543 = vsel %vm539, %v523, -1e+30
    %v544 = vsel %vm540, %v524, -1e+30
    %v545 = vsel %vm539, %v525, -1e+30
    %v546 = vsel %vm540, %v526, -1e+30
    %v547 = vsel %vm539, %v527, -1e+30
    %v548 = vsel %vm540, %v528, -1e+30
    %v549 = vsel %vm539, %v529, -1e+30
    %v550 = vsel %vm540, %v530, -1e+30
    %v551 = vsel %vm539, %v531, -1e+30
    %v552 = vsel %vm540, %v532, -1e+30
    %v553 = vsel %vm539, %v533, -1e+30
    %v554 = vsel %vm540, %v534, -1e+30
    %v555 = vsel %vm539, %v535, -1e+30
    %v556 = vsel %vm540, %v536, -1e+30
    %v557 = vsel %vm325, %v541, -inf
    %558 = vmax.xlane.f32.xlu0 %v557
    %v559 = vpop.xlane.xlu0 %558
    %v560 = vsel %vm325, %v542, -inf
    %561 = vmax.xlane.f32.xlu0 %v560
    %v562 = vpop.xlane.xlu0 %561
    %v563 = vsel %vm325, %v543, -inf
    %564 = vmax.xlane.f32.xlu0 %v563
    %v565 = vpop.xlane.xlu0 %564
    %v566 = vsel %vm325, %v544, -inf
    %567 = vmax.xlane.f32.xlu0 %v566
    %v568 = vpop.xlane.xlu0 %567
    %v569 = vsel %vm325, %v545, -inf
    %570 = vmax.xlane.f32.xlu0 %v569
    %v571 = vpop.xlane.xlu0 %570
    %v572 = vsel %vm325, %v546, -inf
    %573 = vmax.xlane.f32.xlu0 %v572
    %v574 = vpop.xlane.xlu0 %573
    %v575 = vsel %vm325, %v547, -inf
    %576 = vmax.xlane.f32.xlu0 %v575
    %v577 = vpop.xlane.xlu0 %576
    %v578 = vsel %vm325, %v548, -inf
    %579 = vmax.xlane.f32.xlu0 %v578
    %v580 = vpop.xlane.xlu0 %579
    %v581 = vsel %vm325, %v549, -inf
    %582 = vmax.xlane.f32.xlu0 %v581
    %v583 = vpop.xlane.xlu0 %582
    %v584 = vsel %vm325, %v550, -inf
    %585 = vmax.xlane.f32.xlu0 %v584
    %v586 = vpop.xlane.xlu0 %585
    %v587 = vsel %vm325, %v551, -inf
    %588 = vmax.xlane.f32.xlu0 %v587
    %v589 = vpop.xlane.xlu0 %588
    %v590 = vsel %vm325, %v552, -inf
    %591 = vmax.xlane.f32.xlu0 %v590
    %v592 = vpop.xlane.xlu0 %591
    %v593 = vsel %vm325, %v553, -inf
    %594 = vmax.xlane.f32.xlu0 %v593
    %v595 = vpop.xlane.xlu0 %594
    %v596 = vsel %vm325, %v554, -inf
    %597 = vmax.xlane.f32.xlu0 %v596
    %v598 = vpop.xlane.xlu0 %597
    %v599 = vsel %vm325, %v555, -inf
    %600 = vmax.xlane.f32.xlu0 %v599
    %v601 = vpop.xlane.xlu0 %600
    %v602 = vsel %vm325, %v556, -inf
    %603 = vmax.xlane.f32.xlu0 %v602
    %v604 = vpop.xlane.xlu0 %603
    %v605 = vsub.f32 %v541, %v559
    %v606 = vsub.f32 %v542, %v562
    %v607 = vsub.f32 %v543, %v565
    %v608 = vsub.f32 %v544, %v568
    %v609 = vsub.f32 %v545, %v571
    %v610 = vsub.f32 %v546, %v574
    %v611 = vsub.f32 %v547, %v577
    %v612 = vsub.f32 %v548, %v580
    %v613 = vsub.f32 %v549, %v583
    %v614 = vsub.f32 %v550, %v586
    %v615 = vsub.f32 %v551, %v589
    %v616 = vsub.f32 %v552, %v592
    %v617 = vsub.f32 %v553, %v595
    %v618 = vsub.f32 %v554, %v598
    %v619 = vsub.f32 %v555, %v601
    %v620 = vsub.f32 %v556, %v604
    %v621 = vmul.f32 %v605, 1.442695
    %v622 = vpow.pop %v621
    %v623 = vmul.f32 %v606, 1.442695
    %v624 = vpow.pop %v623
    %v625 = vmul.f32 %v607, 1.442695
    %v626 = vpow.pop %v625
    %v627 = vmul.f32 %v608, 1.442695
    %v628 = vpow.pop %v627
    %v629 = vmul.f32 %v609, 1.442695
    %v630 = vpow.pop %v629
    %v631 = vmul.f32 %v610, 1.442695
    %v632 = vpow.pop %v631
    %v633 = vmul.f32 %v611, 1.442695
    %v634 = vpow.pop %v633
    %v635 = vmul.f32 %v612, 1.442695
    %v636 = vpow.pop %v635
    %v637 = vmul.f32 %v613, 1.442695
    %v638 = vpow.pop %v637
    %v639 = vmul.f32 %v614, 1.442695
    %v640 = vpow.pop %v639
    %v641 = vmul.f32 %v615, 1.442695
    %v642 = vpow.pop %v641
    %v643 = vmul.f32 %v616, 1.442695
    %v644 = vpow.pop %v643
    %v645 = vmul.f32 %v617, 1.442695
    %v646 = vpow.pop %v645
    %v647 = vmul.f32 %v618, 1.442695
    %v648 = vpow.pop %v647
    %v649 = vmul.f32 %v619, 1.442695
    %v650 = vpow.pop %v649
    %v651 = vmul.f32 %v620, 1.442695
    %v652 = vpow.pop %v651
    %v653 = vsel %vm325, %v622, 0.0
    %654 = vadd.xlane.f32.xlu0 %v653
    %v655 = vpop.xlane.xlu0 %654
    %v656 = vsel %vm325, %v624, 0.0
    %657 = vadd.xlane.f32.xlu0 %v656
    %v658 = vpop.xlane.xlu0 %657
    %v659 = vsel %vm325, %v626, 0.0
    %660 = vadd.xlane.f32.xlu0 %v659
    %v661 = vpop.xlane.xlu0 %660
    %v662 = vsel %vm325, %v628, 0.0
    %663 = vadd.xlane.f32.xlu0 %v662
    %v664 = vpop.xlane.xlu0 %663
    %v665 = vsel %vm325, %v630, 0.0
    %666 = vadd.xlane.f32.xlu0 %v665
    %v667 = vpop.xlane.xlu0 %666
    %v668 = vsel %vm325, %v632, 0.0
    %669 = vadd.xlane.f32.xlu0 %v668
    %v670 = vpop.xlane.xlu0 %669
    %v671 = vsel %vm325, %v634, 0.0
    %672 = vadd.xlane.f32.xlu0 %v671
    %v673 = vpop.xlane.xlu0 %672
    %v674 = vsel %vm325, %v636, 0.0
    %675 = vadd.xlane.f32.xlu0 %v674
    %v676 = vpop.xlane.xlu0 %675
    %v677 = vsel %vm325, %v638, 0.0
    %678 = vadd.xlane.f32.xlu0 %v677
    %v679 = vpop.xlane.xlu0 %678
    %v680 = vsel %vm325, %v640, 0.0
    %681 = vadd.xlane.f32.xlu0 %v680
    %v682 = vpop.xlane.xlu0 %681
    %v683 = vsel %vm325, %v642, 0.0
    %684 = vadd.xlane.f32.xlu0 %v683
    %v685 = vpop.xlane.xlu0 %684
    %v686 = vsel %vm325, %v644, 0.0
    %687 = vadd.xlane.f32.xlu0 %v686
    %v688 = vpop.xlane.xlu0 %687
    %v689 = vsel %vm325, %v646, 0.0
    %690 = vadd.xlane.f32.xlu0 %v689
    %v691 = vpop.xlane.xlu0 %690
    %v692 = vsel %vm325, %v648, 0.0
    %693 = vadd.xlane.f32.xlu0 %v692
    %v694 = vpop.xlane.xlu0 %693
    %v695 = vsel %vm325, %v650, 0.0
    %696 = vadd.xlane.f32.xlu0 %v695
    %v697 = vpop.xlane.xlu0 %696
    %v698 = vsel %vm325, %v652, 0.0
    %699 = vadd.xlane.f32.xlu0 %v698
    %v700 = vpop.xlane.xlu0 %699
    %v701 = vrcp.pop %v655
    %v702 = vrcp.pop %v658
    %v703 = vrcp.pop %v661
    %v704 = vrcp.pop %v664
    %v705 = vrcp.pop %v667
    %v706 = vrcp.pop %v670
    %v707 = vrcp.pop %v673
    %v708 = vrcp.pop %v676
    %v709 = vrcp.pop %v679
    %v710 = vrcp.pop %v682
    %v711 = vrcp.pop %v685
    %v712 = vrcp.pop %v688
    %v713 = vrcp.pop %v691
    %v714 = vrcp.pop %v694
    %v715 = vrcp.pop %v697
    %v716 = vrcp.pop %v700
    %v717 = vmul.f32 %v622, %v701
    %v718 = vmul.f32 %v624, %v702
    %v719 = vmul.f32 %v626, %v703
    %v720 = vmul.f32 %v628, %v704
    %v721 = vmul.f32 %v630, %v705
    %v722 = vmul.f32 %v632, %v706
    %v723 = vmul.f32 %v634, %v707
    %v724 = vmul.f32 %v636, %v708
    %v725 = vmul.f32 %v638, %v709
    %v726 = vmul.f32 %v640, %v710
    %v727 = vmul.f32 %v642, %v711
    %v728 = vmul.f32 %v644, %v712
    %v729 = vmul.f32 %v646, %v713
    %v730 = vmul.f32 %v648, %v714
    %v731 = vmul.f32 %v650, %v715
    %v732 = vmul.f32 %v652, %v716
    %v733 = vpack.c.bf16 %v717, %v717
    %v734 = vpack.c.bf16 %v718, %v718
    %v735 = vpack.c.bf16 %v719, %v719
    %v736 = vpack.c.bf16 %v720, %v720
    %v737 = vpack.c.bf16 %v721, %v721
    %v738 = vpack.c.bf16 %v722, %v722
    %v739 = vpack.c.bf16 %v723, %v723
    %v740 = vpack.c.bf16 %v724, %v724
    %v741 = vpack.c.bf16 %v725, %v725
    %v742 = vpack.c.bf16 %v726, %v726
    %v743 = vpack.c.bf16 %v727, %v727
    %v744 = vpack.c.bf16 %v728, %v728
    %v745 = vpack.c.bf16 %v729, %v729
    %v746 = vpack.c.bf16 %v730, %v730
    %v747 = vpack.c.bf16 %v731, %v731
    %v748 = vpack.c.bf16 %v732, %v732
    %v751 = vunpack.c.l.b16 %v733
    %v752 = vunpack.c.l.b16 %v734
    %v753 = vpack.c.b16 %v752, %v751
    %v754 = vunpack.c.l.b16 %v304
    %v755 = vunpack.c.l.b16 %v305
    %v756 = vpack.c.b16 %v755, %v754
    %v759 = vsel %vm325, %v753, 0
    %761 = vmatpush.bf16.msra.mxu0 0
    %762 = vmatpush.bf16.msra.mxu0 0
    %763 = vmatpush.bf16.msra.mxu0 0
    %764 = vmatpush.bf16.msra.mxu0 0
    %765 = vmatpush.bf16.msra.mxu0 0
    %766 = vmatpush.bf16.msra.mxu0 0
    %767 = vmatpush.bf16.msra.mxu0 0
    %768 = vmatpush.bf16.msra.mxu0 %v756
    %769 = vmatmul.bf16.gmra.mxu0 %v759
    %v770 = vpop.f32.mrf.mxu0
    %v771 = vadd.f32 0.0, %v770
    %v772 = vpop.f32.mrf.mxu0
    %v773 = vadd.f32 0.0, %v772
    %774 = vdwg.mxu0
    %v777 = vunpack.c.l.b16 %v735
    %v778 = vunpack.c.l.b16 %v736
    %v779 = vpack.c.b16 %v778, %v777
    %v780 = vunpack.c.l.b16 %v308
    %v781 = vunpack.c.l.b16 %v309
    %v782 = vpack.c.b16 %v781, %v780
    %v785 = vsel %vm325, %v779, 0
    %787 = vmatpush.bf16.msra.mxu0 0
    %788 = vmatpush.bf16.msra.mxu0 0
    %789 = vmatpush.bf16.msra.mxu0 0
    %790 = vmatpush.bf16.msra.mxu0 0
    %791 = vmatpush.bf16.msra.mxu0 0
    %792 = vmatpush.bf16.msra.mxu0 0
    %793 = vmatpush.bf16.msra.mxu0 0
    %794 = vmatpush.bf16.msra.mxu0 %v782
    %795 = vmatmul.bf16.gmra.mxu0 %v785
    %v796 = vpop.f32.mrf.mxu0
    %v797 = vadd.f32 0.0, %v796
    %v798 = vpop.f32.mrf.mxu0
    %v799 = vadd.f32 0.0, %v798
    %800 = vdwg.mxu0
    %v803 = vunpack.c.l.b16 %v737
    %v804 = vunpack.c.l.b16 %v738
    %v805 = vpack.c.b16 %v804, %v803
    %v806 = vunpack.c.l.b16 %v312
    %v807 = vunpack.c.l.b16 %v313
    %v808 = vpack.c.b16 %v807, %v806
    %v811 = vsel %vm325, %v805, 0
    %813 = vmatpush.bf16.msra.mxu0 0
    %814 = vmatpush.bf16.msra.mxu0 0
    %815 = vmatpush.bf16.msra.mxu0 0
    %816 = vmatpush.bf16.msra.mxu0 0
    %817 = vmatpush.bf16.msra.mxu0 0
    %818 = vmatpush.bf16.msra.mxu0 0
    %819 = vmatpush.bf16.msra.mxu0 0
    %820 = vmatpush.bf16.msra.mxu0 %v808
    %821 = vmatmul.bf16.gmra.mxu0 %v811
    %v822 = vpop.f32.mrf.mxu0
    %v823 = vadd.f32 0.0, %v822
    %v824 = vpop.f32.mrf.mxu0
    %v825 = vadd.f32 0.0, %v824
    %826 = vdwg.mxu0
    %v829 = vunpack.c.l.b16 %v739
    %v830 = vunpack.c.l.b16 %v740
    %v831 = vpack.c.b16 %v830, %v829
    %v832 = vunpack.c.l.b16 %v316
    %v833 = vunpack.c.l.b16 %v317
    %v834 = vpack.c.b16 %v833, %v832
    %v837 = vsel %vm325, %v831, 0
    %839 = vmatpush.bf16.msra.mxu0 0
    %840 = vmatpush.bf16.msra.mxu0 0
    %841 = vmatpush.bf16.msra.mxu0 0
    %842 = vmatpush.bf16.msra.mxu0 0
    %843 = vmatpush.bf16.msra.mxu0 0
    %844 = vmatpush.bf16.msra.mxu0 0
    %845 = vmatpush.bf16.msra.mxu0 0
    %846 = vmatpush.bf16.msra.mxu0 %v834
    %847 = vmatmul.bf16.gmra.mxu0 %v837
    %v848 = vpop.f32.mrf.mxu0
    %v849 = vadd.f32 0.0, %v848
    %v850 = vpop.f32.mrf.mxu0
    %v851 = vadd.f32 0.0, %v850
    %852 = vdwg.mxu0
    %v855 = vunpack.c.l.b16 %v741
    %v856 = vunpack.c.l.b16 %v742
    %v857 = vpack.c.b16 %v856, %v855
    %v858 = vunpack.c.l.b16 %v306
    %v859 = vunpack.c.l.b16 %v307
    %v860 = vpack.c.b16 %v859, %v858
    %v863 = vsel %vm325, %v857, 0
    %865 = vmatpush.bf16.msra.mxu0 0
    %866 = vmatpush.bf16.msra.mxu0 0
    %867 = vmatpush.bf16.msra.mxu0 0
    %868 = vmatpush.bf16.msra.mxu0 0
    %869 = vmatpush.bf16.msra.mxu0 0
    %870 = vmatpush.bf16.msra.mxu0 0
    %871 = vmatpush.bf16.msra.mxu0 0
    %872 = vmatpush.bf16.msra.mxu0 %v860
    %873 = vmatmul.bf16.gmra.mxu0 %v863
    %v874 = vpop.f32.mrf.mxu0
    %v875 = vadd.f32 0.0, %v874
    %v876 = vpop.f32.mrf.mxu0
    %v877 = vadd.f32 0.0, %v876
    %878 = vdwg.mxu0
    %v881 = vunpack.c.l.b16 %v743
    %v882 = vunpack.c.l.b16 %v744
    %v883 = vpack.c.b16 %v882, %v881
    %v884 = vunpack.c.l.b16 %v310
    %v885 = vunpack.c.l.b16 %v311
    %v886 = vpack.c.b16 %v885, %v884
    %v889 = vsel %vm325, %v883, 0
    %891 = vmatpush.bf16.msra.mxu0 0
    %892 = vmatpush.bf16.msra.mxu0 0
    %893 = vmatpush.bf16.msra.mxu0 0
    %894 = vmatpush.bf16.msra.mxu0 0
    %895 = vmatpush.bf16.msra.mxu0 0
    %896 = vmatpush.bf16.msra.mxu0 0
    %897 = vmatpush.bf16.msra.mxu0 0
    %898 = vmatpush.bf16.msra.mxu0 %v886
    %899 = vmatmul.bf16.gmra.mxu0 %v889
    %v900 = vpop.f32.mrf.mxu0
    %v901 = vadd.f32 0.0, %v900
    %v902 = vpop.f32.mrf.mxu0
    %v903 = vadd.f32 0.0, %v902
    %904 = vdwg.mxu0
    %v907 = vunpack.c.l.b16 %v745
    %v908 = vunpack.c.l.b16 %v746
    %v909 = vpack.c.b16 %v908, %v907
    %v910 = vunpack.c.l.b16 %v314
    %v911 = vunpack.c.l.b16 %v315
    %v912 = vpack.c.b16 %v911, %v910
    %v915 = vsel %vm325, %v909, 0
    %917 = vmatpush.bf16.msra.mxu0 0
    %918 = vmatpush.bf16.msra.mxu0 0
    %919 = vmatpush.bf16.msra.mxu0 0
    %920 = vmatpush.bf16.msra.mxu0 0
    %921 = vmatpush.bf16.msra.mxu0 0
    %922 = vmatpush.bf16.msra.mxu0 0
    %923 = vmatpush.bf16.msra.mxu0 0
    %924 = vmatpush.bf16.msra.mxu0 %v912
    %925 = vmatmul.bf16.gmra.mxu0 %v915
    %v926 = vpop.f32.mrf.mxu0
    %v927 = vadd.f32 0.0, %v926
    %v928 = vpop.f32.mrf.mxu0
    %v929 = vadd.f32 0.0, %v928
    %930 = vdwg.mxu0
    %v933 = vunpack.c.l.b16 %v747
    %v934 = vunpack.c.l.b16 %v748
    %v935 = vpack.c.b16 %v934, %v933
    %v936 = vunpack.c.l.b16 %v318
    %v937 = vunpack.c.l.b16 %v319
    %v938 = vpack.c.b16 %v937, %v936
    %v941 = vsel %vm325, %v935, 0
    %943 = vmatpush.bf16.msra.mxu0 0
    %944 = vmatpush.bf16.msra.mxu0 0
    %945 = vmatpush.bf16.msra.mxu0 0
    %946 = vmatpush.bf16.msra.mxu0 0
    %947 = vmatpush.bf16.msra.mxu0 0
    %948 = vmatpush.bf16.msra.mxu0 0
    %949 = vmatpush.bf16.msra.mxu0 0
    %950 = vmatpush.bf16.msra.mxu0 %v938
    %951 = vmatmul.bf16.gmra.mxu0 %v941
    %v952 = vpop.f32.mrf.mxu0
    %v953 = vadd.f32 0.0, %v952
    %v954 = vpop.f32.mrf.mxu0
    %v955 = vadd.f32 0.0, %v954
    %956 = vdwg.mxu0
    %961 = vrot.lane.b32.xlu0 %v797, 16
    %v962 = vpop.permute.xlu0 %961
    %963 = vrot.lane.b32.xlu0 %v799, 16
    %v964 = vpop.permute.xlu0 %963
    %965 = vrot.lane.b32.xlu0 %v901, 16
    %v966 = vpop.permute.xlu0 %965
    %967 = vrot.lane.b32.xlu0 %v903, 16
    %v968 = vpop.permute.xlu0 %967
    %977 = vrot.lane.b32.xlu0 %v823, 32
    %v978 = vpop.permute.xlu0 %977
    %979 = vrot.lane.b32.xlu0 %v825, 32
    %v980 = vpop.permute.xlu0 %979
    %981 = vrot.lane.b32.xlu0 %v927, 32
    %v982 = vpop.permute.xlu0 %981
    %983 = vrot.lane.b32.xlu0 %v929, 32
    %v984 = vpop.permute.xlu0 %983
    %993 = vrot.lane.b32.xlu0 %v849, 48
    %v994 = vpop.permute.xlu0 %993
    %995 = vrot.lane.b32.xlu0 %v851, 48
    %v996 = vpop.permute.xlu0 %995
    %997 = vrot.lane.b32.xlu0 %v953, 48
    %v998 = vpop.permute.xlu0 %997
    %999 = vrot.lane.b32.xlu0 %v955, 48
    %v1000 = vpop.permute.xlu0 %999
    %v1005 = vsel %vm325, %v771, %v962
    %v1006 = vsel %vm325, %v773, %v964
    %v1007 = vsel %vm325, %v875, %v966
    %v1008 = vsel %vm325, %v877, %v968
    %vm1009 = vcmask 261120
    %v1010 = vsel %vm1009, %v1005, %v978
    %v1011 = vsel %vm1009, %v1006, %v980
    %v1012 = vsel %vm1009, %v1007, %v982
    %v1013 = vsel %vm1009, %v1008, %v984
    %vm1014 = vcmask 392192
    %v1015 = vsel %vm1014, %v1010, %v994
    %v1016 = vsel %vm1014, %v1011, %v996
    %v1017 = vsel %vm1014, %v1012, %v998
    %v1018 = vsel %vm1014, %v1013, %v1000
    %v1019 = vpack.c.bf16 %v1016, %v1015
    %v1020 = vpack.c.bf16 %v1018, %v1017
    %v1021 = vld [vmem:[%s4] sm:$0xf]
    %v1022 = vld [vmem:[%s4 + $0x4] sm:$0xf]
    %v1023 = vld [vmem:[%s4 + $0x8] sm:$0xf]
    %v1024 = vld [vmem:[%s4 + $0xc] sm:$0xf]
    %v1025 = vld [vmem:[%s4 + $0x10] sm:$0xf]
    %v1026 = vld [vmem:[%s4 + $0x14] sm:$0xf]
    %v1027 = vld [vmem:[%s4 + $0x18] sm:$0xf]
    %v1028 = vld [vmem:[%s4 + $0x1c] sm:$0xf]
    %v1029 = vld [vmem:[%s5] sm:$0x1]
    %v1031 = vperm.slane %v1029, 0
    %v1041 = vunpack.c.l.b16 %v1021
    %v1042 = vunpack.c.l.b16 %v1022
    %v1043 = vunpack.c.l.b16 %v1023
    %v1044 = vunpack.c.l.b16 %v1024
    %v1045 = vunpack.c.l.b16 %v1025
    %v1046 = vunpack.c.l.b16 %v1026
    %v1047 = vunpack.c.l.b16 %v1027
    %v1048 = vunpack.c.l.b16 %v1028
    %v1049 = vpack.c.b16 %v1042, %v1041
    %v1050 = vpack.c.b16 %v1044, %v1043
    %v1051 = vpack.c.b16 %v1046, %v1045
    %v1052 = vpack.c.b16 %v1048, %v1047
    %v1058 = vsel %vm68, %v1019, 0
    %v1061 = vsel %vm68, %v1020, 0
    %1063 = vmatpush.bf16.msra.mxu0 0
    %1064 = vmatpush.bf16.msra.mxu0 0
    %1065 = vmatpush.bf16.msra.mxu0 0
    %1066 = vmatpush.bf16.msra.mxu0 0
    %1067 = vmatpush.bf16.msra.mxu0 %v1052
    %1068 = vmatpush.bf16.msra.mxu0 %v1051
    %1069 = vmatpush.bf16.msra.mxu0 %v1050
    %1070 = vmatpush.bf16.msra.mxu0 %v1049
    %1071 = vmatmul.bf16.gmra.mxu0 %v1058
    %v1072 = vpop.f32.mrf.mxu0
    %v1073 = vadd.f32 %v1031, %v1072
    %v1074 = vpop.f32.mrf.mxu0
    %v1075 = vadd.f32 %v1031, %v1074
    %1076 = vmatmul.bf16.gmra.mxu0 %v1061
    %v1077 = vpop.f32.mrf.mxu0
    %v1078 = vadd.f32 %v1031, %v1077
    %v1079 = vpop.f32.mrf.mxu0
    %v1080 = vadd.f32 %v1031, %v1079
    %1081 = vdwg.mxu0
    %v1082 = vadd.f32 %v55, %v1073
    %v1083 = vadd.f32 %v56, %v1075
    %v1084 = vadd.f32 %v57, %v1078
    %v1085 = vadd.f32 %v58, %v1080
    %v1086 = vld [vmem:[%s6] sm:$0x1]
    %v1087 = vld [vmem:[%s7] sm:$0x1]
    %v1088 = vsel %vm68, %v1082, 0.0
    %1089 = vadd.xlane.f32.xlu0 %v1088
    %v1090 = vpop.xlane.xlu0 %1089
    %v1091 = vsel %vm68, %v1083, 0.0
    %1092 = vadd.xlane.f32.xlu0 %v1091
    %v1093 = vpop.xlane.xlu0 %1092
    %v1094 = vsel %vm68, %v1084, 0.0
    %1095 = vadd.xlane.f32.xlu0 %v1094
    %v1096 = vpop.xlane.xlu0 %1095
    %v1097 = vsel %vm68, %v1085, 0.0
    %1098 = vadd.xlane.f32.xlu0 %v1097
    %v1099 = vpop.xlane.xlu0 %1098
    %v1100 = vmul.f32 %v1090, %v87
    %v1101 = vmul.f32 %v1093, %v87
    %v1102 = vmul.f32 %v1096, %v87
    %v1103 = vmul.f32 %v1099, %v87
    %v1104 = vsub.f32 %v1082, %v1100
    %v1105 = vsub.f32 %v1083, %v1101
    %v1106 = vsub.f32 %v1084, %v1102
    %v1107 = vsub.f32 %v1085, %v1103
    %v1108 = vmul.f32 %v1104, %v1104
    %v1109 = vmul.f32 %v1105, %v1105
    %v1110 = vmul.f32 %v1106, %v1106
    %v1111 = vmul.f32 %v1107, %v1107
    %v1112 = vsel %vm68, %v1108, 0.0
    %1113 = vadd.xlane.f32.xlu0 %v1112
    %v1114 = vpop.xlane.xlu0 %1113
    %v1115 = vsel %vm68, %v1109, 0.0
    %1116 = vadd.xlane.f32.xlu0 %v1115
    %v1117 = vpop.xlane.xlu0 %1116
    %v1118 = vsel %vm68, %v1110, 0.0
    %1119 = vadd.xlane.f32.xlu0 %v1118
    %v1120 = vpop.xlane.xlu0 %1119
    %v1121 = vsel %vm68, %v1111, 0.0
    %1122 = vadd.xlane.f32.xlu0 %v1121
    %v1123 = vpop.xlane.xlu0 %1122
    %v1124 = vmul.f32 %v1114, %v87
    %v1125 = vmul.f32 %v1117, %v87
    %v1126 = vmul.f32 %v1120, %v87
    %v1127 = vmul.f32 %v1123, %v87
    %v1128 = vadd.f32 %v1124, 1e-05
    %v1129 = vadd.f32 %v1125, 1e-05
    %v1130 = vadd.f32 %v1126, 1e-05
    %v1131 = vadd.f32 %v1127, 1e-05
    %v1132 = vrsqrt.pop %v1128
    %v1133 = vmul.f32 %v1132, %v1128
    %v1134 = vmul.f32 %v1133, %v1132
    %v1135 = vmul.f32 0.5, %v1134
    %v1136 = vsub.f32 1.5, %v1135
    %v1137 = vmul.f32 %v1132, %v1136
    %vm1138 = vweird.f32 %v1128
    %vm1139 = vweird.f32 %v1132
    %vm1140 = vmor %vm1138, %vm1139
    %v1141 = vsel %vm1140, %v1132, %v1137
    %v1142 = vrsqrt.pop %v1129
    %v1143 = vmul.f32 %v1142, %v1129
    %v1144 = vmul.f32 %v1143, %v1142
    %v1145 = vmul.f32 0.5, %v1144
    %v1146 = vsub.f32 1.5, %v1145
    %v1147 = vmul.f32 %v1142, %v1146
    %vm1148 = vweird.f32 %v1129
    %vm1149 = vweird.f32 %v1142
    %vm1150 = vmor %vm1148, %vm1149
    %v1151 = vsel %vm1150, %v1142, %v1147
    %v1152 = vrsqrt.pop %v1130
    %v1153 = vmul.f32 %v1152, %v1130
    %v1154 = vmul.f32 %v1153, %v1152
    %v1155 = vmul.f32 0.5, %v1154
    %v1156 = vsub.f32 1.5, %v1155
    %v1157 = vmul.f32 %v1152, %v1156
    %vm1158 = vweird.f32 %v1130
    %vm1159 = vweird.f32 %v1152
    %vm1160 = vmor %vm1158, %vm1159
    %v1161 = vsel %vm1160, %v1152, %v1157
    %v1162 = vrsqrt.pop %v1131
    %v1163 = vmul.f32 %v1162, %v1131
    %v1164 = vmul.f32 %v1163, %v1162
    %v1165 = vmul.f32 0.5, %v1164
    %v1166 = vsub.f32 1.5, %v1165
    %v1167 = vmul.f32 %v1162, %v1166
    %vm1168 = vweird.f32 %v1131
    %vm1169 = vweird.f32 %v1162
    %vm1170 = vmor %vm1168, %vm1169
    %v1171 = vsel %vm1170, %v1162, %v1167
    %v1172 = vmul.f32 %v1104, %v1141
    %v1173 = vmul.f32 %v1105, %v1151
    %v1174 = vmul.f32 %v1106, %v1161
    %v1175 = vmul.f32 %v1107, %v1171
    %v1177 = vperm.slane %v1086, 0
    %v1179 = vmul.f32 %v1172, %v1177
    %v1180 = vmul.f32 %v1173, %v1177
    %v1181 = vmul.f32 %v1174, %v1177
    %v1182 = vmul.f32 %v1175, %v1177
    %v1184 = vperm.slane %v1087, 0
    %v1186 = vadd.f32 %v1179, %v1184
    %v1187 = vadd.f32 %v1180, %v1184
    %v1188 = vadd.f32 %v1181, %v1184
    %v1189 = vadd.f32 %v1182, %v1184
    %v1190 = vpack.c.bf16 %v1187, %v1186
    %v1191 = vpack.c.bf16 %v1189, %v1188
    %v1192 = vld [vmem:[%s8] sm:$0xff]
    %v1193 = vld [vmem:[%s8 + $0x8] sm:$0xff]
    %v1194 = vld [vmem:[%s8 + $0x10] sm:$0xff]
    %v1195 = vld [vmem:[%s8 + $0x18] sm:$0xff]
    %v1196 = vld [vmem:[%s8 + $0x20] sm:$0xff]
    %v1197 = vld [vmem:[%s8 + $0x28] sm:$0xff]
    %v1198 = vld [vmem:[%s8 + $0x30] sm:$0xff]
    %v1199 = vld [vmem:[%s8 + $0x38] sm:$0xff]
    %v1200 = vld [vmem:[%s9] sm:$0x3]
    %v1202 = vperm.slane %v1200, 0
    %v1203 = vperm.slane %v1200, 1
    %v1214 = vunpack.c.l.b16 %v1192
    %v1215 = vunpack.c.h.b16 %v1192
    %v1216 = vunpack.c.l.b16 %v1193
    %v1217 = vunpack.c.h.b16 %v1193
    %v1218 = vunpack.c.l.b16 %v1194
    %v1219 = vunpack.c.h.b16 %v1194
    %v1220 = vunpack.c.l.b16 %v1195
    %v1221 = vunpack.c.h.b16 %v1195
    %v1222 = vunpack.c.l.b16 %v1196
    %v1223 = vunpack.c.h.b16 %v1196
    %v1224 = vunpack.c.l.b16 %v1197
    %v1225 = vunpack.c.h.b16 %v1197
    %v1226 = vunpack.c.l.b16 %v1198
    %v1227 = vunpack.c.h.b16 %v1198
    %v1228 = vunpack.c.l.b16 %v1199
    %v1229 = vunpack.c.h.b16 %v1199
    %v1230 = vpack.c.b16 %v1216, %v1214
    %v1231 = vpack.c.b16 %v1217, %v1215
    %v1232 = vpack.c.b16 %v1220, %v1218
    %v1233 = vpack.c.b16 %v1221, %v1219
    %v1234 = vpack.c.b16 %v1224, %v1222
    %v1235 = vpack.c.b16 %v1225, %v1223
    %v1236 = vpack.c.b16 %v1228, %v1226
    %v1237 = vpack.c.b16 %v1229, %v1227
    %v1247 = vsel %vm68, %v1190, 0
    %v1250 = vsel %vm68, %v1191, 0
    %1252 = vmatpush.bf16.msra.mxu0 0
    %1253 = vmatpush.bf16.msra.mxu0 0
    %1254 = vmatpush.bf16.msra.mxu0 0
    %1255 = vmatpush.bf16.msra.mxu0 0
    %1256 = vmatpush.bf16.msra.mxu0 %v1236
    %1257 = vmatpush.bf16.msra.mxu0 %v1234
    %1258 = vmatpush.bf16.msra.mxu0 %v1232
    %1259 = vmatpush.bf16.msra.mxu0 %v1230
    %1260 = vmatmul.bf16.gmra.mxu0 %v1247
    %v1261 = vpop.f32.mrf.mxu0
    %v1262 = vadd.f32 %v1202, %v1261
    %v1263 = vpop.f32.mrf.mxu0
    %v1264 = vadd.f32 %v1202, %v1263
    %1265 = vmatmul.bf16.gmra.mxu0 %v1250
    %v1266 = vpop.f32.mrf.mxu0
    %v1267 = vadd.f32 %v1202, %v1266
    %v1268 = vpop.f32.mrf.mxu0
    %v1269 = vadd.f32 %v1202, %v1268
    %1270 = vdwg.mxu0
    %1271 = vmatpush.bf16.msra.mxu0 0
    %1272 = vmatpush.bf16.msra.mxu0 0
    %1273 = vmatpush.bf16.msra.mxu0 0
    %1274 = vmatpush.bf16.msra.mxu0 0
    %1275 = vmatpush.bf16.msra.mxu0 %v1237
    %1276 = vmatpush.bf16.msra.mxu0 %v1235
    %1277 = vmatpush.bf16.msra.mxu0 %v1233
    %1278 = vmatpush.bf16.msra.mxu0 %v1231
    %1279 = vmatmul.bf16.gmra.mxu0 %v1247
    %v1280 = vpop.f32.mrf.mxu0
    %v1281 = vadd.f32 %v1203, %v1280
    %v1282 = vpop.f32.mrf.mxu0
    %v1283 = vadd.f32 %v1203, %v1282
    %1284 = vmatmul.bf16.gmra.mxu0 %v1250
    %v1285 = vpop.f32.mrf.mxu0
    %v1286 = vadd.f32 %v1203, %v1285
    %v1287 = vpop.f32.mrf.mxu0
    %v1288 = vadd.f32 %v1203, %v1287
    %1289 = vdwg.mxu0
    %v1290 = vmax.f32 %v1262, 0.0
    %v1291 = vmax.f32 %v1281, 0.0
    %v1292 = vmax.f32 %v1264, 0.0
    %v1293 = vmax.f32 %v1283, 0.0
    %v1294 = vmax.f32 %v1267, 0.0
    %v1295 = vmax.f32 %v1286, 0.0
    %v1296 = vmax.f32 %v1269, 0.0
    %v1297 = vmax.f32 %v1288, 0.0
    %v1298 = vpack.c.bf16 %v1292, %v1290
    %v1299 = vpack.c.bf16 %v1293, %v1291
    %v1300 = vpack.c.bf16 %v1296, %v1294
    %v1301 = vpack.c.bf16 %v1297, %v1295
    %v1302 = vld [vmem:[%s10] sm:$0xf]
    %v1303 = vld [vmem:[%s10 + $0x4] sm:$0xf]
    %v1304 = vld [vmem:[%s10 + $0x8] sm:$0xf]
    %v1305 = vld [vmem:[%s10 + $0xc] sm:$0xf]
    %v1306 = vld [vmem:[%s10 + $0x10] sm:$0xf]
    %v1307 = vld [vmem:[%s10 + $0x14] sm:$0xf]
    %v1308 = vld [vmem:[%s10 + $0x18] sm:$0xf]
    %v1309 = vld [vmem:[%s10 + $0x1c] sm:$0xf]
    %v1310 = vld [vmem:[%s10 + $0x20] sm:$0xf]
    %v1311 = vld [vmem:[%s10 + $0x24] sm:$0xf]
    %v1312 = vld [vmem:[%s10 + $0x28] sm:$0xf]
    %v1313 = vld [vmem:[%s10 + $0x2c] sm:$0xf]
    %v1314 = vld [vmem:[%s10 + $0x30] sm:$0xf]
    %v1315 = vld [vmem:[%s10 + $0x34] sm:$0xf]
    %v1316 = vld [vmem:[%s10 + $0x38] sm:$0xf]
    %v1317 = vld [vmem:[%s10 + $0x3c] sm:$0xf]
    %v1318 = vld [vmem:[%s10 + $0x40] sm:$0xf]
    %v1319 = vld [vmem:[%s10 + $0x44] sm:$0xf]
    %v1320 = vld [vmem:[%s10 + $0x48] sm:$0xf]
    %v1321 = vld [vmem:[%s10 + $0x4c] sm:$0xf]
    %v1322 = vld [vmem:[%s10 + $0x50] sm:$0xf]
    %v1323 = vld [vmem:[%s10 + $0x54] sm:$0xf]
    %v1324 = vld [vmem:[%s10 + $0x58] sm:$0xf]
    %v1325 = vld [vmem:[%s10 + $0x5c] sm:$0xf]
    %v1326 = vld [vmem:[%s10 + $0x60] sm:$0xf]
    %v1327 = vld [vmem:[%s10 + $0x64] sm:$0xf]
    %v1328 = vld [vmem:[%s10 + $0x68] sm:$0xf]
    %v1329 = vld [vmem:[%s10 + $0x6c] sm:$0xf]
    %v1330 = vld [vmem:[%s10 + $0x70] sm:$0xf]
    %v1331 = vld [vmem:[%s10 + $0x74] sm:$0xf]
    %v1332 = vld [vmem:[%s10 + $0x78] sm:$0xf]
    %v1333 = vld [vmem:[%s10 + $0x7c] sm:$0xf]
    %v1366 = vunpack.c.l.b16 %v1302
    %v1367 = vunpack.c.l.b16 %v1303
    %v1368 = vunpack.c.l.b16 %v1304
    %v1369 = vunpack.c.l.b16 %v1305
    %v1370 = vunpack.c.l.b16 %v1306
    %v1371 = vunpack.c.l.b16 %v1307
    %v1372 = vunpack.c.l.b16 %v1308
    %v1373 = vunpack.c.l.b16 %v1309
    %v1374 = vunpack.c.l.b16 %v1310
    %v1375 = vunpack.c.l.b16 %v1311
    %v1376 = vunpack.c.l.b16 %v1312
    %v1377 = vunpack.c.l.b16 %v1313
    %v1378 = vunpack.c.l.b16 %v1314
    %v1379 = vunpack.c.l.b16 %v1315
    %v1380 = vunpack.c.l.b16 %v1316
    %v1381 = vunpack.c.l.b16 %v1317
    %v1382 = vunpack.c.l.b16 %v1318
    %v1383 = vunpack.c.l.b16 %v1319
    %v1384 = vunpack.c.l.b16 %v1320
    %v1385 = vunpack.c.l.b16 %v1321
    %v1386 = vunpack.c.l.b16 %v1322
    %v1387 = vunpack.c.l.b16 %v1323
    %v1388 = vunpack.c.l.b16 %v1324
    %v1389 = vunpack.c.l.b16 %v1325
    %v1390 = vunpack.c.l.b16 %v1326
    %v1391 = vunpack.c.l.b16 %v1327
    %v1392 = vunpack.c.l.b16 %v1328
    %v1393 = vunpack.c.l.b16 %v1329
    %v1394 = vunpack.c.l.b16 %v1330
    %v1395 = vunpack.c.l.b16 %v1331
    %v1396 = vunpack.c.l.b16 %v1332
    %v1397 = vunpack.c.l.b16 %v1333
    %v1398 = vpack.c.b16 %v1367, %v1366
    %v1399 = vpack.c.b16 %v1369, %v1368
    %v1400 = vpack.c.b16 %v1371, %v1370
    %v1401 = vpack.c.b16 %v1373, %v1372
    %v1402 = vpack.c.b16 %v1375, %v1374
    %v1403 = vpack.c.b16 %v1377, %v1376
    %v1404 = vpack.c.b16 %v1379, %v1378
    %v1405 = vpack.c.b16 %v1381, %v1380
    %v1406 = vpack.c.b16 %v1383, %v1382
    %v1407 = vpack.c.b16 %v1385, %v1384
    %v1408 = vpack.c.b16 %v1387, %v1386
    %v1409 = vpack.c.b16 %v1389, %v1388
    %v1410 = vpack.c.b16 %v1391, %v1390
    %v1411 = vpack.c.b16 %v1393, %v1392
    %v1412 = vpack.c.b16 %v1395, %v1394
    %v1413 = vpack.c.b16 %v1397, %v1396
    %1430 = vmatpush.bf16.msra.mxu0 %v1405
    %1431 = vmatpush.bf16.msra.mxu0 %v1404
    %1432 = vmatpush.bf16.msra.mxu0 %v1403
    %1433 = vmatpush.bf16.msra.mxu0 %v1402
    %1434 = vmatpush.bf16.msra.mxu0 %v1401
    %1435 = vmatpush.bf16.msra.mxu0 %v1400
    %1436 = vmatpush.bf16.msra.mxu0 %v1399
    %1437 = vmatpush.bf16.msra.mxu0 %v1398
    %1438 = vmatmul.bf16.gmra.mxu0 %v1298
    %v1439 = vpop.f32.mrf.mxu0
    %v1440 = vadd.f32 0.0, %v1439
    %v1441 = vpop.f32.mrf.mxu0
    %v1442 = vadd.f32 0.0, %v1441
    %1443 = vmatmul.bf16.gmra.mxu0 %v1300
    %v1444 = vpop.f32.mrf.mxu0
    %v1445 = vadd.f32 0.0, %v1444
    %v1446 = vpop.f32.mrf.mxu0
    %v1447 = vadd.f32 0.0, %v1446
    %1448 = vdwg.mxu0
    %1449 = vmatpush.bf16.msra.mxu0 %v1413
    %1450 = vmatpush.bf16.msra.mxu0 %v1412
    %1451 = vmatpush.bf16.msra.mxu0 %v1411
    %1452 = vmatpush.bf16.msra.mxu0 %v1410
    %1453 = vmatpush.bf16.msra.mxu0 %v1409
    %1454 = vmatpush.bf16.msra.mxu0 %v1408
    %1455 = vmatpush.bf16.msra.mxu0 %v1407
    %1456 = vmatpush.bf16.msra.mxu0 %v1406
    %1457 = vmatmul.bf16.gmra.mxu0 %v1299
    %v1458 = vpop.f32.mrf.mxu0
    %v1459 = vadd.f32 %v1440, %v1458
    %v1460 = vpop.f32.mrf.mxu0
    %v1461 = vadd.f32 %v1442, %v1460
    %1462 = vmatmul.bf16.gmra.mxu0 %v1301
    %v1463 = vpop.f32.mrf.mxu0
    %v1464 = vadd.f32 %v1445, %v1463
    %v1465 = vpop.f32.mrf.mxu0
    %v1466 = vadd.f32 %v1447, %v1465
    %1467 = vdwg.mxu0
    %v1468 = vadd.f32 %v1082, %v1459
    %v1469 = vadd.f32 %v1083, %v1461
    %v1470 = vadd.f32 %v1084, %v1464
    %v1471 = vadd.f32 %v1085, %v1466
    %v1472 = vld [vmem:[%s11] sm:$0x1]
    %v1474 = vperm.slane %v1472, 0
    %v1476 = vadd.f32 %v1468, %v1474
    %v1477 = vadd.f32 %v1469, %v1474
    %v1478 = vadd.f32 %v1470, %v1474
    %v1479 = vadd.f32 %v1471, %v1474
    %s1480 = scalar_lea.vmem %s1, 1
    %v1481 = vld [vmem:[%s1480] sm:$0x1]
    %s1482 = scalar_lea.vmem %s2, 1
    %v1483 = vld [vmem:[%s1482] sm:$0x1]
    %v1484 = vsel %vm68, %v1476, 0.0
    %1485 = vadd.xlane.f32.xlu0 %v1484
    %v1486 = vpop.xlane.xlu0 %1485
    %v1487 = vsel %vm68, %v1477, 0.0
    %1488 = vadd.xlane.f32.xlu0 %v1487
    %v1489 = vpop.xlane.xlu0 %1488
    %v1490 = vsel %vm68, %v1478, 0.0
    %1491 = vadd.xlane.f32.xlu0 %v1490
    %v1492 = vpop.xlane.xlu0 %1491
    %v1493 = vsel %vm68, %v1479, 0.0
    %1494 = vadd.xlane.f32.xlu0 %v1493
    %v1495 = vpop.xlane.xlu0 %1494
    %v1496 = vmul.f32 %v1486, %v87
    %v1497 = vmul.f32 %v1489, %v87
    %v1498 = vmul.f32 %v1492, %v87
    %v1499 = vmul.f32 %v1495, %v87
    %v1500 = vsub.f32 %v1476, %v1496
    %v1501 = vsub.f32 %v1477, %v1497
    %v1502 = vsub.f32 %v1478, %v1498
    %v1503 = vsub.f32 %v1479, %v1499
    %v1504 = vmul.f32 %v1500, %v1500
    %v1505 = vmul.f32 %v1501, %v1501
    %v1506 = vmul.f32 %v1502, %v1502
    %v1507 = vmul.f32 %v1503, %v1503
    %v1508 = vsel %vm68, %v1504, 0.0
    %1509 = vadd.xlane.f32.xlu0 %v1508
    %v1510 = vpop.xlane.xlu0 %1509
    %v1511 = vsel %vm68, %v1505, 0.0
    %1512 = vadd.xlane.f32.xlu0 %v1511
    %v1513 = vpop.xlane.xlu0 %1512
    %v1514 = vsel %vm68, %v1506, 0.0
    %1515 = vadd.xlane.f32.xlu0 %v1514
    %v1516 = vpop.xlane.xlu0 %1515
    %v1517 = vsel %vm68, %v1507, 0.0
    %1518 = vadd.xlane.f32.xlu0 %v1517
    %v1519 = vpop.xlane.xlu0 %1518
    %v1520 = vmul.f32 %v1510, %v87
    %v1521 = vmul.f32 %v1513, %v87
    %v1522 = vmul.f32 %v1516, %v87
    %v1523 = vmul.f32 %v1519, %v87
    %v1524 = vadd.f32 %v1520, 1e-05
    %v1525 = vadd.f32 %v1521, 1e-05
    %v1526 = vadd.f32 %v1522, 1e-05
    %v1527 = vadd.f32 %v1523, 1e-05
    %v1528 = vrsqrt.pop %v1524
    %v1529 = vmul.f32 %v1528, %v1524
    %v1530 = vmul.f32 %v1529, %v1528
    %v1531 = vmul.f32 0.5, %v1530
    %v1532 = vsub.f32 1.5, %v1531
    %v1533 = vmul.f32 %v1528, %v1532
    %vm1534 = vweird.f32 %v1524
    %vm1535 = vweird.f32 %v1528
    %vm1536 = vmor %vm1534, %vm1535
    %v1537 = vsel %vm1536, %v1528, %v1533
    %v1538 = vrsqrt.pop %v1525
    %v1539 = vmul.f32 %v1538, %v1525
    %v1540 = vmul.f32 %v1539, %v1538
    %v1541 = vmul.f32 0.5, %v1540
    %v1542 = vsub.f32 1.5, %v1541
    %v1543 = vmul.f32 %v1538, %v1542
    %vm1544 = vweird.f32 %v1525
    %vm1545 = vweird.f32 %v1538
    %vm1546 = vmor %vm1544, %vm1545
    %v1547 = vsel %vm1546, %v1538, %v1543
    %v1548 = vrsqrt.pop %v1526
    %v1549 = vmul.f32 %v1548, %v1526
    %v1550 = vmul.f32 %v1549, %v1548
    %v1551 = vmul.f32 0.5, %v1550
    %v1552 = vsub.f32 1.5, %v1551
    %v1553 = vmul.f32 %v1548, %v1552
    %vm1554 = vweird.f32 %v1526
    %vm1555 = vweird.f32 %v1548
    %vm1556 = vmor %vm1554, %vm1555
    %v1557 = vsel %vm1556, %v1548, %v1553
    %v1558 = vrsqrt.pop %v1527
    %v1559 = vmul.f32 %v1558, %v1527
    %v1560 = vmul.f32 %v1559, %v1558
    %v1561 = vmul.f32 0.5, %v1560
    %v1562 = vsub.f32 1.5, %v1561
    %v1563 = vmul.f32 %v1558, %v1562
    %vm1564 = vweird.f32 %v1527
    %vm1565 = vweird.f32 %v1558
    %vm1566 = vmor %vm1564, %vm1565
    %v1567 = vsel %vm1566, %v1558, %v1563
    %v1568 = vmul.f32 %v1500, %v1537
    %v1569 = vmul.f32 %v1501, %v1547
    %v1570 = vmul.f32 %v1502, %v1557
    %v1571 = vmul.f32 %v1503, %v1567
    %v1573 = vperm.slane %v1481, 0
    %v1575 = vmul.f32 %v1568, %v1573
    %v1576 = vmul.f32 %v1569, %v1573
    %v1577 = vmul.f32 %v1570, %v1573
    %v1578 = vmul.f32 %v1571, %v1573
    %v1580 = vperm.slane %v1483, 0
    %v1582 = vadd.f32 %v1575, %v1580
    %v1583 = vadd.f32 %v1576, %v1580
    %v1584 = vadd.f32 %v1577, %v1580
    %v1585 = vadd.f32 %v1578, %v1580
    %v1586 = vpack.c.bf16 %v1583, %v1582
    %v1587 = vpack.c.bf16 %v1585, %v1584
    %s1588 = scalar_lea.vmem %s3, 64
    %v1589 = vld [vmem:[%s1588] sm:$0xff]
    %v1590 = vld [vmem:[%s1588 + $0x8] sm:$0xff]
    %v1591 = vld [vmem:[%s1588 + $0x10] sm:$0xff]
    %v1592 = vld [vmem:[%s1588 + $0x18] sm:$0xff]
    %v1593 = vld [vmem:[%s1588 + $0x20] sm:$0xff]
    %v1594 = vld [vmem:[%s1588 + $0x28] sm:$0xff]
    %v1595 = vld [vmem:[%s1588 + $0x30] sm:$0xff]
    %v1596 = vld [vmem:[%s1588 + $0x38] sm:$0xff]
    %v1605 = vunpack.c.l.b16 %v1589
    %v1606 = vunpack.c.h.b16 %v1589
    %v1607 = vunpack.c.l.b16 %v1590
    %v1608 = vunpack.c.h.b16 %v1590
    %v1609 = vunpack.c.l.b16 %v1591
    %v1610 = vunpack.c.h.b16 %v1591
    %v1611 = vunpack.c.l.b16 %v1592
    %v1612 = vunpack.c.h.b16 %v1592
    %v1613 = vunpack.c.l.b16 %v1593
    %v1614 = vunpack.c.h.b16 %v1593
    %v1615 = vunpack.c.l.b16 %v1594
    %v1616 = vunpack.c.h.b16 %v1594
    %v1617 = vunpack.c.l.b16 %v1595
    %v1618 = vunpack.c.h.b16 %v1595
    %v1619 = vunpack.c.l.b16 %v1596
    %v1620 = vunpack.c.h.b16 %v1596
    %v1621 = vpack.c.b16 %v1607, %v1605
    %v1622 = vpack.c.b16 %v1608, %v1606
    %v1623 = vpack.c.b16 %v1611, %v1609
    %v1624 = vpack.c.b16 %v1612, %v1610
    %v1625 = vpack.c.b16 %v1615, %v1613
    %v1626 = vpack.c.b16 %v1616, %v1614
    %v1627 = vpack.c.b16 %v1619, %v1617
    %v1628 = vpack.c.b16 %v1620, %v1618
    %v1638 = vsel %vm68, %v1586, 0
    %v1641 = vsel %vm68, %v1587, 0
    %1643 = vmatpush.bf16.msra.mxu0 0
    %1644 = vmatpush.bf16.msra.mxu0 0
    %1645 = vmatpush.bf16.msra.mxu0 0
    %1646 = vmatpush.bf16.msra.mxu0 0
    %1647 = vmatpush.bf16.msra.mxu0 %v1627
    %1648 = vmatpush.bf16.msra.mxu0 %v1625
    %1649 = vmatpush.bf16.msra.mxu0 %v1623
    %1650 = vmatpush.bf16.msra.mxu0 %v1621
    %1651 = vmatmul.bf16.gmra.mxu0 %v1638
    %v1652 = vpop.f32.mrf.mxu0
    %v1653 = vadd.f32 0.0, %v1652
    %v1654 = vpop.f32.mrf.mxu0
    %v1655 = vadd.f32 0.0, %v1654
    %1656 = vmatmul.bf16.gmra.mxu0 %v1641
    %v1657 = vpop.f32.mrf.mxu0
    %v1658 = vadd.f32 0.0, %v1657
    %v1659 = vpop.f32.mrf.mxu0
    %v1660 = vadd.f32 0.0, %v1659
    %1661 = vdwg.mxu0
    %1662 = vmatpush.bf16.msra.mxu0 0
    %1663 = vmatpush.bf16.msra.mxu0 0
    %1664 = vmatpush.bf16.msra.mxu0 0
    %1665 = vmatpush.bf16.msra.mxu0 0
    %1666 = vmatpush.bf16.msra.mxu0 %v1628
    %1667 = vmatpush.bf16.msra.mxu0 %v1626
    %1668 = vmatpush.bf16.msra.mxu0 %v1624
    %1669 = vmatpush.bf16.msra.mxu0 %v1622
    %1670 = vmatmul.bf16.gmra.mxu0 %v1638
    %v1671 = vpop.f32.mrf.mxu0
    %v1672 = vadd.f32 0.0, %v1671
    %v1673 = vpop.f32.mrf.mxu0
    %v1674 = vadd.f32 0.0, %v1673
    %1675 = vmatmul.bf16.gmra.mxu0 %v1641
    %v1676 = vpop.f32.mrf.mxu0
    %v1677 = vadd.f32 0.0, %v1676
    %v1678 = vpop.f32.mrf.mxu0
    %v1679 = vadd.f32 0.0, %v1678
    %1680 = vdwg.mxu0
    %v1681 = vpack.c.bf16 %v1672, %v1653
    %v1682 = vpack.c.bf16 %v1674, %v1655
    %v1683 = vpack.c.bf16 %v1677, %v1658
    %v1684 = vpack.c.bf16 %v1679, %v1660
    %1689 = vrot.lane.b32.xlu0 %v1681, 112
    %v1690 = vpop.permute.xlu0 %1689
    %1691 = vrot.lane.b32.xlu0 %v1682, 112
    %v1692 = vpop.permute.xlu0 %1691
    %1693 = vrot.lane.b32.xlu0 %v1683, 112
    %v1694 = vpop.permute.xlu0 %1693
    %1695 = vrot.lane.b32.xlu0 %v1684, 112
    %v1696 = vpop.permute.xlu0 %1695
    %1697 = vrot.lane.b32.xlu0 %v1681, 96
    %v1698 = vpop.permute.xlu0 %1697
    %1699 = vrot.lane.b32.xlu0 %v1682, 96
    %v1700 = vpop.permute.xlu0 %1699
    %1701 = vrot.lane.b32.xlu0 %v1683, 96
    %v1702 = vpop.permute.xlu0 %1701
    %1703 = vrot.lane.b32.xlu0 %v1684, 96
    %v1704 = vpop.permute.xlu0 %1703
    %1705 = vrot.lane.b32.xlu0 %v1681, 80
    %v1706 = vpop.permute.xlu0 %1705
    %1707 = vrot.lane.b32.xlu0 %v1682, 80
    %v1708 = vpop.permute.xlu0 %1707
    %1709 = vrot.lane.b32.xlu0 %v1683, 80
    %v1710 = vpop.permute.xlu0 %1709
    %1711 = vrot.lane.b32.xlu0 %v1684, 80
    %v1712 = vpop.permute.xlu0 %1711
    %v1713 = vrot.slane %v1681, 4
    %v1714 = vrot.slane %v1682, 4
    %v1715 = vrot.slane %v1683, 4
    %v1716 = vrot.slane %v1684, 4
    %v1717 = vrot.slane %v1690, 4
    %v1718 = vrot.slane %v1692, 4
    %v1719 = vrot.slane %v1694, 4
    %v1720 = vrot.slane %v1696, 4
    %v1721 = vrot.slane %v1698, 4
    %v1722 = vrot.slane %v1700, 4
    %v1723 = vrot.slane %v1702, 4
    %v1724 = vrot.slane %v1704, 4
    %v1725 = vrot.slane %v1706, 4
    %v1726 = vrot.slane %v1708, 4
    %v1727 = vrot.slane %v1710, 4
    %v1728 = vrot.slane %v1712, 4
    %v1729 = vunpack.c.l.b16 %v1681
    %v1730 = vunpack.c.l.b16 %v1682
    %v1731 = vpack.c.b16 %v1730, %v1729
    %1732 = vrot.lane.b32.xlu0 %v1731, 64
    %v1733 = vpop.permute.xlu0 %1732
    %v1735 = vsel %vm325, %v1731, 0
    %v1738 = vsel %vm325, %v1733, 0
    %1740 = vmatpush.bf16.xpose.msra.mxu0 0
    %1741 = vmatpush.bf16.xpose.msra.mxu0 0
    %1742 = vmatpush.bf16.xpose.msra.mxu0 0
    %1743 = vmatpush.bf16.xpose.msra.mxu0 0
    %1744 = vmatpush.bf16.xpose.msra.mxu0 0
    %1745 = vmatpush.bf16.xpose.msra.mxu0 0
    %1746 = vmatpush.bf16.xpose.msra.mxu0 0
    %1747 = vmatpush.bf16.xpose.msra.mxu0 %v1738
    %1748 = vmatmul.bf16.gmra.mxu0 %v1735
    %v1749 = vpop.f32.mrf.mxu0
    %v1750 = vadd.f32 0.0, %v1749
    %v1751 = vpop.f32.mrf.mxu0
    %v1752 = vadd.f32 0.0, %v1751
    %1753 = vdwg.mxu0
    %v1754 = vunpack.c.l.b16 %v1690
    %v1755 = vunpack.c.l.b16 %v1692
    %v1756 = vpack.c.b16 %v1755, %v1754
    %1757 = vrot.lane.b32.xlu0 %v1756, 64
    %v1758 = vpop.permute.xlu0 %1757
    %v1760 = vsel %vm325, %v1756, 0
    %v1763 = vsel %vm325, %v1758, 0
    %1765 = vmatpush.bf16.xpose.msra.mxu0 0
    %1766 = vmatpush.bf16.xpose.msra.mxu0 0
    %1767 = vmatpush.bf16.xpose.msra.mxu0 0
    %1768 = vmatpush.bf16.xpose.msra.mxu0 0
    %1769 = vmatpush.bf16.xpose.msra.mxu0 0
    %1770 = vmatpush.bf16.xpose.msra.mxu0 0
    %1771 = vmatpush.bf16.xpose.msra.mxu0 0
    %1772 = vmatpush.bf16.xpose.msra.mxu0 %v1763
    %1773 = vmatmul.bf16.gmra.mxu0 %v1760
    %v1774 = vpop.f32.mrf.mxu0
    %v1775 = vadd.f32 0.0, %v1774
    %v1776 = vpop.f32.mrf.mxu0
    %v1777 = vadd.f32 0.0, %v1776
    %1778 = vdwg.mxu0
    %v1779 = vunpack.c.l.b16 %v1698
    %v1780 = vunpack.c.l.b16 %v1700
    %v1781 = vpack.c.b16 %v1780, %v1779
    %1782 = vrot.lane.b32.xlu0 %v1781, 64
    %v1783 = vpop.permute.xlu0 %1782
    %v1785 = vsel %vm325, %v1781, 0
    %v1788 = vsel %vm325, %v1783, 0
    %1790 = vmatpush.bf16.xpose.msra.mxu0 0
    %1791 = vmatpush.bf16.xpose.msra.mxu0 0
    %1792 = vmatpush.bf16.xpose.msra.mxu0 0
    %1793 = vmatpush.bf16.xpose.msra.mxu0 0
    %1794 = vmatpush.bf16.xpose.msra.mxu0 0
    %1795 = vmatpush.bf16.xpose.msra.mxu0 0
    %1796 = vmatpush.bf16.xpose.msra.mxu0 0
    %1797 = vmatpush.bf16.xpose.msra.mxu0 %v1788
    %1798 = vmatmul.bf16.gmra.mxu0 %v1785
    %v1799 = vpop.f32.mrf.mxu0
    %v1800 = vadd.f32 0.0, %v1799
    %v1801 = vpop.f32.mrf.mxu0
    %v1802 = vadd.f32 0.0, %v1801
    %1803 = vdwg.mxu0
    %v1804 = vunpack.c.l.b16 %v1706
    %v1805 = vunpack.c.l.b16 %v1708
    %v1806 = vpack.c.b16 %v1805, %v1804
    %1807 = vrot.lane.b32.xlu0 %v1806, 64
    %v1808 = vpop.permute.xlu0 %1807
    %v1810 = vsel %vm325, %v1806, 0
    %v1813 = vsel %vm325, %v1808, 0
    %1815 = vmatpush.bf16.xpose.msra.mxu0 0
    %1816 = vmatpush.bf16.xpose.msra.mxu0 0
    %1817 = vmatpush.bf16.xpose.msra.mxu0 0
    %1818 = vmatpush.bf16.xpose.msra.mxu0 0
    %1819 = vmatpush.bf16.xpose.msra.mxu0 0
    %1820 = vmatpush.bf16.xpose.msra.mxu0 0
    %1821 = vmatpush.bf16.xpose.msra.mxu0 0
    %1822 = vmatpush.bf16.xpose.msra.mxu0 %v1813
    %1823 = vmatmul.bf16.gmra.mxu0 %v1810
    %v1824 = vpop.f32.mrf.mxu0
    %v1825 = vadd.f32 0.0, %v1824
    %v1826 = vpop.f32.mrf.mxu0
    %v1827 = vadd.f32 0.0, %v1826
    %1828 = vdwg.mxu0
    %v1829 = vunpack.c.l.b16 %v1683
    %v1830 = vunpack.c.l.b16 %v1684
    %v1831 = vpack.c.b16 %v1830, %v1829
    %1832 = vrot.lane.b32.xlu0 %v1831, 64
    %v1833 = vpop.permute.xlu0 %1832
    %v1835 = vsel %vm325, %v1831, 0
    %v1838 = vsel %vm325, %v1833, 0
    %1840 = vmatpush.bf16.xpose.msra.mxu0 0
    %1841 = vmatpush.bf16.xpose.msra.mxu0 0
    %1842 = vmatpush.bf16.xpose.msra.mxu0 0
    %1843 = vmatpush.bf16.xpose.msra.mxu0 0
    %1844 = vmatpush.bf16.xpose.msra.mxu0 0
    %1845 = vmatpush.bf16.xpose.msra.mxu0 0
    %1846 = vmatpush.bf16.xpose.msra.mxu0 0
    %1847 = vmatpush.bf16.xpose.msra.mxu0 %v1838
    %1848 = vmatmul.bf16.gmra.mxu0 %v1835
    %v1849 = vpop.f32.mrf.mxu0
    %v1850 = vadd.f32 0.0, %v1849
    %v1851 = vpop.f32.mrf.mxu0
    %v1852 = vadd.f32 0.0, %v1851
    %1853 = vdwg.mxu0
    %v1854 = vunpack.c.l.b16 %v1694
    %v1855 = vunpack.c.l.b16 %v1696
    %v1856 = vpack.c.b16 %v1855, %v1854
    %1857 = vrot.lane.b32.xlu0 %v1856, 64
    %v1858 = vpop.permute.xlu0 %1857
    %v1860 = vsel %vm325, %v1856, 0
    %v1863 = vsel %vm325, %v1858, 0
    %1865 = vmatpush.bf16.xpose.msra.mxu0 0
    %1866 = vmatpush.bf16.xpose.msra.mxu0 0
    %1867 = vmatpush.bf16.xpose.msra.mxu0 0
    %1868 = vmatpush.bf16.xpose.msra.mxu0 0
    %1869 = vmatpush.bf16.xpose.msra.mxu0 0
    %1870 = vmatpush.bf16.xpose.msra.mxu0 0
    %1871 = vmatpush.bf16.xpose.msra.mxu0 0
    %1872 = vmatpush.bf16.xpose.msra.mxu0 %v1863
    %1873 = vmatmul.bf16.gmra.mxu0 %v1860
    %v1874 = vpop.f32.mrf.mxu0
    %v1875 = vadd.f32 0.0, %v1874
    %v1876 = vpop.f32.mrf.mxu0
    %v1877 = vadd.f32 0.0, %v1876
    %1878 = vdwg.mxu0
    %v1879 = vunpack.c.l.b16 %v1702
    %v1880 = vunpack.c.l.b16 %v1704
    %v1881 = vpack.c.b16 %v1880, %v1879
    %1882 = vrot.lane.b32.xlu0 %v1881, 64
    %v1883 = vpop.permute.xlu0 %1882
    %v1885 = vsel %vm325, %v1881, 0
    %v1888 = vsel %vm325, %v1883, 0
    %1890 = vmatpush.bf16.xpose.msra.mxu0 0
    %1891 = vmatpush.bf16.xpose.msra.mxu0 0
    %1892 = vmatpush.bf16.xpose.msra.mxu0 0
    %1893 = vmatpush.bf16.xpose.msra.mxu0 0
    %1894 = vmatpush.bf16.xpose.msra.mxu0 0
    %1895 = vmatpush.bf16.xpose.msra.mxu0 0
    %1896 = vmatpush.bf16.xpose.msra.mxu0 0
    %1897 = vmatpush.bf16.xpose.msra.mxu0 %v1888
    %1898 = vmatmul.bf16.gmra.mxu0 %v1885
    %v1899 = vpop.f32.mrf.mxu0
    %v1900 = vadd.f32 0.0, %v1899
    %v1901 = vpop.f32.mrf.mxu0
    %v1902 = vadd.f32 0.0, %v1901
    %1903 = vdwg.mxu0
    %v1904 = vunpack.c.l.b16 %v1710
    %v1905 = vunpack.c.l.b16 %v1712
    %v1906 = vpack.c.b16 %v1905, %v1904
    %1907 = vrot.lane.b32.xlu0 %v1906, 64
    %v1908 = vpop.permute.xlu0 %1907
    %v1910 = vsel %vm325, %v1906, 0
    %v1913 = vsel %vm325, %v1908, 0
    %1915 = vmatpush.bf16.xpose.msra.mxu0 0
    %1916 = vmatpush.bf16.xpose.msra.mxu0 0
    %1917 = vmatpush.bf16.xpose.msra.mxu0 0
    %1918 = vmatpush.bf16.xpose.msra.mxu0 0
    %1919 = vmatpush.bf16.xpose.msra.mxu0 0
    %1920 = vmatpush.bf16.xpose.msra.mxu0 0
    %1921 = vmatpush.bf16.xpose.msra.mxu0 0
    %1922 = vmatpush.bf16.xpose.msra.mxu0 %v1913
    %1923 = vmatmul.bf16.gmra.mxu0 %v1910
    %v1924 = vpop.f32.mrf.mxu0
    %v1925 = vadd.f32 0.0, %v1924
    %v1926 = vpop.f32.mrf.mxu0
    %v1927 = vadd.f32 0.0, %v1926
    %1928 = vdwg.mxu0
    %v1929 = vmul.f32 %v1750, 0.125
    %v1930 = vmul.f32 %v1752, 0.125
    %v1931 = vmul.f32 %v1775, 0.125
    %v1932 = vmul.f32 %v1777, 0.125
    %v1933 = vmul.f32 %v1800, 0.125
    %v1934 = vmul.f32 %v1802, 0.125
    %v1935 = vmul.f32 %v1825, 0.125
    %v1936 = vmul.f32 %v1827, 0.125
    %v1937 = vmul.f32 %v1850, 0.125
    %v1938 = vmul.f32 %v1852, 0.125
    %v1939 = vmul.f32 %v1875, 0.125
    %v1940 = vmul.f32 %v1877, 0.125
    %v1941 = vmul.f32 %v1900, 0.125
    %v1942 = vmul.f32 %v1902, 0.125
    %v1943 = vmul.f32 %v1925, 0.125
    %v1944 = vmul.f32 %v1927, 0.125
    %v1945 = vsel %vm539, %v1929, -1e+30
    %v1946 = vsel %vm540, %v1930, -1e+30
    %v1947 = vsel %vm539, %v1931, -1e+30
    %v1948 = vsel %vm540, %v1932, -1e+30
    %v1949 = vsel %vm539, %v1933, -1e+30
    %v1950 = vsel %vm540, %v1934, -1e+30
    %v1951 = vsel %vm539, %v1935, -1e+30
    %v1952 = vsel %vm540, %v1936, -1e+30
    %v1953 = vsel %vm539, %v1937, -1e+30
    %v1954 = vsel %vm540, %v1938, -1e+30
    %v1955 = vsel %vm539, %v1939, -1e+30
    %v1956 = vsel %vm540, %v1940, -1e+30
    %v1957 = vsel %vm539, %v1941, -1e+30
    %v1958 = vsel %vm540, %v1942, -1e+30
    %v1959 = vsel %vm539, %v1943, -1e+30
    %v1960 = vsel %vm540, %v1944, -1e+30
    %v1961 = vsel %vm325, %v1945, -inf
    %1962 = vmax.xlane.f32.xlu0 %v1961
    %v1963 = vpop.xlane.xlu0 %1962
    %v1964 = vsel %vm325, %v1946, -inf
    %1965 = vmax.xlane.f32.xlu0 %v1964
    %v1966 = vpop.xlane.xlu0 %1965
    %v1967 = vsel %vm325, %v1947, -inf
    %1968 = vmax.xlane.f32.xlu0 %v1967
    %v1969 = vpop.xlane.xlu0 %1968
    %v1970 = vsel %vm325, %v1948, -inf
    %1971 = vmax.xlane.f32.xlu0 %v1970
    %v1972 = vpop.xlane.xlu0 %1971
    %v1973 = vsel %vm325, %v1949, -inf
    %1974 = vmax.xlane.f32.xlu0 %v1973
    %v1975 = vpop.xlane.xlu0 %1974
    %v1976 = vsel %vm325, %v1950, -inf
    %1977 = vmax.xlane.f32.xlu0 %v1976
    %v1978 = vpop.xlane.xlu0 %1977
    %v1979 = vsel %vm325, %v1951, -inf
    %1980 = vmax.xlane.f32.xlu0 %v1979
    %v1981 = vpop.xlane.xlu0 %1980
    %v1982 = vsel %vm325, %v1952, -inf
    %1983 = vmax.xlane.f32.xlu0 %v1982
    %v1984 = vpop.xlane.xlu0 %1983
    %v1985 = vsel %vm325, %v1953, -inf
    %1986 = vmax.xlane.f32.xlu0 %v1985
    %v1987 = vpop.xlane.xlu0 %1986
    %v1988 = vsel %vm325, %v1954, -inf
    %1989 = vmax.xlane.f32.xlu0 %v1988
    %v1990 = vpop.xlane.xlu0 %1989
    %v1991 = vsel %vm325, %v1955, -inf
    %1992 = vmax.xlane.f32.xlu0 %v1991
    %v1993 = vpop.xlane.xlu0 %1992
    %v1994 = vsel %vm325, %v1956, -inf
    %1995 = vmax.xlane.f32.xlu0 %v1994
    %v1996 = vpop.xlane.xlu0 %1995
    %v1997 = vsel %vm325, %v1957, -inf
    %1998 = vmax.xlane.f32.xlu0 %v1997
    %v1999 = vpop.xlane.xlu0 %1998
    %v2000 = vsel %vm325, %v1958, -inf
    %2001 = vmax.xlane.f32.xlu0 %v2000
    %v2002 = vpop.xlane.xlu0 %2001
    %v2003 = vsel %vm325, %v1959, -inf
    %2004 = vmax.xlane.f32.xlu0 %v2003
    %v2005 = vpop.xlane.xlu0 %2004
    %v2006 = vsel %vm325, %v1960, -inf
    %2007 = vmax.xlane.f32.xlu0 %v2006
    %v2008 = vpop.xlane.xlu0 %2007
    %v2009 = vsub.f32 %v1945, %v1963
    %v2010 = vsub.f32 %v1946, %v1966
    %v2011 = vsub.f32 %v1947, %v1969
    %v2012 = vsub.f32 %v1948, %v1972
    %v2013 = vsub.f32 %v1949, %v1975
    %v2014 = vsub.f32 %v1950, %v1978
    %v2015 = vsub.f32 %v1951, %v1981
    %v2016 = vsub.f32 %v1952, %v1984
    %v2017 = vsub.f32 %v1953, %v1987
    %v2018 = vsub.f32 %v1954, %v1990
    %v2019 = vsub.f32 %v1955, %v1993
    %v2020 = vsub.f32 %v1956, %v1996
    %v2021 = vsub.f32 %v1957, %v1999
    %v2022 = vsub.f32 %v1958, %v2002
    %v2023 = vsub.f32 %v1959, %v2005
    %v2024 = vsub.f32 %v1960, %v2008
    %v2025 = vmul.f32 %v2009, 1.442695
    %v2026 = vpow.pop %v2025
    %v2027 = vmul.f32 %v2010, 1.442695
    %v2028 = vpow.pop %v2027
    %v2029 = vmul.f32 %v2011, 1.442695
    %v2030 = vpow.pop %v2029
    %v2031 = vmul.f32 %v2012, 1.442695
    %v2032 = vpow.pop %v2031
    %v2033 = vmul.f32 %v2013, 1.442695
    %v2034 = vpow.pop %v2033
    %v2035 = vmul.f32 %v2014, 1.442695
    %v2036 = vpow.pop %v2035
    %v2037 = vmul.f32 %v2015, 1.442695
    %v2038 = vpow.pop %v2037
    %v2039 = vmul.f32 %v2016, 1.442695
    %v2040 = vpow.pop %v2039
    %v2041 = vmul.f32 %v2017, 1.442695
    %v2042 = vpow.pop %v2041
    %v2043 = vmul.f32 %v2018, 1.442695
    %v2044 = vpow.pop %v2043
    %v2045 = vmul.f32 %v2019, 1.442695
    %v2046 = vpow.pop %v2045
    %v2047 = vmul.f32 %v2020, 1.442695
    %v2048 = vpow.pop %v2047
    %v2049 = vmul.f32 %v2021, 1.442695
    %v2050 = vpow.pop %v2049
    %v2051 = vmul.f32 %v2022, 1.442695
    %v2052 = vpow.pop %v2051
    %v2053 = vmul.f32 %v2023, 1.442695
    %v2054 = vpow.pop %v2053
    %v2055 = vmul.f32 %v2024, 1.442695
    %v2056 = vpow.pop %v2055
    %v2057 = vsel %vm325, %v2026, 0.0
    %2058 = vadd.xlane.f32.xlu0 %v2057
    %v2059 = vpop.xlane.xlu0 %2058
    %v2060 = vsel %vm325, %v2028, 0.0
    %2061 = vadd.xlane.f32.xlu0 %v2060
    %v2062 = vpop.xlane.xlu0 %2061
    %v2063 = vsel %vm325, %v2030, 0.0
    %2064 = vadd.xlane.f32.xlu0 %v2063
    %v2065 = vpop.xlane.xlu0 %2064
    %v2066 = vsel %vm325, %v2032, 0.0
    %2067 = vadd.xlane.f32.xlu0 %v2066
    %v2068 = vpop.xlane.xlu0 %2067
    %v2069 = vsel %vm325, %v2034, 0.0
    %2070 = vadd.xlane.f32.xlu0 %v2069
    %v2071 = vpop.xlane.xlu0 %2070
    %v2072 = vsel %vm325, %v2036, 0.0
    %2073 = vadd.xlane.f32.xlu0 %v2072
    %v2074 = vpop.xlane.xlu0 %2073
    %v2075 = vsel %vm325, %v2038, 0.0
    %2076 = vadd.xlane.f32.xlu0 %v2075
    %v2077 = vpop.xlane.xlu0 %2076
    %v2078 = vsel %vm325, %v2040, 0.0
    %2079 = vadd.xlane.f32.xlu0 %v2078
    %v2080 = vpop.xlane.xlu0 %2079
    %v2081 = vsel %vm325, %v2042, 0.0
    %2082 = vadd.xlane.f32.xlu0 %v2081
    %v2083 = vpop.xlane.xlu0 %2082
    %v2084 = vsel %vm325, %v2044, 0.0
    %2085 = vadd.xlane.f32.xlu0 %v2084
    %v2086 = vpop.xlane.xlu0 %2085
    %v2087 = vsel %vm325, %v2046, 0.0
    %2088 = vadd.xlane.f32.xlu0 %v2087
    %v2089 = vpop.xlane.xlu0 %2088
    %v2090 = vsel %vm325, %v2048, 0.0
    %2091 = vadd.xlane.f32.xlu0 %v2090
    %v2092 = vpop.xlane.xlu0 %2091
    %v2093 = vsel %vm325, %v2050, 0.0
    %2094 = vadd.xlane.f32.xlu0 %v2093
    %v2095 = vpop.xlane.xlu0 %2094
    %v2096 = vsel %vm325, %v2052, 0.0
    %2097 = vadd.xlane.f32.xlu0 %v2096
    %v2098 = vpop.xlane.xlu0 %2097
    %v2099 = vsel %vm325, %v2054, 0.0
    %2100 = vadd.xlane.f32.xlu0 %v2099
    %v2101 = vpop.xlane.xlu0 %2100
    %v2102 = vsel %vm325, %v2056, 0.0
    %2103 = vadd.xlane.f32.xlu0 %v2102
    %v2104 = vpop.xlane.xlu0 %2103
    %v2105 = vrcp.pop %v2059
    %v2106 = vrcp.pop %v2062
    %v2107 = vrcp.pop %v2065
    %v2108 = vrcp.pop %v2068
    %v2109 = vrcp.pop %v2071
    %v2110 = vrcp.pop %v2074
    %v2111 = vrcp.pop %v2077
    %v2112 = vrcp.pop %v2080
    %v2113 = vrcp.pop %v2083
    %v2114 = vrcp.pop %v2086
    %v2115 = vrcp.pop %v2089
    %v2116 = vrcp.pop %v2092
    %v2117 = vrcp.pop %v2095
    %v2118 = vrcp.pop %v2098
    %v2119 = vrcp.pop %v2101
    %v2120 = vrcp.pop %v2104
    %v2121 = vmul.f32 %v2026, %v2105
    %v2122 = vmul.f32 %v2028, %v2106
    %v2123 = vmul.f32 %v2030, %v2107
    %v2124 = vmul.f32 %v2032, %v2108
    %v2125 = vmul.f32 %v2034, %v2109
    %v2126 = vmul.f32 %v2036, %v2110
    %v2127 = vmul.f32 %v2038, %v2111
    %v2128 = vmul.f32 %v2040, %v2112
    %v2129 = vmul.f32 %v2042, %v2113
    %v2130 = vmul.f32 %v2044, %v2114
    %v2131 = vmul.f32 %v2046, %v2115
    %v2132 = vmul.f32 %v2048, %v2116
    %v2133 = vmul.f32 %v2050, %v2117
    %v2134 = vmul.f32 %v2052, %v2118
    %v2135 = vmul.f32 %v2054, %v2119
    %v2136 = vmul.f32 %v2056, %v2120
    %v2137 = vpack.c.bf16 %v2121, %v2121
    %v2138 = vpack.c.bf16 %v2122, %v2122
    %v2139 = vpack.c.bf16 %v2123, %v2123
    %v2140 = vpack.c.bf16 %v2124, %v2124
    %v2141 = vpack.c.bf16 %v2125, %v2125
    %v2142 = vpack.c.bf16 %v2126, %v2126
    %v2143 = vpack.c.bf16 %v2127, %v2127
    %v2144 = vpack.c.bf16 %v2128, %v2128
    %v2145 = vpack.c.bf16 %v2129, %v2129
    %v2146 = vpack.c.bf16 %v2130, %v2130
    %v2147 = vpack.c.bf16 %v2131, %v2131
    %v2148 = vpack.c.bf16 %v2132, %v2132
    %v2149 = vpack.c.bf16 %v2133, %v2133
    %v2150 = vpack.c.bf16 %v2134, %v2134
    %v2151 = vpack.c.bf16 %v2135, %v2135
    %v2152 = vpack.c.bf16 %v2136, %v2136
    %v2155 = vunpack.c.l.b16 %v2137
    %v2156 = vunpack.c.l.b16 %v2138
    %v2157 = vpack.c.b16 %v2156, %v2155
    %v2158 = vunpack.c.l.b16 %v1713
    %v2159 = vunpack.c.l.b16 %v1714
    %v2160 = vpack.c.b16 %v2159, %v2158
    %v2163 = vsel %vm325, %v2157, 0
    %2165 = vmatpush.bf16.msra.mxu0 0
    %2166 = vmatpush.bf16.msra.mxu0 0
    %2167 = vmatpush.bf16.msra.mxu0 0
    %2168 = vmatpush.bf16.msra.mxu0 0
    %2169 = vmatpush.bf16.msra.mxu0 0
    %2170 = vmatpush.bf16.msra.mxu0 0
    %2171 = vmatpush.bf16.msra.mxu0 0
    %2172 = vmatpush.bf16.msra.mxu0 %v2160
    %2173 = vmatmul.bf16.gmra.mxu0 %v2163
    %v2174 = vpop.f32.mrf.mxu0
    %v2175 = vadd.f32 0.0, %v2174
    %v2176 = vpop.f32.mrf.mxu0
    %v2177 = vadd.f32 0.0, %v2176
    %2178 = vdwg.mxu0
    %v2181 = vunpack.c.l.b16 %v2139
    %v2182 = vunpack.c.l.b16 %v2140
    %v2183 = vpack.c.b16 %v2182, %v2181
    %v2184 = vunpack.c.l.b16 %v1717
    %v2185 = vunpack.c.l.b16 %v1718
    %v2186 = vpack.c.b16 %v2185, %v2184
    %v2189 = vsel %vm325, %v2183, 0
    %2191 = vmatpush.bf16.msra.mxu0 0
    %2192 = vmatpush.bf16.msra.mxu0 0
    %2193 = vmatpush.bf16.msra.mxu0 0
    %2194 = vmatpush.bf16.msra.mxu0 0
    %2195 = vmatpush.bf16.msra.mxu0 0
    %2196 = vmatpush.bf16.msra.mxu0 0
    %2197 = vmatpush.bf16.msra.mxu0 0
    %2198 = vmatpush.bf16.msra.mxu0 %v2186
    %2199 = vmatmul.bf16.gmra.mxu0 %v2189
    %v2200 = vpop.f32.mrf.mxu0
    %v2201 = vadd.f32 0.0, %v2200
    %v2202 = vpop.f32.mrf.mxu0
    %v2203 = vadd.f32 0.0, %v2202
    %2204 = vdwg.mxu0
    %v2207 = vunpack.c.l.b16 %v2141
    %v2208 = vunpack.c.l.b16 %v2142
    %v2209 = vpack.c.b16 %v2208, %v2207
    %v2210 = vunpack.c.l.b16 %v1721
    %v2211 = vunpack.c.l.b16 %v1722
    %v2212 = vpack.c.b16 %v2211, %v2210
    %v2215 = vsel %vm325, %v2209, 0
    %2217 = vmatpush.bf16.msra.mxu0 0
    %2218 = vmatpush.bf16.msra.mxu0 0
    %2219 = vmatpush.bf16.msra.mxu0 0
    %2220 = vmatpush.bf16.msra.mxu0 0
    %2221 = vmatpush.bf16.msra.mxu0 0
    %2222 = vmatpush.bf16.msra.mxu0 0
    %2223 = vmatpush.bf16.msra.mxu0 0
    %2224 = vmatpush.bf16.msra.mxu0 %v2212
    %2225 = vmatmul.bf16.gmra.mxu0 %v2215
    %v2226 = vpop.f32.mrf.mxu0
    %v2227 = vadd.f32 0.0, %v2226
    %v2228 = vpop.f32.mrf.mxu0
    %v2229 = vadd.f32 0.0, %v2228
    %2230 = vdwg.mxu0
    %v2233 = vunpack.c.l.b16 %v2143
    %v2234 = vunpack.c.l.b16 %v2144
    %v2235 = vpack.c.b16 %v2234, %v2233
    %v2236 = vunpack.c.l.b16 %v1725
    %v2237 = vunpack.c.l.b16 %v1726
    %v2238 = vpack.c.b16 %v2237, %v2236
    %v2241 = vsel %vm325, %v2235, 0
    %2243 = vmatpush.bf16.msra.mxu0 0
    %2244 = vmatpush.bf16.msra.mxu0 0
    %2245 = vmatpush.bf16.msra.mxu0 0
    %2246 = vmatpush.bf16.msra.mxu0 0
    %2247 = vmatpush.bf16.msra.mxu0 0
    %2248 = vmatpush.bf16.msra.mxu0 0
    %2249 = vmatpush.bf16.msra.mxu0 0
    %2250 = vmatpush.bf16.msra.mxu0 %v2238
    %2251 = vmatmul.bf16.gmra.mxu0 %v2241
    %v2252 = vpop.f32.mrf.mxu0
    %v2253 = vadd.f32 0.0, %v2252
    %v2254 = vpop.f32.mrf.mxu0
    %v2255 = vadd.f32 0.0, %v2254
    %2256 = vdwg.mxu0
    %v2259 = vunpack.c.l.b16 %v2145
    %v2260 = vunpack.c.l.b16 %v2146
    %v2261 = vpack.c.b16 %v2260, %v2259
    %v2262 = vunpack.c.l.b16 %v1715
    %v2263 = vunpack.c.l.b16 %v1716
    %v2264 = vpack.c.b16 %v2263, %v2262
    %v2267 = vsel %vm325, %v2261, 0
    %2269 = vmatpush.bf16.msra.mxu0 0
    %2270 = vmatpush.bf16.msra.mxu0 0
    %2271 = vmatpush.bf16.msra.mxu0 0
    %2272 = vmatpush.bf16.msra.mxu0 0
    %2273 = vmatpush.bf16.msra.mxu0 0
    %2274 = vmatpush.bf16.msra.mxu0 0
    %2275 = vmatpush.bf16.msra.mxu0 0
    %2276 = vmatpush.bf16.msra.mxu0 %v2264
    %2277 = vmatmul.bf16.gmra.mxu0 %v2267
    %v2278 = vpop.f32.mrf.mxu0
    %v2279 = vadd.f32 0.0, %v2278
    %v2280 = vpop.f32.mrf.mxu0
    %v2281 = vadd.f32 0.0, %v2280
    %2282 = vdwg.mxu0
    %v2285 = vunpack.c.l.b16 %v2147
    %v2286 = vunpack.c.l.b16 %v2148
    %v2287 = vpack.c.b16 %v2286, %v2285
    %v2288 = vunpack.c.l.b16 %v1719
    %v2289 = vunpack.c.l.b16 %v1720
    %v2290 = vpack.c.b16 %v2289, %v2288
    %v2293 = vsel %vm325, %v2287, 0
    %2295 = vmatpush.bf16.msra.mxu0 0
    %2296 = vmatpush.bf16.msra.mxu0 0
    %2297 = vmatpush.bf16.msra.mxu0 0
    %2298 = vmatpush.bf16.msra.mxu0 0
    %2299 = vmatpush.bf16.msra.mxu0 0
    %2300 = vmatpush.bf16.msra.mxu0 0
    %2301 = vmatpush.bf16.msra.mxu0 0
    %2302 = vmatpush.bf16.msra.mxu0 %v2290
    %2303 = vmatmul.bf16.gmra.mxu0 %v2293
    %v2304 = vpop.f32.mrf.mxu0
    %v2305 = vadd.f32 0.0, %v2304
    %v2306 = vpop.f32.mrf.mxu0
    %v2307 = vadd.f32 0.0, %v2306
    %2308 = vdwg.mxu0
    %v2311 = vunpack.c.l.b16 %v2149
    %v2312 = vunpack.c.l.b16 %v2150
    %v2313 = vpack.c.b16 %v2312, %v2311
    %v2314 = vunpack.c.l.b16 %v1723
    %v2315 = vunpack.c.l.b16 %v1724
    %v2316 = vpack.c.b16 %v2315, %v2314
    %v2319 = vsel %vm325, %v2313, 0
    %2321 = vmatpush.bf16.msra.mxu0 0
    %2322 = vmatpush.bf16.msra.mxu0 0
    %2323 = vmatpush.bf16.msra.mxu0 0
    %2324 = vmatpush.bf16.msra.mxu0 0
    %2325 = vmatpush.bf16.msra.mxu0 0
    %2326 = vmatpush.bf16.msra.mxu0 0
    %2327 = vmatpush.bf16.msra.mxu0 0
    %2328 = vmatpush.bf16.msra.mxu0 %v2316
    %2329 = vmatmul.bf16.gmra.mxu0 %v2319
    %v2330 = vpop.f32.mrf.mxu0
    %v2331 = vadd.f32 0.0, %v2330
    %v2332 = vpop.f32.mrf.mxu0
    %v2333 = vadd.f32 0.0, %v2332
    %2334 = vdwg.mxu0
    %v2337 = vunpack.c.l.b16 %v2151
    %v2338 = vunpack.c.l.b16 %v2152
    %v2339 = vpack.c.b16 %v2338, %v2337
    %v2340 = vunpack.c.l.b16 %v1727
    %v2341 = vunpack.c.l.b16 %v1728
    %v2342 = vpack.c.b16 %v2341, %v2340
    %v2345 = vsel %vm325, %v2339, 0
    %2347 = vmatpush.bf16.msra.mxu0 0
    %2348 = vmatpush.bf16.msra.mxu0 0
    %2349 = vmatpush.bf16.msra.mxu0 0
    %2350 = vmatpush.bf16.msra.mxu0 0
    %2351 = vmatpush.bf16.msra.mxu0 0
    %2352 = vmatpush.bf16.msra.mxu0 0
    %2353 = vmatpush.bf16.msra.mxu0 0
    %2354 = vmatpush.bf16.msra.mxu0 %v2342
    %2355 = vmatmul.bf16.gmra.mxu0 %v2345
    %v2356 = vpop.f32.mrf.mxu0
    %v2357 = vadd.f32 0.0, %v2356
    %v2358 = vpop.f32.mrf.mxu0
    %v2359 = vadd.f32 0.0, %v2358
    %2360 = vdwg.mxu0
    %2365 = vrot.lane.b32.xlu0 %v2201, 16
    %v2366 = vpop.permute.xlu0 %2365
    %2367 = vrot.lane.b32.xlu0 %v2203, 16
    %v2368 = vpop.permute.xlu0 %2367
    %2369 = vrot.lane.b32.xlu0 %v2305, 16
    %v2370 = vpop.permute.xlu0 %2369
    %2371 = vrot.lane.b32.xlu0 %v2307, 16
    %v2372 = vpop.permute.xlu0 %2371
    %2381 = vrot.lane.b32.xlu0 %v2227, 32
    %v2382 = vpop.permute.xlu0 %2381
    %2383 = vrot.lane.b32.xlu0 %v2229, 32
    %v2384 = vpop.permute.xlu0 %2383
    %2385 = vrot.lane.b32.xlu0 %v2331, 32
    %v2386 = vpop.permute.xlu0 %2385
    %2387 = vrot.lane.b32.xlu0 %v2333, 32
    %v2388 = vpop.permute.xlu0 %2387
    %2397 = vrot.lane.b32.xlu0 %v2253, 48
    %v2398 = vpop.permute.xlu0 %2397
    %2399 = vrot.lane.b32.xlu0 %v2255, 48
    %v2400 = vpop.permute.xlu0 %2399
    %2401 = vrot.lane.b32.xlu0 %v2357, 48
    %v2402 = vpop.permute.xlu0 %2401
    %2403 = vrot.lane.b32.xlu0 %v2359, 48
    %v2404 = vpop.permute.xlu0 %2403
    %v2409 = vsel %vm325, %v2175, %v2366
    %v2410 = vsel %vm325, %v2177, %v2368
    %v2411 = vsel %vm325, %v2279, %v2370
    %v2412 = vsel %vm325, %v2281, %v2372
    %v2413 = vsel %vm1009, %v2409, %v2382
    %v2414 = vsel %vm1009, %v2410, %v2384
    %v2415 = vsel %vm1009, %v2411, %v2386
    %v2416 = vsel %vm1009, %v2412, %v2388
    %v2417 = vsel %vm1014, %v2413, %v2398
    %v2418 = vsel %vm1014, %v2414, %v2400
    %v2419 = vsel %vm1014, %v2415, %v2402
    %v2420 = vsel %vm1014, %v2416, %v2404
    %v2421 = vpack.c.bf16 %v2418, %v2417
    %v2422 = vpack.c.bf16 %v2420, %v2419
    %s2423 = scalar_lea.vmem %s4, 32
    %v2424 = vld [vmem:[%s2423] sm:$0xf]
    %v2425 = vld [vmem:[%s2423 + $0x4] sm:$0xf]
    %v2426 = vld [vmem:[%s2423 + $0x8] sm:$0xf]
    %v2427 = vld [vmem:[%s2423 + $0xc] sm:$0xf]
    %v2428 = vld [vmem:[%s2423 + $0x10] sm:$0xf]
    %v2429 = vld [vmem:[%s2423 + $0x14] sm:$0xf]
    %v2430 = vld [vmem:[%s2423 + $0x18] sm:$0xf]
    %v2431 = vld [vmem:[%s2423 + $0x1c] sm:$0xf]
    %s2432 = scalar_lea.vmem %s5, 1
    %v2433 = vld [vmem:[%s2432] sm:$0x1]
    %v2435 = vperm.slane %v2433, 0
    %v2445 = vunpack.c.l.b16 %v2424
    %v2446 = vunpack.c.l.b16 %v2425
    %v2447 = vunpack.c.l.b16 %v2426
    %v2448 = vunpack.c.l.b16 %v2427
    %v2449 = vunpack.c.l.b16 %v2428
    %v2450 = vunpack.c.l.b16 %v2429
    %v2451 = vunpack.c.l.b16 %v2430
    %v2452 = vunpack.c.l.b16 %v2431
    %v2453 = vpack.c.b16 %v2446, %v2445
    %v2454 = vpack.c.b16 %v2448, %v2447
    %v2455 = vpack.c.b16 %v2450, %v2449
    %v2456 = vpack.c.b16 %v2452, %v2451
    %v2462 = vsel %vm68, %v2421, 0
    %v2465 = vsel %vm68, %v2422, 0
    %2467 = vmatpush.bf16.msra.mxu0 0
    %2468 = vmatpush.bf16.msra.mxu0 0
    %2469 = vmatpush.bf16.msra.mxu0 0
    %2470 = vmatpush.bf16.msra.mxu0 0
    %2471 = vmatpush.bf16.msra.mxu0 %v2456
    %2472 = vmatpush.bf16.msra.mxu0 %v2455
    %2473 = vmatpush.bf16.msra.mxu0 %v2454
    %2474 = vmatpush.bf16.msra.mxu0 %v2453
    %2475 = vmatmul.bf16.gmra.mxu0 %v2462
    %v2476 = vpop.f32.mrf.mxu0
    %v2477 = vadd.f32 %v2435, %v2476
    %v2478 = vpop.f32.mrf.mxu0
    %v2479 = vadd.f32 %v2435, %v2478
    %2480 = vmatmul.bf16.gmra.mxu0 %v2465
    %v2481 = vpop.f32.mrf.mxu0
    %v2482 = vadd.f32 %v2435, %v2481
    %v2483 = vpop.f32.mrf.mxu0
    %v2484 = vadd.f32 %v2435, %v2483
    %2485 = vdwg.mxu0
    %v2486 = vadd.f32 %v1476, %v2477
    %v2487 = vadd.f32 %v1477, %v2479
    %v2488 = vadd.f32 %v1478, %v2482
    %v2489 = vadd.f32 %v1479, %v2484
    %s2490 = scalar_lea.vmem %s6, 1
    %v2491 = vld [vmem:[%s2490] sm:$0x1]
    %s2492 = scalar_lea.vmem %s7, 1
    %v2493 = vld [vmem:[%s2492] sm:$0x1]
    %v2494 = vsel %vm68, %v2486, 0.0
    %2495 = vadd.xlane.f32.xlu0 %v2494
    %v2496 = vpop.xlane.xlu0 %2495
    %v2497 = vsel %vm68, %v2487, 0.0
    %2498 = vadd.xlane.f32.xlu0 %v2497
    %v2499 = vpop.xlane.xlu0 %2498
    %v2500 = vsel %vm68, %v2488, 0.0
    %2501 = vadd.xlane.f32.xlu0 %v2500
    %v2502 = vpop.xlane.xlu0 %2501
    %v2503 = vsel %vm68, %v2489, 0.0
    %2504 = vadd.xlane.f32.xlu0 %v2503
    %v2505 = vpop.xlane.xlu0 %2504
    %v2506 = vmul.f32 %v2496, %v87
    %v2507 = vmul.f32 %v2499, %v87
    %v2508 = vmul.f32 %v2502, %v87
    %v2509 = vmul.f32 %v2505, %v87
    %v2510 = vsub.f32 %v2486, %v2506
    %v2511 = vsub.f32 %v2487, %v2507
    %v2512 = vsub.f32 %v2488, %v2508
    %v2513 = vsub.f32 %v2489, %v2509
    %v2514 = vmul.f32 %v2510, %v2510
    %v2515 = vmul.f32 %v2511, %v2511
    %v2516 = vmul.f32 %v2512, %v2512
    %v2517 = vmul.f32 %v2513, %v2513
    %v2518 = vsel %vm68, %v2514, 0.0
    %2519 = vadd.xlane.f32.xlu0 %v2518
    %v2520 = vpop.xlane.xlu0 %2519
    %v2521 = vsel %vm68, %v2515, 0.0
    %2522 = vadd.xlane.f32.xlu0 %v2521
    %v2523 = vpop.xlane.xlu0 %2522
    %v2524 = vsel %vm68, %v2516, 0.0
    %2525 = vadd.xlane.f32.xlu0 %v2524
    %v2526 = vpop.xlane.xlu0 %2525
    %v2527 = vsel %vm68, %v2517, 0.0
    %2528 = vadd.xlane.f32.xlu0 %v2527
    %v2529 = vpop.xlane.xlu0 %2528
    %v2530 = vmul.f32 %v2520, %v87
    %v2531 = vmul.f32 %v2523, %v87
    %v2532 = vmul.f32 %v2526, %v87
    %v2533 = vmul.f32 %v2529, %v87
    %v2534 = vadd.f32 %v2530, 1e-05
    %v2535 = vadd.f32 %v2531, 1e-05
    %v2536 = vadd.f32 %v2532, 1e-05
    %v2537 = vadd.f32 %v2533, 1e-05
    %v2538 = vrsqrt.pop %v2534
    %v2539 = vmul.f32 %v2538, %v2534
    %v2540 = vmul.f32 %v2539, %v2538
    %v2541 = vmul.f32 0.5, %v2540
    %v2542 = vsub.f32 1.5, %v2541
    %v2543 = vmul.f32 %v2538, %v2542
    %vm2544 = vweird.f32 %v2534
    %vm2545 = vweird.f32 %v2538
    %vm2546 = vmor %vm2544, %vm2545
    %v2547 = vsel %vm2546, %v2538, %v2543
    %v2548 = vrsqrt.pop %v2535
    %v2549 = vmul.f32 %v2548, %v2535
    %v2550 = vmul.f32 %v2549, %v2548
    %v2551 = vmul.f32 0.5, %v2550
    %v2552 = vsub.f32 1.5, %v2551
    %v2553 = vmul.f32 %v2548, %v2552
    %vm2554 = vweird.f32 %v2535
    %vm2555 = vweird.f32 %v2548
    %vm2556 = vmor %vm2554, %vm2555
    %v2557 = vsel %vm2556, %v2548, %v2553
    %v2558 = vrsqrt.pop %v2536
    %v2559 = vmul.f32 %v2558, %v2536
    %v2560 = vmul.f32 %v2559, %v2558
    %v2561 = vmul.f32 0.5, %v2560
    %v2562 = vsub.f32 1.5, %v2561
    %v2563 = vmul.f32 %v2558, %v2562
    %vm2564 = vweird.f32 %v2536
    %vm2565 = vweird.f32 %v2558
    %vm2566 = vmor %vm2564, %vm2565
    %v2567 = vsel %vm2566, %v2558, %v2563
    %v2568 = vrsqrt.pop %v2537
    %v2569 = vmul.f32 %v2568, %v2537
    %v2570 = vmul.f32 %v2569, %v2568
    %v2571 = vmul.f32 0.5, %v2570
    %v2572 = vsub.f32 1.5, %v2571
    %v2573 = vmul.f32 %v2568, %v2572
    %vm2574 = vweird.f32 %v2537
    %vm2575 = vweird.f32 %v2568
    %vm2576 = vmor %vm2574, %vm2575
    %v2577 = vsel %vm2576, %v2568, %v2573
    %v2578 = vmul.f32 %v2510, %v2547
    %v2579 = vmul.f32 %v2511, %v2557
    %v2580 = vmul.f32 %v2512, %v2567
    %v2581 = vmul.f32 %v2513, %v2577
    %v2583 = vperm.slane %v2491, 0
    %v2585 = vmul.f32 %v2578, %v2583
    %v2586 = vmul.f32 %v2579, %v2583
    %v2587 = vmul.f32 %v2580, %v2583
    %v2588 = vmul.f32 %v2581, %v2583
    %v2590 = vperm.slane %v2493, 0
    %v2592 = vadd.f32 %v2585, %v2590
    %v2593 = vadd.f32 %v2586, %v2590
    %v2594 = vadd.f32 %v2587, %v2590
    %v2595 = vadd.f32 %v2588, %v2590
    %v2596 = vpack.c.bf16 %v2593, %v2592
    %v2597 = vpack.c.bf16 %v2595, %v2594
    %s2598 = scalar_lea.vmem %s8, 64
    %v2599 = vld [vmem:[%s2598] sm:$0xff]
    %v2600 = vld [vmem:[%s2598 + $0x8] sm:$0xff]
    %v2601 = vld [vmem:[%s2598 + $0x10] sm:$0xff]
    %v2602 = vld [vmem:[%s2598 + $0x18] sm:$0xff]
    %v2603 = vld [vmem:[%s2598 + $0x20] sm:$0xff]
    %v2604 = vld [vmem:[%s2598 + $0x28] sm:$0xff]
    %v2605 = vld [vmem:[%s2598 + $0x30] sm:$0xff]
    %v2606 = vld [vmem:[%s2598 + $0x38] sm:$0xff]
    %s2607 = scalar_lea.vmem %s9, 2
    %v2608 = vld [vmem:[%s2607] sm:$0x3]
    %v2610 = vperm.slane %v2608, 0
    %v2611 = vperm.slane %v2608, 1
    %v2622 = vunpack.c.l.b16 %v2599
    %v2623 = vunpack.c.h.b16 %v2599
    %v2624 = vunpack.c.l.b16 %v2600
    %v2625 = vunpack.c.h.b16 %v2600
    %v2626 = vunpack.c.l.b16 %v2601
    %v2627 = vunpack.c.h.b16 %v2601
    %v2628 = vunpack.c.l.b16 %v2602
    %v2629 = vunpack.c.h.b16 %v2602
    %v2630 = vunpack.c.l.b16 %v2603
    %v2631 = vunpack.c.h.b16 %v2603
    %v2632 = vunpack.c.l.b16 %v2604
    %v2633 = vunpack.c.h.b16 %v2604
    %v2634 = vunpack.c.l.b16 %v2605
    %v2635 = vunpack.c.h.b16 %v2605
    %v2636 = vunpack.c.l.b16 %v2606
    %v2637 = vunpack.c.h.b16 %v2606
    %v2638 = vpack.c.b16 %v2624, %v2622
    %v2639 = vpack.c.b16 %v2625, %v2623
    %v2640 = vpack.c.b16 %v2628, %v2626
    %v2641 = vpack.c.b16 %v2629, %v2627
    %v2642 = vpack.c.b16 %v2632, %v2630
    %v2643 = vpack.c.b16 %v2633, %v2631
    %v2644 = vpack.c.b16 %v2636, %v2634
    %v2645 = vpack.c.b16 %v2637, %v2635
    %v2655 = vsel %vm68, %v2596, 0
    %v2658 = vsel %vm68, %v2597, 0
    %2660 = vmatpush.bf16.msra.mxu0 0
    %2661 = vmatpush.bf16.msra.mxu0 0
    %2662 = vmatpush.bf16.msra.mxu0 0
    %2663 = vmatpush.bf16.msra.mxu0 0
    %2664 = vmatpush.bf16.msra.mxu0 %v2644
    %2665 = vmatpush.bf16.msra.mxu0 %v2642
    %2666 = vmatpush.bf16.msra.mxu0 %v2640
    %2667 = vmatpush.bf16.msra.mxu0 %v2638
    %2668 = vmatmul.bf16.gmra.mxu0 %v2655
    %v2669 = vpop.f32.mrf.mxu0
    %v2670 = vadd.f32 %v2610, %v2669
    %v2671 = vpop.f32.mrf.mxu0
    %v2672 = vadd.f32 %v2610, %v2671
    %2673 = vmatmul.bf16.gmra.mxu0 %v2658
    %v2674 = vpop.f32.mrf.mxu0
    %v2675 = vadd.f32 %v2610, %v2674
    %v2676 = vpop.f32.mrf.mxu0
    %v2677 = vadd.f32 %v2610, %v2676
    %2678 = vdwg.mxu0
    %2679 = vmatpush.bf16.msra.mxu0 0
    %2680 = vmatpush.bf16.msra.mxu0 0
    %2681 = vmatpush.bf16.msra.mxu0 0
    %2682 = vmatpush.bf16.msra.mxu0 0
    %2683 = vmatpush.bf16.msra.mxu0 %v2645
    %2684 = vmatpush.bf16.msra.mxu0 %v2643
    %2685 = vmatpush.bf16.msra.mxu0 %v2641
    %2686 = vmatpush.bf16.msra.mxu0 %v2639
    %2687 = vmatmul.bf16.gmra.mxu0 %v2655
    %v2688 = vpop.f32.mrf.mxu0
    %v2689 = vadd.f32 %v2611, %v2688
    %v2690 = vpop.f32.mrf.mxu0
    %v2691 = vadd.f32 %v2611, %v2690
    %2692 = vmatmul.bf16.gmra.mxu0 %v2658
    %v2693 = vpop.f32.mrf.mxu0
    %v2694 = vadd.f32 %v2611, %v2693
    %v2695 = vpop.f32.mrf.mxu0
    %v2696 = vadd.f32 %v2611, %v2695
    %2697 = vdwg.mxu0
    %v2698 = vmax.f32 %v2670, 0.0
    %v2699 = vmax.f32 %v2689, 0.0
    %v2700 = vmax.f32 %v2672, 0.0
    %v2701 = vmax.f32 %v2691, 0.0
    %v2702 = vmax.f32 %v2675, 0.0
    %v2703 = vmax.f32 %v2694, 0.0
    %v2704 = vmax.f32 %v2677, 0.0
    %v2705 = vmax.f32 %v2696, 0.0
    %v2706 = vpack.c.bf16 %v2700, %v2698
    %v2707 = vpack.c.bf16 %v2701, %v2699
    %v2708 = vpack.c.bf16 %v2704, %v2702
    %v2709 = vpack.c.bf16 %v2705, %v2703
    %s2710 = scalar_lea.vmem %s10, 128
    %v2711 = vld [vmem:[%s2710] sm:$0xf]
    %v2712 = vld [vmem:[%s2710 + $0x4] sm:$0xf]
    %v2713 = vld [vmem:[%s2710 + $0x8] sm:$0xf]
    %v2714 = vld [vmem:[%s2710 + $0xc] sm:$0xf]
    %v2715 = vld [vmem:[%s2710 + $0x10] sm:$0xf]
    %v2716 = vld [vmem:[%s2710 + $0x14] sm:$0xf]
    %v2717 = vld [vmem:[%s2710 + $0x18] sm:$0xf]
    %v2718 = vld [vmem:[%s2710 + $0x1c] sm:$0xf]
    %v2719 = vld [vmem:[%s2710 + $0x20] sm:$0xf]
    %v2720 = vld [vmem:[%s2710 + $0x24] sm:$0xf]
    %v2721 = vld [vmem:[%s2710 + $0x28] sm:$0xf]
    %v2722 = vld [vmem:[%s2710 + $0x2c] sm:$0xf]
    %v2723 = vld [vmem:[%s2710 + $0x30] sm:$0xf]
    %v2724 = vld [vmem:[%s2710 + $0x34] sm:$0xf]
    %v2725 = vld [vmem:[%s2710 + $0x38] sm:$0xf]
    %v2726 = vld [vmem:[%s2710 + $0x3c] sm:$0xf]
    %v2727 = vld [vmem:[%s2710 + $0x40] sm:$0xf]
    %v2728 = vld [vmem:[%s2710 + $0x44] sm:$0xf]
    %v2729 = vld [vmem:[%s2710 + $0x48] sm:$0xf]
    %v2730 = vld [vmem:[%s2710 + $0x4c] sm:$0xf]
    %v2731 = vld [vmem:[%s2710 + $0x50] sm:$0xf]
    %v2732 = vld [vmem:[%s2710 + $0x54] sm:$0xf]
    %v2733 = vld [vmem:[%s2710 + $0x58] sm:$0xf]
    %v2734 = vld [vmem:[%s2710 + $0x5c] sm:$0xf]
    %v2735 = vld [vmem:[%s2710 + $0x60] sm:$0xf]
    %v2736 = vld [vmem:[%s2710 + $0x64] sm:$0xf]
    %v2737 = vld [vmem:[%s2710 + $0x68] sm:$0xf]
    %v2738 = vld [vmem:[%s2710 + $0x6c] sm:$0xf]
    %v2739 = vld [vmem:[%s2710 + $0x70] sm:$0xf]
    %v2740 = vld [vmem:[%s2710 + $0x74] sm:$0xf]
    %v2741 = vld [vmem:[%s2710 + $0x78] sm:$0xf]
    %v2742 = vld [vmem:[%s2710 + $0x7c] sm:$0xf]
    %v2775 = vunpack.c.l.b16 %v2711
    %v2776 = vunpack.c.l.b16 %v2712
    %v2777 = vunpack.c.l.b16 %v2713
    %v2778 = vunpack.c.l.b16 %v2714
    %v2779 = vunpack.c.l.b16 %v2715
    %v2780 = vunpack.c.l.b16 %v2716
    %v2781 = vunpack.c.l.b16 %v2717
    %v2782 = vunpack.c.l.b16 %v2718
    %v2783 = vunpack.c.l.b16 %v2719
    %v2784 = vunpack.c.l.b16 %v2720
    %v2785 = vunpack.c.l.b16 %v2721
    %v2786 = vunpack.c.l.b16 %v2722
    %v2787 = vunpack.c.l.b16 %v2723
    %v2788 = vunpack.c.l.b16 %v2724
    %v2789 = vunpack.c.l.b16 %v2725
    %v2790 = vunpack.c.l.b16 %v2726
    %v2791 = vunpack.c.l.b16 %v2727
    %v2792 = vunpack.c.l.b16 %v2728
    %v2793 = vunpack.c.l.b16 %v2729
    %v2794 = vunpack.c.l.b16 %v2730
    %v2795 = vunpack.c.l.b16 %v2731
    %v2796 = vunpack.c.l.b16 %v2732
    %v2797 = vunpack.c.l.b16 %v2733
    %v2798 = vunpack.c.l.b16 %v2734
    %v2799 = vunpack.c.l.b16 %v2735
    %v2800 = vunpack.c.l.b16 %v2736
    %v2801 = vunpack.c.l.b16 %v2737
    %v2802 = vunpack.c.l.b16 %v2738
    %v2803 = vunpack.c.l.b16 %v2739
    %v2804 = vunpack.c.l.b16 %v2740
    %v2805 = vunpack.c.l.b16 %v2741
    %v2806 = vunpack.c.l.b16 %v2742
    %v2807 = vpack.c.b16 %v2776, %v2775
    %v2808 = vpack.c.b16 %v2778, %v2777
    %v2809 = vpack.c.b16 %v2780, %v2779
    %v2810 = vpack.c.b16 %v2782, %v2781
    %v2811 = vpack.c.b16 %v2784, %v2783
    %v2812 = vpack.c.b16 %v2786, %v2785
    %v2813 = vpack.c.b16 %v2788, %v2787
    %v2814 = vpack.c.b16 %v2790, %v2789
    %v2815 = vpack.c.b16 %v2792, %v2791
    %v2816 = vpack.c.b16 %v2794, %v2793
    %v2817 = vpack.c.b16 %v2796, %v2795
    %v2818 = vpack.c.b16 %v2798, %v2797
    %v2819 = vpack.c.b16 %v2800, %v2799
    %v2820 = vpack.c.b16 %v2802, %v2801
    %v2821 = vpack.c.b16 %v2804, %v2803
    %v2822 = vpack.c.b16 %v2806, %v2805
    %2839 = vmatpush.bf16.msra.mxu0 %v2814
    %2840 = vmatpush.bf16.msra.mxu0 %v2813
    %2841 = vmatpush.bf16.msra.mxu0 %v2812
    %2842 = vmatpush.bf16.msra.mxu0 %v2811
    %2843 = vmatpush.bf16.msra.mxu0 %v2810
    %2844 = vmatpush.bf16.msra.mxu0 %v2809
    %2845 = vmatpush.bf16.msra.mxu0 %v2808
    %2846 = vmatpush.bf16.msra.mxu0 %v2807
    %2847 = vmatmul.bf16.gmra.mxu0 %v2706
    %v2848 = vpop.f32.mrf.mxu0
    %v2849 = vadd.f32 0.0, %v2848
    %v2850 = vpop.f32.mrf.mxu0
    %v2851 = vadd.f32 0.0, %v2850
    %2852 = vmatmul.bf16.gmra.mxu0 %v2708
    %v2853 = vpop.f32.mrf.mxu0
    %v2854 = vadd.f32 0.0, %v2853
    %v2855 = vpop.f32.mrf.mxu0
    %v2856 = vadd.f32 0.0, %v2855
    %2857 = vdwg.mxu0
    %2858 = vmatpush.bf16.msra.mxu0 %v2822
    %2859 = vmatpush.bf16.msra.mxu0 %v2821
    %2860 = vmatpush.bf16.msra.mxu0 %v2820
    %2861 = vmatpush.bf16.msra.mxu0 %v2819
    %2862 = vmatpush.bf16.msra.mxu0 %v2818
    %2863 = vmatpush.bf16.msra.mxu0 %v2817
    %2864 = vmatpush.bf16.msra.mxu0 %v2816
    %2865 = vmatpush.bf16.msra.mxu0 %v2815
    %2866 = vmatmul.bf16.gmra.mxu0 %v2707
    %v2867 = vpop.f32.mrf.mxu0
    %v2868 = vadd.f32 %v2849, %v2867
    %v2869 = vpop.f32.mrf.mxu0
    %v2870 = vadd.f32 %v2851, %v2869
    %2871 = vmatmul.bf16.gmra.mxu0 %v2709
    %v2872 = vpop.f32.mrf.mxu0
    %v2873 = vadd.f32 %v2854, %v2872
    %v2874 = vpop.f32.mrf.mxu0
    %v2875 = vadd.f32 %v2856, %v2874
    %2876 = vdwg.mxu0
    %v2877 = vadd.f32 %v2486, %v2868
    %v2878 = vadd.f32 %v2487, %v2870
    %v2879 = vadd.f32 %v2488, %v2873
    %v2880 = vadd.f32 %v2489, %v2875
    %s2881 = scalar_lea.vmem %s11, 1
    %v2882 = vld [vmem:[%s2881] sm:$0x1]
    %v2884 = vperm.slane %v2882, 0
    %v2886 = vadd.f32 %v2877, %v2884
    %v2887 = vadd.f32 %v2878, %v2884
    %v2888 = vadd.f32 %v2879, %v2884
    %v2889 = vadd.f32 %v2880, %v2884
    %v2890 = vld [vmem:[%s12] sm:$0x1]
    %v2891 = vld [vmem:[%s13] sm:$0x1]
    %v2892 = vsel %vm68, %v2886, 0.0
    %2893 = vadd.xlane.f32.xlu0 %v2892
    %v2894 = vpop.xlane.xlu0 %2893
    %v2895 = vsel %vm68, %v2887, 0.0
    %2896 = vadd.xlane.f32.xlu0 %v2895
    %v2897 = vpop.xlane.xlu0 %2896
    %v2898 = vsel %vm68, %v2888, 0.0
    %2899 = vadd.xlane.f32.xlu0 %v2898
    %v2900 = vpop.xlane.xlu0 %2899
    %v2901 = vsel %vm68, %v2889, 0.0
    %2902 = vadd.xlane.f32.xlu0 %v2901
    %v2903 = vpop.xlane.xlu0 %2902
    %v2904 = vmul.f32 %v2894, %v87
    %v2905 = vmul.f32 %v2897, %v87
    %v2906 = vmul.f32 %v2900, %v87
    %v2907 = vmul.f32 %v2903, %v87
    %v2908 = vsub.f32 %v2886, %v2904
    %v2909 = vsub.f32 %v2887, %v2905
    %v2910 = vsub.f32 %v2888, %v2906
    %v2911 = vsub.f32 %v2889, %v2907
    %v2912 = vmul.f32 %v2908, %v2908
    %v2913 = vmul.f32 %v2909, %v2909
    %v2914 = vmul.f32 %v2910, %v2910
    %v2915 = vmul.f32 %v2911, %v2911
    %v2916 = vsel %vm68, %v2912, 0.0
    %2917 = vadd.xlane.f32.xlu0 %v2916
    %v2918 = vpop.xlane.xlu0 %2917
    %v2919 = vsel %vm68, %v2913, 0.0
    %2920 = vadd.xlane.f32.xlu0 %v2919
    %v2921 = vpop.xlane.xlu0 %2920
    %v2922 = vsel %vm68, %v2914, 0.0
    %2923 = vadd.xlane.f32.xlu0 %v2922
    %v2924 = vpop.xlane.xlu0 %2923
    %v2925 = vsel %vm68, %v2915, 0.0
    %2926 = vadd.xlane.f32.xlu0 %v2925
    %v2927 = vpop.xlane.xlu0 %2926
    %v2928 = vmul.f32 %v2918, %v87
    %v2929 = vmul.f32 %v2921, %v87
    %v2930 = vmul.f32 %v2924, %v87
    %v2931 = vmul.f32 %v2927, %v87
    %v2932 = vadd.f32 %v2928, 1e-05
    %v2933 = vadd.f32 %v2929, 1e-05
    %v2934 = vadd.f32 %v2930, 1e-05
    %v2935 = vadd.f32 %v2931, 1e-05
    %v2936 = vrsqrt.pop %v2932
    %v2937 = vmul.f32 %v2936, %v2932
    %v2938 = vmul.f32 %v2937, %v2936
    %v2939 = vmul.f32 0.5, %v2938
    %v2940 = vsub.f32 1.5, %v2939
    %v2941 = vmul.f32 %v2936, %v2940
    %vm2942 = vweird.f32 %v2932
    %vm2943 = vweird.f32 %v2936
    %vm2944 = vmor %vm2942, %vm2943
    %v2945 = vsel %vm2944, %v2936, %v2941
    %v2946 = vrsqrt.pop %v2933
    %v2947 = vmul.f32 %v2946, %v2933
    %v2948 = vmul.f32 %v2947, %v2946
    %v2949 = vmul.f32 0.5, %v2948
    %v2950 = vsub.f32 1.5, %v2949
    %v2951 = vmul.f32 %v2946, %v2950
    %vm2952 = vweird.f32 %v2933
    %vm2953 = vweird.f32 %v2946
    %vm2954 = vmor %vm2952, %vm2953
    %v2955 = vsel %vm2954, %v2946, %v2951
    %v2956 = vrsqrt.pop %v2934
    %v2957 = vmul.f32 %v2956, %v2934
    %v2958 = vmul.f32 %v2957, %v2956
    %v2959 = vmul.f32 0.5, %v2958
    %v2960 = vsub.f32 1.5, %v2959
    %v2961 = vmul.f32 %v2956, %v2960
    %vm2962 = vweird.f32 %v2934
    %vm2963 = vweird.f32 %v2956
    %vm2964 = vmor %vm2962, %vm2963
    %v2965 = vsel %vm2964, %v2956, %v2961
    %v2966 = vrsqrt.pop %v2935
    %v2967 = vmul.f32 %v2966, %v2935
    %v2968 = vmul.f32 %v2967, %v2966
    %v2969 = vmul.f32 0.5, %v2968
    %v2970 = vsub.f32 1.5, %v2969
    %v2971 = vmul.f32 %v2966, %v2970
    %vm2972 = vweird.f32 %v2935
    %vm2973 = vweird.f32 %v2966
    %vm2974 = vmor %vm2972, %vm2973
    %v2975 = vsel %vm2974, %v2966, %v2971
    %v2976 = vmul.f32 %v2908, %v2945
    %v2977 = vmul.f32 %v2909, %v2955
    %v2978 = vmul.f32 %v2910, %v2965
    %v2979 = vmul.f32 %v2911, %v2975
    %v2981 = vperm.slane %v2890, 0
    %v2983 = vmul.f32 %v2976, %v2981
    %v2984 = vmul.f32 %v2977, %v2981
    %v2985 = vmul.f32 %v2978, %v2981
    %v2986 = vmul.f32 %v2979, %v2981
    %v2988 = vperm.slane %v2891, 0
    %v2990 = vadd.f32 %v2983, %v2988
    %v2991 = vadd.f32 %v2984, %v2988
    %v2992 = vadd.f32 %v2985, %v2988
    %v2993 = vadd.f32 %v2986, %v2988
    %v2994 = vpack.c.bf16 %v2991, %v2990
    %v2995 = vpack.c.bf16 %v2993, %v2992
    %v2996 = vld [vmem:[%s14] sm:$0xf]
    %v2997 = vld [vmem:[%s14 + $0x4] sm:$0xf]
    %v2998 = vld [vmem:[%s14 + $0x8] sm:$0xf]
    %v2999 = vld [vmem:[%s14 + $0xc] sm:$0xf]
    %v3000 = vld [vmem:[%s14 + $0x10] sm:$0xf]
    %v3001 = vld [vmem:[%s14 + $0x14] sm:$0xf]
    %v3002 = vld [vmem:[%s14 + $0x18] sm:$0xf]
    %v3003 = vld [vmem:[%s14 + $0x1c] sm:$0xf]
    %v3004 = vld [vmem:[%s15] sm:$0x1]
    %v3006 = vperm.slane %v3004, 0
    %v3016 = vunpack.c.l.b16 %v2996
    %v3017 = vunpack.c.l.b16 %v2997
    %v3018 = vunpack.c.l.b16 %v2998
    %v3019 = vunpack.c.l.b16 %v2999
    %v3020 = vunpack.c.l.b16 %v3000
    %v3021 = vunpack.c.l.b16 %v3001
    %v3022 = vunpack.c.l.b16 %v3002
    %v3023 = vunpack.c.l.b16 %v3003
    %v3024 = vpack.c.b16 %v3017, %v3016
    %v3025 = vpack.c.b16 %v3019, %v3018
    %v3026 = vpack.c.b16 %v3021, %v3020
    %v3027 = vpack.c.b16 %v3023, %v3022
    %v3033 = vsel %vm68, %v2994, 0
    %v3036 = vsel %vm68, %v2995, 0
    %3038 = vmatpush.bf16.msra.mxu0 0
    %3039 = vmatpush.bf16.msra.mxu0 0
    %3040 = vmatpush.bf16.msra.mxu0 0
    %3041 = vmatpush.bf16.msra.mxu0 0
    %3042 = vmatpush.bf16.msra.mxu0 %v3027
    %3043 = vmatpush.bf16.msra.mxu0 %v3026
    %3044 = vmatpush.bf16.msra.mxu0 %v3025
    %3045 = vmatpush.bf16.msra.mxu0 %v3024
    %3046 = vmatmul.bf16.gmra.mxu0 %v3033
    %v3047 = vpop.f32.mrf.mxu0
    %v3048 = vadd.f32 %v3006, %v3047
    %v3049 = vpop.f32.mrf.mxu0
    %v3050 = vadd.f32 %v3006, %v3049
    %3051 = vmatmul.bf16.gmra.mxu0 %v3036
    %v3052 = vpop.f32.mrf.mxu0
    %v3053 = vadd.f32 %v3006, %v3052
    %v3054 = vpop.f32.mrf.mxu0
    %v3055 = vadd.f32 %v3006, %v3054
    %3056 = vdwg.mxu0
    %3057 = vst [vmem:[#allocation2] sm:$0xff] %v3048
    %3058 = vst [vmem:[#allocation2 + $0x8] sm:$0xff] %v3050
    %3059 = vst [vmem:[#allocation2 + $0x10] sm:$0xff] %v3053
    %3060 = vst [vmem:[#allocation2 + $0x18] sm:$0xff] %v3055
    // Predicated region
    $region66: #{nanogpt_forward.1} parent=1 // pred_check
      _
    $region67: #{nanogpt_forward.1} parent=1 // pred_check_branch
      %3062 = sbr.rel (0) target = $region69
    $region68: #{nanogpt_forward.1} parent=1 // pred_region
      %3064 = vsyncadd [#allocation3], 0
      %s3065 = sshll.u32 [#allocation2], 4
      %s3066 = int_to_ptr.vmem [resolvable:$true] %s3065
      %s3067 = sshll.u32 %s16, 4
      %s3068 = int_to_ptr.hbm [resolvable:$true] %s3067
      %3073 = dma.vmem_to_hbm [thread:$0]  %s3066, 512, %s3068, [#allocation3], 128, 128, 8
    $region69: #{nanogpt_forward.1} parent=1 // pred_fallthru
      _
    // Predicated region
    $region70: #{nanogpt_forward.1} parent=1 // pred_check
      _
    $region71: #{nanogpt_forward.1} parent=1 // pred_check_branch
      %3075 = sbr.rel (0) target = $region73
    $region72: #{nanogpt_forward.1} parent=1 // pred_region
      %3077 = dma.done [#allocation3], 512
    $region73: #{nanogpt_forward.1} parent=1 // pred_fallthru
      _
    %3078 = vsyncpa [#allocation3], 1

</llo_original>
